<compile_context>
chip_gen: v5e
topology: v5e:2x2
jax: 0.10.0
libtpu: 0.0.40
codegen_flags: <defaults>
</compile_context>

<pallas_src>
import math
import numpy as np

import jax
import jax.numpy as jnp
from jax import lax
from jax.experimental import pallas as pl
from jax.experimental.pallas import tpu as pltpu

# Small, module-consistent shapes.
BATCH = 2
NUM_ELEMENTS = 8          # num_elements (sequence length)
HIDDEN_DIM = 32           # hidden_dim
NUM_HEADS = 4
NUM_LAYERS = 3
LN_EPS = 1e-5
F32 = jnp.float32

B, N, H, L, NH = BATCH, NUM_ELEMENTS, HIDDEN_DIM, NUM_LAYERS, NUM_HEADS
H2 = H // 2
HD = H // NH


def _align8(r):
    return ((r + 7) // 8) * 8


# ---- packed "big" slab layout (BIG_ROWS x 64 lanes, f32); all block starts 8-aligned ----
BIG_COLS = 2 * H                               # 64
OFF_W2T = 0                                    # (H2, H)   fe2 weight^T
OFF_POSB = OFF_W2T + H2                        # (B*N, H)  pos + fe2 bias, tiled over batch
OFF_W1 = OFF_POSB + B * N                      # (1, H2)
OFF_B1 = OFF_W1 + 1                            # (1, H2)
OFF_OUT = _align8(OFF_B1 + 1)                  # per-layer out-proj / LN blocks
OUT_STRIDE = _align8(H + 3)                    # rows per layer block (H + 3 used)
OFF_F1W = OFF_OUT + L * OUT_STRIDE             # (N*H, 2H) per-position first-MLP blocks
OFF_F1B = OFF_F1W + N * H                      # (1, 2H)
OFF_F2W = _align8(OFF_F1B + 1)                 # (2H, H)
OFF_F2B = OFF_F2W + 2 * H                      # (1, H)
OFF_F3W = _align8(OFF_F2B + 1)                 # (H, 1)
OFF_F3B = OFF_F3W + H                          # (1, 1)
BIG_ROWS = _align8(OFF_F3B + 1)


def _softplus(z):
    # numerically-stable softplus using only exp/log/abs/max (Mosaic-friendly)
    return jnp.maximum(z, 0.0) + jnp.log(1.0 + jnp.exp(-jnp.abs(z)))


def gflownet_fwd_kernel(x_ref, qkvw_ref, big_ref, flows_ref, attnw_ref):
    # x_ref:     (B*N, 1)  f32
    # qkvw_ref:  (L*NH*3, H+1, HD) -- rows 0..H-1 = W^T (q pre-scaled by 1/sqrt(hd)),
    #                                 row H = bias
    # big_ref:   (BIG_ROWS, 2H)    -- packed embedding / out-proj / LN / MLP params
    xv = x_ref[...].astype(F32)                                    # (B*N, 1)

    # ---- feature embedding: Linear(1, H/2) -> ReLU -> Linear(H/2, H) (+pos, bias folded) ----
    w1 = big_ref[OFF_W1:OFF_W1 + 1, 0:H2]                          # (1, H2)
    b1 = big_ref[OFF_B1:OFF_B1 + 1, 0:H2]                          # (1, H2)
    h1 = jnp.maximum(xv * w1 + b1, 0.0)                            # (B*N, H2)
    w2t = big_ref[OFF_W2T:OFF_W2T + H2, 0:H]                       # (H2, H)
    posb = big_ref[OFF_POSB:OFF_POSB + B * N, 0:H]                 # (B*N, H) = pos + fe2 bias
    hf = jnp.dot(h1, w2t, preferred_element_type=F32) + posb       # (B*N, H)

    # ---- attention stack (static unroll over layers and heads) ----
    attn_ws = []
    for l in range(L):
        ob = OFF_OUT + l * OUT_STRIDE
        woutT = big_ref[ob:ob + H, 0:H]                            # (H, H)
        bout = big_ref[ob + H:ob + H + 1, 0:H]                     # (1, H)
        gamma = big_ref[ob + H + 1:ob + H + 2, 0:H]                # (1, H)
        beta = big_ref[ob + H + 2:ob + H + 3, 0:H]                 # (1, H)

        attn = bout                                                # (1, H) -> broadcasts up
        w_sum = jnp.zeros((B, N, N), dtype=F32)
        for hh in range(NH):
            base = (l * NH + hh) * 3
            wq = qkvw_ref[base + 0, :H, :]
            bq = qkvw_ref[base + 0, H:, :]
            wk = qkvw_ref[base + 1, :H, :]
            bk = qkvw_ref[base + 1, H:, :]
            wv = qkvw_ref[base + 2, :H, :]
            bv = qkvw_ref[base + 2, H:, :]

            qh = jnp.dot(hf, wq, preferred_element_type=F32) + bq  # (B*N, HD), pre-scaled
            kh = jnp.dot(hf, wk, preferred_element_type=F32) + bk
            vh = jnp.dot(hf, wv, preferred_element_type=F32) + bv
            q3 = qh.reshape(B, N, HD)                              # leading-dim split: free
            k3 = kh.reshape(B, N, HD)
            v3 = vh.reshape(B, N, HD)

            s = jnp.einsum('bqd,bkd->bqk', q3, k3, preferred_element_type=F32)
            s = s - jnp.max(s, axis=-1, keepdims=True)
            e = jnp.exp(s)
            p = e * pl.reciprocal(jnp.sum(e, axis=-1, keepdims=True), approx=True)
            w_sum = w_sum + p

            o3 = jnp.einsum('bqk,bkd->bqd', p, v3, preferred_element_type=F32)
            of = o3.reshape(B * N, HD)                             # leading-dim merge: free
            # fold this head's slice of the output projection (sublane slice of WoutT)
            attn = attn + jnp.dot(of, woutT[hh * HD:(hh + 1) * HD, :],
                                  preferred_element_type=F32)

        # head-averaged attention weights (nn.MultiheadAttention default)
        attn_ws.append(w_sum * (1.0 / NH))

        # residual + LayerNorm (dropout identity in eval mode)
        y = hf + attn
        mu = jnp.mean(y, axis=-1, keepdims=True)
        var = jnp.mean((y - mu) ** 2, axis=-1, keepdims=True)
        hf = (y - mu) * lax.rsqrt(var + LN_EPS) * gamma + beta

    # ---- final MLP (no (B, N*H) reshape: per-position weight blocks instead) ----
    h3 = hf.reshape(B, N, H)                                       # leading-dim split: free
    z = big_ref[OFF_F1B:OFF_F1B + 1, :]                            # (1, 2H)
    for n in range(N):
        wn = big_ref[OFF_F1W + n * H:OFF_F1W + (n + 1) * H, :]     # (H, 2H)
        z = z + jnp.dot(h3[:, n, :], wn, preferred_element_type=F32)
    z = jnp.maximum(z, 0.0)                                        # (B, 2H)
    z = jnp.dot(z, big_ref[OFF_F2W:OFF_F2W + 2 * H, 0:H],
                preferred_element_type=F32) + big_ref[OFF_F2B:OFF_F2B + 1, 0:H]
    z = jnp.maximum(z, 0.0)                                        # (B, H)
    z = jnp.dot(z, big_ref[OFF_F3W:OFF_F3W + H, 0:1],
                preferred_element_type=F32) + big_ref[OFF_F3B:OFF_F3B + 1, 0:1]

    flows_ref[...] = _softplus(z).astype(flows_ref.dtype)
    # single consolidated store of all layers' attention weights
    attnw_ref[...] = jnp.stack(attn_ws, axis=0).astype(attnw_ref.dtype)


def gflownet_forward(x, packed):
    """Wrapper: 3 inputs total (x + 2 packed parameter slabs), whole-array VMEM blocks."""
    qkvw, big = packed
    Bx, Nx = x.shape
    x2 = x.reshape(Bx * Nx, 1).astype(F32)       # host/XLA-side reshape (free)
    vm = pl.BlockSpec(memory_space=pltpu.MemorySpace.VMEM)
    out_shape = (
        jax.ShapeDtypeStruct((Bx, 1), jnp.float32),
        jax.ShapeDtypeStruct((L, Bx, Nx, Nx), jnp.float32),
    )
    return pl.pallas_call(
        gflownet_fwd_kernel,
        out_shape=out_shape,
        in_specs=[vm, vm, vm],
        out_specs=(vm, vm),
    )(x2, qkvw, big)


# ----------------------------- parameters (natural / PyTorch layout) -----------------------------

def make_positional_encoding(n, d):
    position = np.arange(n, dtype=np.float64)[:, None]
    div_term = np.exp(np.arange(0, d, 2, dtype=np.float64) * (-np.log(10000.0) / d))
    ang = position * div_term
    pe = np.zeros((n, d), dtype=np.float64)
    pe[:, 0::2] = np.sin(ang)
    pe[:, 1::2] = np.cos(ang)
    return pe


def init_params(key):
    ks = jax.random.split(key, 16)
    s = 0.1

    def rnd(k, shape):
        return np.asarray(s * jax.random.normal(k, shape), dtype=np.float64)

    P = {
        'fe1_w': rnd(ks[0], (H2, 1)),          # Linear(1, H/2).weight
        'fe1_b': rnd(ks[1], (H2,)),
        'fe2_w': rnd(ks[2], (H, H2)),          # Linear(H/2, H).weight
        'fe2_b': rnd(ks[3], (H,)),
        'pos': make_positional_encoding(N, H),
        'in_proj_w': rnd(ks[4], (L, 3 * H, H)),
        'in_proj_b': rnd(ks[5], (L, 3 * H)),
        'out_proj_w': rnd(ks[6], (L, H, H)),
        'out_proj_b': rnd(ks[7], (L, H)),
        'ln_g': 1.0 + rnd(ks[8], (L, H)),
        'ln_b': rnd(ks[9], (L, H)),
        'f1_w': rnd(ks[10], (2 * H, N * H)),   # Linear(N*H, 2H).weight
        'f1_b': rnd(ks[11], (2 * H,)),
        'f2_w': rnd(ks[12], (H, 2 * H)),
        'f2_b': rnd(ks[13], (H,)),
        'f3_w': rnd(ks[14], (1, H)),
        'f3_b': rnd(ks[15], (1,)),
    }
    return P


def pack_params(P):
    """Host-side packing: per-head QKV stack + one mixed (rows, 64) slab."""
    scale = 1.0 / math.sqrt(HD)

    # (L*NH*3, H+1, HD): rows 0..H-1 = W^T (q pre-scaled), row H = bias
    blocks = []
    for l in range(L):
        W = P['in_proj_w'][l]       # (3H, H)
        bvec = P['in_proj_b'][l]    # (3H,)
        for hh in range(NH):
            for j in range(3):      # q, k, v
                rows = slice(j * H + hh * HD, j * H + (hh + 1) * HD)
                wt = W[rows, :].T                      # (H, HD)
                bb = bvec[rows]                        # (HD,)
                if j == 0:                             # fold 1/sqrt(hd) into q
                    wt = wt * scale
                    bb = bb * scale
                blocks.append(np.concatenate([wt, bb[None, :]], axis=0))
    qkvw = np.stack(blocks, axis=0).astype(np.float32)

    big = np.zeros((BIG_ROWS, BIG_COLS), dtype=np.float32)
    big[OFF_W2T:OFF_W2T + H2, 0:H] = P['fe2_w'].T
    posb = P['pos'] + P['fe2_b'][None, :]              # fold fe2 bias into pos encoding
    big[OFF_POSB:OFF_POSB + B * N, 0:H] = np.tile(posb, (B, 1))
    big[OFF_W1, 0:H2] = P['fe1_w'][:, 0]
    big[OFF_B1, 0:H2] = P['fe1_b']
    for l in range(L):
        ob = OFF_OUT + l * OUT_STRIDE
        big[ob:ob + H, 0:H] = P['out_proj_w'][l].T
        big[ob + H, 0:H] = P['out_proj_b'][l]
        big[ob + H + 1, 0:H] = P['ln_g'][l]
        big[ob + H + 2, 0:H] = P['ln_b'][l]
    # first MLP weight reshaped to per-position (H, 2H) blocks
    f1wr = P['f1_w'].reshape(2 * H, N, H).transpose(1, 2, 0).reshape(N * H, 2 * H)
    big[OFF_F1W:OFF_F1W + N * H, :] = f1wr
    big[OFF_F1B, :] = P['f1_b']
    big[OFF_F2W:OFF_F2W + 2 * H, 0:H] = P['f2_w'].T
    big[OFF_F2B, 0:H] = P['f2_b']
    big[OFF_F3W:OFF_F3W + H, 0:1] = P['f3_w'].T
    big[OFF_F3B, 0:1] = P['f3_b']
    return jnp.asarray(qkvw), jnp.asarray(big)


# ---------------------------- float64 numpy reference ----------------------------

def reference_forward(x, P):
    x = np.asarray(x, dtype=np.float64)                            # (B, N)
    h1 = np.maximum(x[..., None] * P['fe1_w'][:, 0][None, None, :] + P['fe1_b'], 0.0)
    h = h1 @ P['fe2_w'].T + P['fe2_b'] + P['pos'][None]
    attn_ws = []
    for l in range(L):
        qkv = h @ P['in_proj_w'][l].T + P['in_proj_b'][l]
        q, k, v = qkv[..., :H], qkv[..., H:2 * H], qkv[..., 2 * H:]
        q4 = q.reshape(B, N, NH, HD)
        k4 = k.reshape(B, N, NH, HD)
        v4 = v.reshape(B, N, NH, HD)
        s = np.einsum('bqnd,bknd->bnqk', q4, k4) / math.sqrt(HD)
        s = s - s.max(axis=-1, keepdims=True)
        p = np.exp(s)
        p = p / p.sum(axis=-1, keepdims=True)
        attn_ws.append(p.mean(axis=1))                             # head-averaged weights
        o = np.einsum('bnqk,bknd->bqnd', p, v4).reshape(B, N, H)
        o = o @ P['out_proj_w'][l].T + P['out_proj_b'][l]
        y = h + o
        mu = y.mean(axis=-1, keepdims=True)
        var = ((y - mu) ** 2).mean(axis=-1, keepdims=True)
        h = (y - mu) / np.sqrt(var + LN_EPS) * P['ln_g'][l] + P['ln_b'][l]
    hf = h.reshape(B, N * H)
    z = np.maximum(hf @ P['f1_w'].T + P['f1_b'], 0.0)
    z = np.maximum(z @ P['f2_w'].T + P['f2_b'], 0.0)
    z = z @ P['f3_w'].T + P['f3_b']
    flows = np.maximum(z, 0.0) + np.log1p(np.exp(-np.abs(z)))
    return flows, np.stack(attn_ws, axis=0)


if __name__ == "__main__":
    key = jax.random.PRNGKey(0)
    kx, kp = jax.random.split(key)
    # states are 0/1 indicator vectors over num_elements (as in forward_policy/train_step)
    x = jax.random.bernoulli(kx, p=0.5, shape=(B, N)).astype(F32)
    P = init_params(kp)
    packed = pack_params(P)

    flows, attn_weights = jax.block_until_ready(gflownet_forward(x, packed))

    flows_ref, attnw_ref = reference_forward(np.asarray(x), P)
    assert flows.shape == (B, 1)
    assert attn_weights.shape == (L, B, N, N)
    # default (single-pass MXU) matmul precision + approx reciprocal -> modest tolerances
    np.testing.assert_allclose(np.asarray(flows), flows_ref, rtol=5e-3, atol=5e-3)
    np.testing.assert_allclose(np.asarray(attn_weights), attnw_ref, rtol=2e-3, atol=2e-3)

    print("KERNEL_OK")
</pallas_src>

<mosaic_0001>
module attributes {stable_mosaic.version = 11 : i64} {
  func.func @gflownet_fwd_kernel(%arg0: memref<16x1xf32, #tpu.memory_space<vmem>>, %arg1: memref<36x33x8xf32, #tpu.memory_space<vmem>>, %arg2: memref<536x64xf32, #tpu.memory_space<vmem>>, %arg3: memref<2x1xf32, #tpu.memory_space<vmem>>, %arg4: memref<3x2x8x8xf32, #tpu.memory_space<vmem>>) attributes {dimension_semantics = [], scalar_prefetch = 0 : i64, scratch_operands = 0 : i64, tpu.core_type = #tpu.core_type<tc>} {
    %c0 = arith.constant 0 : index
    %c0_0 = arith.constant 0 : index
    %0 = vector.load %arg0[%c0, %c0_0] : memref<16x1xf32, #tpu.memory_space<vmem>>, vector<16x1xf32>
    %c32 = arith.constant 32 : index
    %c0_1 = arith.constant 0 : index
    %1 = vector.load %arg2[%c32, %c0_1] : memref<536x64xf32, #tpu.memory_space<vmem>>, vector<1x16xf32>
    %c33 = arith.constant 33 : index
    %c0_2 = arith.constant 0 : index
    %2 = vector.load %arg2[%c33, %c0_2] : memref<536x64xf32, #tpu.memory_space<vmem>>, vector<1x16xf32>
    %3 = vector.broadcast %0 : vector<16x1xf32> to vector<16x16xf32>
    %4 = vector.broadcast %1 : vector<1x16xf32> to vector<16x16xf32>
    %5 = arith.mulf %3, %4 : vector<16x16xf32>
    %6 = vector.broadcast %2 : vector<1x16xf32> to vector<16x16xf32>
    %7 = arith.addf %5, %6 : vector<16x16xf32>
    %cst = arith.constant 0.000000e+00 : f32
    %8 = vector.broadcast %cst : f32 to vector<16x16xf32>
    %9 = arith.maximumf %7, %8 : vector<16x16xf32>
    %c0_3 = arith.constant 0 : index
    %c0_4 = arith.constant 0 : index
    %10 = vector.load %arg2[%c0_3, %c0_4] : memref<536x64xf32, #tpu.memory_space<vmem>>, vector<16x32xf32>
    %c16 = arith.constant 16 : index
    %c0_5 = arith.constant 0 : index
    %11 = vector.load %arg2[%c16, %c0_5] : memref<536x64xf32, #tpu.memory_space<vmem>>, vector<16x32xf32>
    %cst_6 = arith.constant dense<0.000000e+00> : vector<16x32xf32>
    %12 = tpu.matmul %9, %10, %cst_6 {dimension_numbers = #tpu.dot_dimension_numbers<[1], [0], [0], [1], [0, 0, 1, 1], [], []>} : vector<16x16xf32>, vector<16x32xf32>, vector<16x32xf32> -> vector<16x32xf32>
    %13 = arith.addf %12, %11 : vector<16x32xf32>
    %c40 = arith.constant 40 : index
    %c0_7 = arith.constant 0 : index
    %14 = vector.load %arg2[%c40, %c0_7] : memref<536x64xf32, #tpu.memory_space<vmem>>, vector<32x32xf32>
    %c72 = arith.constant 72 : index
    %c0_8 = arith.constant 0 : index
    %15 = vector.load %arg2[%c72, %c0_8] : memref<536x64xf32, #tpu.memory_space<vmem>>, vector<1x32xf32>
    %c73 = arith.constant 73 : index
    %c0_9 = arith.constant 0 : index
    %16 = vector.load %arg2[%c73, %c0_9] : memref<536x64xf32, #tpu.memory_space<vmem>>, vector<1x32xf32>
    %c74 = arith.constant 74 : index
    %c0_10 = arith.constant 0 : index
    %17 = vector.load %arg2[%c74, %c0_10] : memref<536x64xf32, #tpu.memory_space<vmem>>, vector<1x32xf32>
    %cst_11 = arith.constant 0.000000e+00 : f32
    %18 = vector.broadcast %cst_11 : f32 to vector<2x8x8xf32>
    %c0_12 = arith.constant 0 : index
    %c0_13 = arith.constant 0 : index
    %c0_14 = arith.constant 0 : index
    %19 = vector.load %arg1[%c0_12, %c0_13, %c0_14] : memref<36x33x8xf32, #tpu.memory_space<vmem>>, vector<1x32x8xf32>
    %20 = vector.shape_cast %19 : vector<1x32x8xf32> to vector<32x8xf32>
    %c0_15 = arith.constant 0 : index
    %c32_16 = arith.constant 32 : index
    %c0_17 = arith.constant 0 : index
    %21 = vector.load %arg1[%c0_15, %c32_16, %c0_17] : memref<36x33x8xf32, #tpu.memory_space<vmem>>, vector<1x1x8xf32>
    %22 = vector.shape_cast %21 : vector<1x1x8xf32> to vector<1x8xf32>
    %c1 = arith.constant 1 : index
    %c0_18 = arith.constant 0 : index
    %c0_19 = arith.constant 0 : index
    %23 = vector.load %arg1[%c1, %c0_18, %c0_19] : memref<36x33x8xf32, #tpu.memory_space<vmem>>, vector<1x32x8xf32>
    %24 = vector.shape_cast %23 : vector<1x32x8xf32> to vector<32x8xf32>
    %c1_20 = arith.constant 1 : index
    %c32_21 = arith.constant 32 : index
    %c0_22 = arith.constant 0 : index
    %25 = vector.load %arg1[%c1_20, %c32_21, %c0_22] : memref<36x33x8xf32, #tpu.memory_space<vmem>>, vector<1x1x8xf32>
    %26 = vector.shape_cast %25 : vector<1x1x8xf32> to vector<1x8xf32>
    %c2 = arith.constant 2 : index
    %c0_23 = arith.constant 0 : index
    %c0_24 = arith.constant 0 : index
    %27 = vector.load %arg1[%c2, %c0_23, %c0_24] : memref<36x33x8xf32, #tpu.memory_space<vmem>>, vector<1x32x8xf32>
    %28 = vector.shape_cast %27 : vector<1x32x8xf32> to vector<32x8xf32>
    %c2_25 = arith.constant 2 : index
    %c32_26 = arith.constant 32 : index
    %c0_27 = arith.constant 0 : index
    %29 = vector.load %arg1[%c2_25, %c32_26, %c0_27] : memref<36x33x8xf32, #tpu.memory_space<vmem>>, vector<1x1x8xf32>
    %30 = vector.shape_cast %29 : vector<1x1x8xf32> to vector<1x8xf32>
    %cst_28 = arith.constant dense<0.000000e+00> : vector<16x8xf32>
    %31 = tpu.matmul %13, %20, %cst_28 {dimension_numbers = #tpu.dot_dimension_numbers<[1], [0], [0], [1], [0, 0, 1, 1], [], []>} : vector<16x32xf32>, vector<32x8xf32>, vector<16x8xf32> -> vector<16x8xf32>
    %32 = vector.broadcast %22 : vector<1x8xf32> to vector<16x8xf32>
    %33 = arith.addf %31, %32 : vector<16x8xf32>
    %cst_29 = arith.constant dense<0.000000e+00> : vector<16x8xf32>
    %34 = tpu.matmul %13, %24, %cst_29 {dimension_numbers = #tpu.dot_dimension_numbers<[1], [0], [0], [1], [0, 0, 1, 1], [], []>} : vector<16x32xf32>, vector<32x8xf32>, vector<16x8xf32> -> vector<16x8xf32>
    %35 = vector.broadcast %26 : vector<1x8xf32> to vector<16x8xf32>
    %36 = arith.addf %34, %35 : vector<16x8xf32>
    %cst_30 = arith.constant dense<0.000000e+00> : vector<16x8xf32>
    %37 = tpu.matmul %13, %28, %cst_30 {dimension_numbers = #tpu.dot_dimension_numbers<[1], [0], [0], [1], [0, 0, 1, 1], [], []>} : vector<16x32xf32>, vector<32x8xf32>, vector<16x8xf32> -> vector<16x8xf32>
    %38 = vector.broadcast %30 : vector<1x8xf32> to vector<16x8xf32>
    %39 = arith.addf %37, %38 : vector<16x8xf32>
    %40 = vector.shape_cast %33 : vector<16x8xf32> to vector<2x8x8xf32>
    %41 = vector.shape_cast %36 : vector<16x8xf32> to vector<2x8x8xf32>
    %42 = vector.shape_cast %39 : vector<16x8xf32> to vector<2x8x8xf32>
    "tpu.trace_start"() <{level = 10 : i32, message = "bqd,bkd->bqk"}> : () -> ()
    %cst_31 = arith.constant dense<0.000000e+00> : vector<2x8x8xf32>
    %43 = tpu.matmul %40, %41, %cst_31 {dimension_numbers = #tpu.dot_dimension_numbers<[2], [2], [1], [1], [0, 0, 0, 1, 1, 1], [0], [0]>} : vector<2x8x8xf32>, vector<2x8x8xf32>, vector<2x8x8xf32> -> vector<2x8x8xf32>
    "tpu.trace_stop"() : () -> ()
    %cst_32 = arith.constant dense<0xFF800000> : vector<2x8xf32>
    %44 = vector.multi_reduction <maximumf>, %43, %cst_32 [2] : vector<2x8x8xf32> to vector<2x8xf32>
    %45 = vector.shape_cast %44 : vector<2x8xf32> to vector<2x8x1xf32>
    %46 = vector.broadcast %45 : vector<2x8x1xf32> to vector<2x8x8xf32>
    %47 = arith.subf %43, %46 : vector<2x8x8xf32>
    %48 = math.exp %47 : vector<2x8x8xf32>
    %cst_33 = arith.constant dense<0.000000e+00> : vector<2x8xf32>
    %49 = vector.multi_reduction <add>, %48, %cst_33 [2] : vector<2x8x8xf32> to vector<2x8xf32>
    %50 = vector.shape_cast %49 : vector<2x8xf32> to vector<2x8x1xf32>
    %51 = tpu.reciprocal %50 {approx = true} : vector<2x8x1xf32> -> vector<2x8x1xf32>
    %52 = vector.broadcast %51 : vector<2x8x1xf32> to vector<2x8x8xf32>
    %53 = arith.mulf %48, %52 : vector<2x8x8xf32>
    %54 = arith.addf %18, %53 : vector<2x8x8xf32>
    "tpu.trace_start"() <{level = 10 : i32, message = "bqk,bkd->bqd"}> : () -> ()
    %cst_34 = arith.constant dense<0.000000e+00> : vector<2x8x8xf32>
    %55 = tpu.matmul %53, %42, %cst_34 {dimension_numbers = #tpu.dot_dimension_numbers<[2], [1], [1], [2], [0, 0, 0, 1, 1, 2], [0], [0]>} : vector<2x8x8xf32>, vector<2x8x8xf32>, vector<2x8x8xf32> -> vector<2x8x8xf32>
    "tpu.trace_stop"() : () -> ()
    %56 = vector.shape_cast %55 : vector<2x8x8xf32> to vector<16x8xf32>
    %57 = vector.extract_strided_slice %14 {offsets = [0, 0], sizes = [8, 32], strides = [1, 1]} : vector<32x32xf32> to vector<8x32xf32>
    %cst_35 = arith.constant dense<0.000000e+00> : vector<16x32xf32>
    %58 = tpu.matmul %56, %57, %cst_35 {dimension_numbers = #tpu.dot_dimension_numbers<[1], [0], [0], [1], [0, 0, 1, 1], [], []>} : vector<16x8xf32>, vector<8x32xf32>, vector<16x32xf32> -> vector<16x32xf32>
    %59 = vector.broadcast %15 : vector<1x32xf32> to vector<16x32xf32>
    %60 = arith.addf %59, %58 : vector<16x32xf32>
    %c3 = arith.constant 3 : index
    %c0_36 = arith.constant 0 : index
    %c0_37 = arith.constant 0 : index
    %61 = vector.load %arg1[%c3, %c0_36, %c0_37] : memref<36x33x8xf32, #tpu.memory_space<vmem>>, vector<1x32x8xf32>
    %62 = vector.shape_cast %61 : vector<1x32x8xf32> to vector<32x8xf32>
    %c3_38 = arith.constant 3 : index
    %c32_39 = arith.constant 32 : index
    %c0_40 = arith.constant 0 : index
    %63 = vector.load %arg1[%c3_38, %c32_39, %c0_40] : memref<36x33x8xf32, #tpu.memory_space<vmem>>, vector<1x1x8xf32>
    %64 = vector.shape_cast %63 : vector<1x1x8xf32> to vector<1x8xf32>
    %c4 = arith.constant 4 : index
    %c0_41 = arith.constant 0 : index
    %c0_42 = arith.constant 0 : index
    %65 = vector.load %arg1[%c4, %c0_41, %c0_42] : memref<36x33x8xf32, #tpu.memory_space<vmem>>, vector<1x32x8xf32>
    %66 = vector.shape_cast %65 : vector<1x32x8xf32> to vector<32x8xf32>
    %c4_43 = arith.constant 4 : index
    %c32_44 = arith.constant 32 : index
    %c0_45 = arith.constant 0 : index
    %67 = vector.load %arg1[%c4_43, %c32_44, %c0_45] : memref<36x33x8xf32, #tpu.memory_space<vmem>>, vector<1x1x8xf32>
    %68 = vector.shape_cast %67 : vector<1x1x8xf32> to vector<1x8xf32>
    %c5 = arith.constant 5 : index
    %c0_46 = arith.constant 0 : index
    %c0_47 = arith.constant 0 : index
    %69 = vector.load %arg1[%c5, %c0_46, %c0_47] : memref<36x33x8xf32, #tpu.memory_space<vmem>>, vector<1x32x8xf32>
    %70 = vector.shape_cast %69 : vector<1x32x8xf32> to vector<32x8xf32>
    %c5_48 = arith.constant 5 : index
    %c32_49 = arith.constant 32 : index
    %c0_50 = arith.constant 0 : index
    %71 = vector.load %arg1[%c5_48, %c32_49, %c0_50] : memref<36x33x8xf32, #tpu.memory_space<vmem>>, vector<1x1x8xf32>
    %72 = vector.shape_cast %71 : vector<1x1x8xf32> to vector<1x8xf32>
    %cst_51 = arith.constant dense<0.000000e+00> : vector<16x8xf32>
    %73 = tpu.matmul %13, %62, %cst_51 {dimension_numbers = #tpu.dot_dimension_numbers<[1], [0], [0], [1], [0, 0, 1, 1], [], []>} : vector<16x32xf32>, vector<32x8xf32>, vector<16x8xf32> -> vector<16x8xf32>
    %74 = vector.broadcast %64 : vector<1x8xf32> to vector<16x8xf32>
    %75 = arith.addf %73, %74 : vector<16x8xf32>
    %cst_52 = arith.constant dense<0.000000e+00> : vector<16x8xf32>
    %76 = tpu.matmul %13, %66, %cst_52 {dimension_numbers = #tpu.dot_dimension_numbers<[1], [0], [0], [1], [0, 0, 1, 1], [], []>} : vector<16x32xf32>, vector<32x8xf32>, vector<16x8xf32> -> vector<16x8xf32>
    %77 = vector.broadcast %68 : vector<1x8xf32> to vector<16x8xf32>
    %78 = arith.addf %76, %77 : vector<16x8xf32>
    %cst_53 = arith.constant dense<0.000000e+00> : vector<16x8xf32>
    %79 = tpu.matmul %13, %70, %cst_53 {dimension_numbers = #tpu.dot_dimension_numbers<[1], [0], [0], [1], [0, 0, 1, 1], [], []>} : vector<16x32xf32>, vector<32x8xf32>, vector<16x8xf32> -> vector<16x8xf32>
    %80 = vector.broadcast %72 : vector<1x8xf32> to vector<16x8xf32>
    %81 = arith.addf %79, %80 : vector<16x8xf32>
    %82 = vector.shape_cast %75 : vector<16x8xf32> to vector<2x8x8xf32>
    %83 = vector.shape_cast %78 : vector<16x8xf32> to vector<2x8x8xf32>
    %84 = vector.shape_cast %81 : vector<16x8xf32> to vector<2x8x8xf32>
    "tpu.trace_start"() <{level = 10 : i32, message = "bqd,bkd->bqk"}> : () -> ()
    %cst_54 = arith.constant dense<0.000000e+00> : vector<2x8x8xf32>
    %85 = tpu.matmul %82, %83, %cst_54 {dimension_numbers = #tpu.dot_dimension_numbers<[2], [2], [1], [1], [0, 0, 0, 1, 1, 1], [0], [0]>} : vector<2x8x8xf32>, vector<2x8x8xf32>, vector<2x8x8xf32> -> vector<2x8x8xf32>
    "tpu.trace_stop"() : () -> ()
    %cst_55 = arith.constant dense<0xFF800000> : vector<2x8xf32>
    %86 = vector.multi_reduction <maximumf>, %85, %cst_55 [2] : vector<2x8x8xf32> to vector<2x8xf32>
    %87 = vector.shape_cast %86 : vector<2x8xf32> to vector<2x8x1xf32>
    %88 = vector.broadcast %87 : vector<2x8x1xf32> to vector<2x8x8xf32>
    %89 = arith.subf %85, %88 : vector<2x8x8xf32>
    %90 = math.exp %89 : vector<2x8x8xf32>
    %cst_56 = arith.constant dense<0.000000e+00> : vector<2x8xf32>
    %91 = vector.multi_reduction <add>, %90, %cst_56 [2] : vector<2x8x8xf32> to vector<2x8xf32>
    %92 = vector.shape_cast %91 : vector<2x8xf32> to vector<2x8x1xf32>
    %93 = tpu.reciprocal %92 {approx = true} : vector<2x8x1xf32> -> vector<2x8x1xf32>
    %94 = vector.broadcast %93 : vector<2x8x1xf32> to vector<2x8x8xf32>
    %95 = arith.mulf %90, %94 : vector<2x8x8xf32>
    %96 = arith.addf %54, %95 : vector<2x8x8xf32>
    "tpu.trace_start"() <{level = 10 : i32, message = "bqk,bkd->bqd"}> : () -> ()
    %cst_57 = arith.constant dense<0.000000e+00> : vector<2x8x8xf32>
    %97 = tpu.matmul %95, %84, %cst_57 {dimension_numbers = #tpu.dot_dimension_numbers<[2], [1], [1], [2], [0, 0, 0, 1, 1, 2], [0], [0]>} : vector<2x8x8xf32>, vector<2x8x8xf32>, vector<2x8x8xf32> -> vector<2x8x8xf32>
    "tpu.trace_stop"() : () -> ()
    %98 = vector.shape_cast %97 : vector<2x8x8xf32> to vector<16x8xf32>
    %99 = vector.extract_strided_slice %14 {offsets = [8, 0], sizes = [8, 32], strides = [1, 1]} : vector<32x32xf32> to vector<8x32xf32>
    %cst_58 = arith.constant dense<0.000000e+00> : vector<16x32xf32>
    %100 = tpu.matmul %98, %99, %cst_58 {dimension_numbers = #tpu.dot_dimension_numbers<[1], [0], [0], [1], [0, 0, 1, 1], [], []>} : vector<16x8xf32>, vector<8x32xf32>, vector<16x32xf32> -> vector<16x32xf32>
    %101 = arith.addf %60, %100 : vector<16x32xf32>
    %c6 = arith.constant 6 : index
    %c0_59 = arith.constant 0 : index
    %c0_60 = arith.constant 0 : index
    %102 = vector.load %arg1[%c6, %c0_59, %c0_60] : memref<36x33x8xf32, #tpu.memory_space<vmem>>, vector<1x32x8xf32>
    %103 = vector.shape_cast %102 : vector<1x32x8xf32> to vector<32x8xf32>
    %c6_61 = arith.constant 6 : index
    %c32_62 = arith.constant 32 : index
    %c0_63 = arith.constant 0 : index
    %104 = vector.load %arg1[%c6_61, %c32_62, %c0_63] : memref<36x33x8xf32, #tpu.memory_space<vmem>>, vector<1x1x8xf32>
    %105 = vector.shape_cast %104 : vector<1x1x8xf32> to vector<1x8xf32>
    %c7 = arith.constant 7 : index
    %c0_64 = arith.constant 0 : index
    %c0_65 = arith.constant 0 : index
    %106 = vector.load %arg1[%c7, %c0_64, %c0_65] : memref<36x33x8xf32, #tpu.memory_space<vmem>>, vector<1x32x8xf32>
    %107 = vector.shape_cast %106 : vector<1x32x8xf32> to vector<32x8xf32>
    %c7_66 = arith.constant 7 : index
    %c32_67 = arith.constant 32 : index
    %c0_68 = arith.constant 0 : index
    %108 = vector.load %arg1[%c7_66, %c32_67, %c0_68] : memref<36x33x8xf32, #tpu.memory_space<vmem>>, vector<1x1x8xf32>
    %109 = vector.shape_cast %108 : vector<1x1x8xf32> to vector<1x8xf32>
    %c8 = arith.constant 8 : index
    %c0_69 = arith.constant 0 : index
    %c0_70 = arith.constant 0 : index
    %110 = vector.load %arg1[%c8, %c0_69, %c0_70] : memref<36x33x8xf32, #tpu.memory_space<vmem>>, vector<1x32x8xf32>
    %111 = vector.shape_cast %110 : vector<1x32x8xf32> to vector<32x8xf32>
    %c8_71 = arith.constant 8 : index
    %c32_72 = arith.constant 32 : index
    %c0_73 = arith.constant 0 : index
    %112 = vector.load %arg1[%c8_71, %c32_72, %c0_73] : memref<36x33x8xf32, #tpu.memory_space<vmem>>, vector<1x1x8xf32>
    %113 = vector.shape_cast %112 : vector<1x1x8xf32> to vector<1x8xf32>
    %cst_74 = arith.constant dense<0.000000e+00> : vector<16x8xf32>
    %114 = tpu.matmul %13, %103, %cst_74 {dimension_numbers = #tpu.dot_dimension_numbers<[1], [0], [0], [1], [0, 0, 1, 1], [], []>} : vector<16x32xf32>, vector<32x8xf32>, vector<16x8xf32> -> vector<16x8xf32>
    %115 = vector.broadcast %105 : vector<1x8xf32> to vector<16x8xf32>
    %116 = arith.addf %114, %115 : vector<16x8xf32>
    %cst_75 = arith.constant dense<0.000000e+00> : vector<16x8xf32>
    %117 = tpu.matmul %13, %107, %cst_75 {dimension_numbers = #tpu.dot_dimension_numbers<[1], [0], [0], [1], [0, 0, 1, 1], [], []>} : vector<16x32xf32>, vector<32x8xf32>, vector<16x8xf32> -> vector<16x8xf32>
    %118 = vector.broadcast %109 : vector<1x8xf32> to vector<16x8xf32>
    %119 = arith.addf %117, %118 : vector<16x8xf32>
    %cst_76 = arith.constant dense<0.000000e+00> : vector<16x8xf32>
    %120 = tpu.matmul %13, %111, %cst_76 {dimension_numbers = #tpu.dot_dimension_numbers<[1], [0], [0], [1], [0, 0, 1, 1], [], []>} : vector<16x32xf32>, vector<32x8xf32>, vector<16x8xf32> -> vector<16x8xf32>
    %121 = vector.broadcast %113 : vector<1x8xf32> to vector<16x8xf32>
    %122 = arith.addf %120, %121 : vector<16x8xf32>
    %123 = vector.shape_cast %116 : vector<16x8xf32> to vector<2x8x8xf32>
    %124 = vector.shape_cast %119 : vector<16x8xf32> to vector<2x8x8xf32>
    %125 = vector.shape_cast %122 : vector<16x8xf32> to vector<2x8x8xf32>
    "tpu.trace_start"() <{level = 10 : i32, message = "bqd,bkd->bqk"}> : () -> ()
    %cst_77 = arith.constant dense<0.000000e+00> : vector<2x8x8xf32>
    %126 = tpu.matmul %123, %124, %cst_77 {dimension_numbers = #tpu.dot_dimension_numbers<[2], [2], [1], [1], [0, 0, 0, 1, 1, 1], [0], [0]>} : vector<2x8x8xf32>, vector<2x8x8xf32>, vector<2x8x8xf32> -> vector<2x8x8xf32>
    "tpu.trace_stop"() : () -> ()
    %cst_78 = arith.constant dense<0xFF800000> : vector<2x8xf32>
    %127 = vector.multi_reduction <maximumf>, %126, %cst_78 [2] : vector<2x8x8xf32> to vector<2x8xf32>
    %128 = vector.shape_cast %127 : vector<2x8xf32> to vector<2x8x1xf32>
    %129 = vector.broadcast %128 : vector<2x8x1xf32> to vector<2x8x8xf32>
    %130 = arith.subf %126, %129 : vector<2x8x8xf32>
    %131 = math.exp %130 : vector<2x8x8xf32>
    %cst_79 = arith.constant dense<0.000000e+00> : vector<2x8xf32>
    %132 = vector.multi_reduction <add>, %131, %cst_79 [2] : vector<2x8x8xf32> to vector<2x8xf32>
    %133 = vector.shape_cast %132 : vector<2x8xf32> to vector<2x8x1xf32>
    %134 = tpu.reciprocal %133 {approx = true} : vector<2x8x1xf32> -> vector<2x8x1xf32>
    %135 = vector.broadcast %134 : vector<2x8x1xf32> to vector<2x8x8xf32>
    %136 = arith.mulf %131, %135 : vector<2x8x8xf32>
    %137 = arith.addf %96, %136 : vector<2x8x8xf32>
    "tpu.trace_start"() <{level = 10 : i32, message = "bqk,bkd->bqd"}> : () -> ()
    %cst_80 = arith.constant dense<0.000000e+00> : vector<2x8x8xf32>
    %138 = tpu.matmul %136, %125, %cst_80 {dimension_numbers = #tpu.dot_dimension_numbers<[2], [1], [1], [2], [0, 0, 0, 1, 1, 2], [0], [0]>} : vector<2x8x8xf32>, vector<2x8x8xf32>, vector<2x8x8xf32> -> vector<2x8x8xf32>
    "tpu.trace_stop"() : () -> ()
    %139 = vector.shape_cast %138 : vector<2x8x8xf32> to vector<16x8xf32>
    %140 = vector.extract_strided_slice %14 {offsets = [16, 0], sizes = [8, 32], strides = [1, 1]} : vector<32x32xf32> to vector<8x32xf32>
    %cst_81 = arith.constant dense<0.000000e+00> : vector<16x32xf32>
    %141 = tpu.matmul %139, %140, %cst_81 {dimension_numbers = #tpu.dot_dimension_numbers<[1], [0], [0], [1], [0, 0, 1, 1], [], []>} : vector<16x8xf32>, vector<8x32xf32>, vector<16x32xf32> -> vector<16x32xf32>
    %142 = arith.addf %101, %141 : vector<16x32xf32>
    %c9 = arith.constant 9 : index
    %c0_82 = arith.constant 0 : index
    %c0_83 = arith.constant 0 : index
    %143 = vector.load %arg1[%c9, %c0_82, %c0_83] : memref<36x33x8xf32, #tpu.memory_space<vmem>>, vector<1x32x8xf32>
    %144 = vector.shape_cast %143 : vector<1x32x8xf32> to vector<32x8xf32>
    %c9_84 = arith.constant 9 : index
    %c32_85 = arith.constant 32 : index
    %c0_86 = arith.constant 0 : index
    %145 = vector.load %arg1[%c9_84, %c32_85, %c0_86] : memref<36x33x8xf32, #tpu.memory_space<vmem>>, vector<1x1x8xf32>
    %146 = vector.shape_cast %145 : vector<1x1x8xf32> to vector<1x8xf32>
    %c10 = arith.constant 10 : index
    %c0_87 = arith.constant 0 : index
    %c0_88 = arith.constant 0 : index
    %147 = vector.load %arg1[%c10, %c0_87, %c0_88] : memref<36x33x8xf32, #tpu.memory_space<vmem>>, vector<1x32x8xf32>
    %148 = vector.shape_cast %147 : vector<1x32x8xf32> to vector<32x8xf32>
    %c10_89 = arith.constant 10 : index
    %c32_90 = arith.constant 32 : index
    %c0_91 = arith.constant 0 : index
    %149 = vector.load %arg1[%c10_89, %c32_90, %c0_91] : memref<36x33x8xf32, #tpu.memory_space<vmem>>, vector<1x1x8xf32>
    %150 = vector.shape_cast %149 : vector<1x1x8xf32> to vector<1x8xf32>
    %c11 = arith.constant 11 : index
    %c0_92 = arith.constant 0 : index
    %c0_93 = arith.constant 0 : index
    %151 = vector.load %arg1[%c11, %c0_92, %c0_93] : memref<36x33x8xf32, #tpu.memory_space<vmem>>, vector<1x32x8xf32>
    %152 = vector.shape_cast %151 : vector<1x32x8xf32> to vector<32x8xf32>
    %c11_94 = arith.constant 11 : index
    %c32_95 = arith.constant 32 : index
    %c0_96 = arith.constant 0 : index
    %153 = vector.load %arg1[%c11_94, %c32_95, %c0_96] : memref<36x33x8xf32, #tpu.memory_space<vmem>>, vector<1x1x8xf32>
    %154 = vector.shape_cast %153 : vector<1x1x8xf32> to vector<1x8xf32>
    %cst_97 = arith.constant dense<0.000000e+00> : vector<16x8xf32>
    %155 = tpu.matmul %13, %144, %cst_97 {dimension_numbers = #tpu.dot_dimension_numbers<[1], [0], [0], [1], [0, 0, 1, 1], [], []>} : vector<16x32xf32>, vector<32x8xf32>, vector<16x8xf32> -> vector<16x8xf32>
    %156 = vector.broadcast %146 : vector<1x8xf32> to vector<16x8xf32>
    %157 = arith.addf %155, %156 : vector<16x8xf32>
    %cst_98 = arith.constant dense<0.000000e+00> : vector<16x8xf32>
    %158 = tpu.matmul %13, %148, %cst_98 {dimension_numbers = #tpu.dot_dimension_numbers<[1], [0], [0], [1], [0, 0, 1, 1], [], []>} : vector<16x32xf32>, vector<32x8xf32>, vector<16x8xf32> -> vector<16x8xf32>
    %159 = vector.broadcast %150 : vector<1x8xf32> to vector<16x8xf32>
    %160 = arith.addf %158, %159 : vector<16x8xf32>
    %cst_99 = arith.constant dense<0.000000e+00> : vector<16x8xf32>
    %161 = tpu.matmul %13, %152, %cst_99 {dimension_numbers = #tpu.dot_dimension_numbers<[1], [0], [0], [1], [0, 0, 1, 1], [], []>} : vector<16x32xf32>, vector<32x8xf32>, vector<16x8xf32> -> vector<16x8xf32>
    %162 = vector.broadcast %154 : vector<1x8xf32> to vector<16x8xf32>
    %163 = arith.addf %161, %162 : vector<16x8xf32>
    %164 = vector.shape_cast %157 : vector<16x8xf32> to vector<2x8x8xf32>
    %165 = vector.shape_cast %160 : vector<16x8xf32> to vector<2x8x8xf32>
    %166 = vector.shape_cast %163 : vector<16x8xf32> to vector<2x8x8xf32>
    "tpu.trace_start"() <{level = 10 : i32, message = "bqd,bkd->bqk"}> : () -> ()
    %cst_100 = arith.constant dense<0.000000e+00> : vector<2x8x8xf32>
    %167 = tpu.matmul %164, %165, %cst_100 {dimension_numbers = #tpu.dot_dimension_numbers<[2], [2], [1], [1], [0, 0, 0, 1, 1, 1], [0], [0]>} : vector<2x8x8xf32>, vector<2x8x8xf32>, vector<2x8x8xf32> -> vector<2x8x8xf32>
    "tpu.trace_stop"() : () -> ()
    %cst_101 = arith.constant dense<0xFF800000> : vector<2x8xf32>
    %168 = vector.multi_reduction <maximumf>, %167, %cst_101 [2] : vector<2x8x8xf32> to vector<2x8xf32>
    %169 = vector.shape_cast %168 : vector<2x8xf32> to vector<2x8x1xf32>
    %170 = vector.broadcast %169 : vector<2x8x1xf32> to vector<2x8x8xf32>
    %171 = arith.subf %167, %170 : vector<2x8x8xf32>
    %172 = math.exp %171 : vector<2x8x8xf32>
    %cst_102 = arith.constant dense<0.000000e+00> : vector<2x8xf32>
    %173 = vector.multi_reduction <add>, %172, %cst_102 [2] : vector<2x8x8xf32> to vector<2x8xf32>
    %174 = vector.shape_cast %173 : vector<2x8xf32> to vector<2x8x1xf32>
    %175 = tpu.reciprocal %174 {approx = true} : vector<2x8x1xf32> -> vector<2x8x1xf32>
    %176 = vector.broadcast %175 : vector<2x8x1xf32> to vector<2x8x8xf32>
    %177 = arith.mulf %172, %176 : vector<2x8x8xf32>
    %178 = arith.addf %137, %177 : vector<2x8x8xf32>
    "tpu.trace_start"() <{level = 10 : i32, message = "bqk,bkd->bqd"}> : () -> ()
    %cst_103 = arith.constant dense<0.000000e+00> : vector<2x8x8xf32>
    %179 = tpu.matmul %177, %166, %cst_103 {dimension_numbers = #tpu.dot_dimension_numbers<[2], [1], [1], [2], [0, 0, 0, 1, 1, 2], [0], [0]>} : vector<2x8x8xf32>, vector<2x8x8xf32>, vector<2x8x8xf32> -> vector<2x8x8xf32>
    "tpu.trace_stop"() : () -> ()
    %180 = vector.shape_cast %179 : vector<2x8x8xf32> to vector<16x8xf32>
    %181 = vector.extract_strided_slice %14 {offsets = [24, 0], sizes = [8, 32], strides = [1, 1]} : vector<32x32xf32> to vector<8x32xf32>
    %cst_104 = arith.constant dense<0.000000e+00> : vector<16x32xf32>
    %182 = tpu.matmul %180, %181, %cst_104 {dimension_numbers = #tpu.dot_dimension_numbers<[1], [0], [0], [1], [0, 0, 1, 1], [], []>} : vector<16x8xf32>, vector<8x32xf32>, vector<16x32xf32> -> vector<16x32xf32>
    %183 = arith.addf %142, %182 : vector<16x32xf32>
    %cst_105 = arith.constant 2.500000e-01 : f32
    %184 = vector.broadcast %cst_105 : f32 to vector<2x8x8xf32>
    %185 = arith.mulf %178, %184 : vector<2x8x8xf32>
    %186 = arith.addf %13, %183 : vector<16x32xf32>
    %cst_106 = arith.constant dense<0.000000e+00> : vector<16xf32>
    %187 = vector.multi_reduction <add>, %186, %cst_106 [1] : vector<16x32xf32> to vector<16xf32>
    %188 = vector.shape_cast %187 : vector<16xf32> to vector<16x1xf32>
    %cst_107 = arith.constant 3.200000e+01 : f32
    %189 = vector.broadcast %cst_107 : f32 to vector<16x1xf32>
    %190 = arith.divf %188, %189 : vector<16x1xf32>
    %191 = vector.broadcast %190 : vector<16x1xf32> to vector<16x32xf32>
    %192 = arith.subf %186, %191 : vector<16x32xf32>
    %193 = arith.mulf %192, %192 : vector<16x32xf32>
    %cst_108 = arith.constant dense<0.000000e+00> : vector<16xf32>
    %194 = vector.multi_reduction <add>, %193, %cst_108 [1] : vector<16x32xf32> to vector<16xf32>
    %195 = vector.shape_cast %194 : vector<16xf32> to vector<16x1xf32>
    %cst_109 = arith.constant 3.200000e+01 : f32
    %196 = vector.broadcast %cst_109 : f32 to vector<16x1xf32>
    %197 = arith.divf %195, %196 : vector<16x1xf32>
    %198 = vector.broadcast %190 : vector<16x1xf32> to vector<16x32xf32>
    %199 = arith.subf %186, %198 : vector<16x32xf32>
    %cst_110 = arith.constant 9.99999974E-6 : f32
    %200 = vector.broadcast %cst_110 : f32 to vector<16x1xf32>
    %201 = arith.addf %197, %200 : vector<16x1xf32>
    %202 = math.rsqrt %201 : vector<16x1xf32>
    %203 = vector.broadcast %202 : vector<16x1xf32> to vector<16x32xf32>
    %204 = arith.mulf %199, %203 : vector<16x32xf32>
    %205 = vector.broadcast %16 : vector<1x32xf32> to vector<16x32xf32>
    %206 = arith.mulf %204, %205 : vector<16x32xf32>
    %207 = vector.broadcast %17 : vector<1x32xf32> to vector<16x32xf32>
    %208 = arith.addf %206, %207 : vector<16x32xf32>
    %c80 = arith.constant 80 : index
    %c0_111 = arith.constant 0 : index
    %209 = vector.load %arg2[%c80, %c0_111] : memref<536x64xf32, #tpu.memory_space<vmem>>, vector<32x32xf32>
    %c112 = arith.constant 112 : index
    %c0_112 = arith.constant 0 : index
    %210 = vector.load %arg2[%c112, %c0_112] : memref<536x64xf32, #tpu.memory_space<vmem>>, vector<1x32xf32>
    %c113 = arith.constant 113 : index
    %c0_113 = arith.constant 0 : index
    %211 = vector.load %arg2[%c113, %c0_113] : memref<536x64xf32, #tpu.memory_space<vmem>>, vector<1x32xf32>
    %c114 = arith.constant 114 : index
    %c0_114 = arith.constant 0 : index
    %212 = vector.load %arg2[%c114, %c0_114] : memref<536x64xf32, #tpu.memory_space<vmem>>, vector<1x32xf32>
    %cst_115 = arith.constant 0.000000e+00 : f32
    %213 = vector.broadcast %cst_115 : f32 to vector<2x8x8xf32>
    %c12 = arith.constant 12 : index
    %c0_116 = arith.constant 0 : index
    %c0_117 = arith.constant 0 : index
    %214 = vector.load %arg1[%c12, %c0_116, %c0_117] : memref<36x33x8xf32, #tpu.memory_space<vmem>>, vector<1x32x8xf32>
    %215 = vector.shape_cast %214 : vector<1x32x8xf32> to vector<32x8xf32>
    %c12_118 = arith.constant 12 : index
    %c32_119 = arith.constant 32 : index
    %c0_120 = arith.constant 0 : index
    %216 = vector.load %arg1[%c12_118, %c32_119, %c0_120] : memref<36x33x8xf32, #tpu.memory_space<vmem>>, vector<1x1x8xf32>
    %217 = vector.shape_cast %216 : vector<1x1x8xf32> to vector<1x8xf32>
    %c13 = arith.constant 13 : index
    %c0_121 = arith.constant 0 : index
    %c0_122 = arith.constant 0 : index
    %218 = vector.load %arg1[%c13, %c0_121, %c0_122] : memref<36x33x8xf32, #tpu.memory_space<vmem>>, vector<1x32x8xf32>
    %219 = vector.shape_cast %218 : vector<1x32x8xf32> to vector<32x8xf32>
    %c13_123 = arith.constant 13 : index
    %c32_124 = arith.constant 32 : index
    %c0_125 = arith.constant 0 : index
    %220 = vector.load %arg1[%c13_123, %c32_124, %c0_125] : memref<36x33x8xf32, #tpu.memory_space<vmem>>, vector<1x1x8xf32>
    %221 = vector.shape_cast %220 : vector<1x1x8xf32> to vector<1x8xf32>
    %c14 = arith.constant 14 : index
    %c0_126 = arith.constant 0 : index
    %c0_127 = arith.constant 0 : index
    %222 = vector.load %arg1[%c14, %c0_126, %c0_127] : memref<36x33x8xf32, #tpu.memory_space<vmem>>, vector<1x32x8xf32>
    %223 = vector.shape_cast %222 : vector<1x32x8xf32> to vector<32x8xf32>
    %c14_128 = arith.constant 14 : index
    %c32_129 = arith.constant 32 : index
    %c0_130 = arith.constant 0 : index
    %224 = vector.load %arg1[%c14_128, %c32_129, %c0_130] : memref<36x33x8xf32, #tpu.memory_space<vmem>>, vector<1x1x8xf32>
    %225 = vector.shape_cast %224 : vector<1x1x8xf32> to vector<1x8xf32>
    %cst_131 = arith.constant dense<0.000000e+00> : vector<16x8xf32>
    %226 = tpu.matmul %208, %215, %cst_131 {dimension_numbers = #tpu.dot_dimension_numbers<[1], [0], [0], [1], [0, 0, 1, 1], [], []>} : vector<16x32xf32>, vector<32x8xf32>, vector<16x8xf32> -> vector<16x8xf32>
    %227 = vector.broadcast %217 : vector<1x8xf32> to vector<16x8xf32>
    %228 = arith.addf %226, %227 : vector<16x8xf32>
    %cst_132 = arith.constant dense<0.000000e+00> : vector<16x8xf32>
    %229 = tpu.matmul %208, %219, %cst_132 {dimension_numbers = #tpu.dot_dimension_numbers<[1], [0], [0], [1], [0, 0, 1, 1], [], []>} : vector<16x32xf32>, vector<32x8xf32>, vector<16x8xf32> -> vector<16x8xf32>
    %230 = vector.broadcast %221 : vector<1x8xf32> to vector<16x8xf32>
    %231 = arith.addf %229, %230 : vector<16x8xf32>
    %cst_133 = arith.constant dense<0.000000e+00> : vector<16x8xf32>
    %232 = tpu.matmul %208, %223, %cst_133 {dimension_numbers = #tpu.dot_dimension_numbers<[1], [0], [0], [1], [0, 0, 1, 1], [], []>} : vector<16x32xf32>, vector<32x8xf32>, vector<16x8xf32> -> vector<16x8xf32>
    %233 = vector.broadcast %225 : vector<1x8xf32> to vector<16x8xf32>
    %234 = arith.addf %232, %233 : vector<16x8xf32>
    %235 = vector.shape_cast %228 : vector<16x8xf32> to vector<2x8x8xf32>
    %236 = vector.shape_cast %231 : vector<16x8xf32> to vector<2x8x8xf32>
    %237 = vector.shape_cast %234 : vector<16x8xf32> to vector<2x8x8xf32>
    "tpu.trace_start"() <{level = 10 : i32, message = "bqd,bkd->bqk"}> : () -> ()
    %cst_134 = arith.constant dense<0.000000e+00> : vector<2x8x8xf32>
    %238 = tpu.matmul %235, %236, %cst_134 {dimension_numbers = #tpu.dot_dimension_numbers<[2], [2], [1], [1], [0, 0, 0, 1, 1, 1], [0], [0]>} : vector<2x8x8xf32>, vector<2x8x8xf32>, vector<2x8x8xf32> -> vector<2x8x8xf32>
    "tpu.trace_stop"() : () -> ()
    %cst_135 = arith.constant dense<0xFF800000> : vector<2x8xf32>
    %239 = vector.multi_reduction <maximumf>, %238, %cst_135 [2] : vector<2x8x8xf32> to vector<2x8xf32>
    %240 = vector.shape_cast %239 : vector<2x8xf32> to vector<2x8x1xf32>
    %241 = vector.broadcast %240 : vector<2x8x1xf32> to vector<2x8x8xf32>
    %242 = arith.subf %238, %241 : vector<2x8x8xf32>
    %243 = math.exp %242 : vector<2x8x8xf32>
    %cst_136 = arith.constant dense<0.000000e+00> : vector<2x8xf32>
    %244 = vector.multi_reduction <add>, %243, %cst_136 [2] : vector<2x8x8xf32> to vector<2x8xf32>
    %245 = vector.shape_cast %244 : vector<2x8xf32> to vector<2x8x1xf32>
    %246 = tpu.reciprocal %245 {approx = true} : vector<2x8x1xf32> -> vector<2x8x1xf32>
    %247 = vector.broadcast %246 : vector<2x8x1xf32> to vector<2x8x8xf32>
    %248 = arith.mulf %243, %247 : vector<2x8x8xf32>
    %249 = arith.addf %213, %248 : vector<2x8x8xf32>
    "tpu.trace_start"() <{level = 10 : i32, message = "bqk,bkd->bqd"}> : () -> ()
    %cst_137 = arith.constant dense<0.000000e+00> : vector<2x8x8xf32>
    %250 = tpu.matmul %248, %237, %cst_137 {dimension_numbers = #tpu.dot_dimension_numbers<[2], [1], [1], [2], [0, 0, 0, 1, 1, 2], [0], [0]>} : vector<2x8x8xf32>, vector<2x8x8xf32>, vector<2x8x8xf32> -> vector<2x8x8xf32>
    "tpu.trace_stop"() : () -> ()
    %251 = vector.shape_cast %250 : vector<2x8x8xf32> to vector<16x8xf32>
    %252 = vector.extract_strided_slice %209 {offsets = [0, 0], sizes = [8, 32], strides = [1, 1]} : vector<32x32xf32> to vector<8x32xf32>
    %cst_138 = arith.constant dense<0.000000e+00> : vector<16x32xf32>
    %253 = tpu.matmul %251, %252, %cst_138 {dimension_numbers = #tpu.dot_dimension_numbers<[1], [0], [0], [1], [0, 0, 1, 1], [], []>} : vector<16x8xf32>, vector<8x32xf32>, vector<16x32xf32> -> vector<16x32xf32>
    %254 = vector.broadcast %210 : vector<1x32xf32> to vector<16x32xf32>
    %255 = arith.addf %254, %253 : vector<16x32xf32>
    %c15 = arith.constant 15 : index
    %c0_139 = arith.constant 0 : index
    %c0_140 = arith.constant 0 : index
    %256 = vector.load %arg1[%c15, %c0_139, %c0_140] : memref<36x33x8xf32, #tpu.memory_space<vmem>>, vector<1x32x8xf32>
    %257 = vector.shape_cast %256 : vector<1x32x8xf32> to vector<32x8xf32>
    %c15_141 = arith.constant 15 : index
    %c32_142 = arith.constant 32 : index
    %c0_143 = arith.constant 0 : index
    %258 = vector.load %arg1[%c15_141, %c32_142, %c0_143] : memref<36x33x8xf32, #tpu.memory_space<vmem>>, vector<1x1x8xf32>
    %259 = vector.shape_cast %258 : vector<1x1x8xf32> to vector<1x8xf32>
    %c16_144 = arith.constant 16 : index
    %c0_145 = arith.constant 0 : index
    %c0_146 = arith.constant 0 : index
    %260 = vector.load %arg1[%c16_144, %c0_145, %c0_146] : memref<36x33x8xf32, #tpu.memory_space<vmem>>, vector<1x32x8xf32>
    %261 = vector.shape_cast %260 : vector<1x32x8xf32> to vector<32x8xf32>
    %c16_147 = arith.constant 16 : index
    %c32_148 = arith.constant 32 : index
    %c0_149 = arith.constant 0 : index
    %262 = vector.load %arg1[%c16_147, %c32_148, %c0_149] : memref<36x33x8xf32, #tpu.memory_space<vmem>>, vector<1x1x8xf32>
    %263 = vector.shape_cast %262 : vector<1x1x8xf32> to vector<1x8xf32>
    %c17 = arith.constant 17 : index
    %c0_150 = arith.constant 0 : index
    %c0_151 = arith.constant 0 : index
    %264 = vector.load %arg1[%c17, %c0_150, %c0_151] : memref<36x33x8xf32, #tpu.memory_space<vmem>>, vector<1x32x8xf32>
    %265 = vector.shape_cast %264 : vector<1x32x8xf32> to vector<32x8xf32>
    %c17_152 = arith.constant 17 : index
    %c32_153 = arith.constant 32 : index
    %c0_154 = arith.constant 0 : index
    %266 = vector.load %arg1[%c17_152, %c32_153, %c0_154] : memref<36x33x8xf32, #tpu.memory_space<vmem>>, vector<1x1x8xf32>
    %267 = vector.shape_cast %266 : vector<1x1x8xf32> to vector<1x8xf32>
    %cst_155 = arith.constant dense<0.000000e+00> : vector<16x8xf32>
    %268 = tpu.matmul %208, %257, %cst_155 {dimension_numbers = #tpu.dot_dimension_numbers<[1], [0], [0], [1], [0, 0, 1, 1], [], []>} : vector<16x32xf32>, vector<32x8xf32>, vector<16x8xf32> -> vector<16x8xf32>
    %269 = vector.broadcast %259 : vector<1x8xf32> to vector<16x8xf32>
    %270 = arith.addf %268, %269 : vector<16x8xf32>
    %cst_156 = arith.constant dense<0.000000e+00> : vector<16x8xf32>
    %271 = tpu.matmul %208, %261, %cst_156 {dimension_numbers = #tpu.dot_dimension_numbers<[1], [0], [0], [1], [0, 0, 1, 1], [], []>} : vector<16x32xf32>, vector<32x8xf32>, vector<16x8xf32> -> vector<16x8xf32>
    %272 = vector.broadcast %263 : vector<1x8xf32> to vector<16x8xf32>
    %273 = arith.addf %271, %272 : vector<16x8xf32>
    %cst_157 = arith.constant dense<0.000000e+00> : vector<16x8xf32>
    %274 = tpu.matmul %208, %265, %cst_157 {dimension_numbers = #tpu.dot_dimension_numbers<[1], [0], [0], [1], [0, 0, 1, 1], [], []>} : vector<16x32xf32>, vector<32x8xf32>, vector<16x8xf32> -> vector<16x8xf32>
    %275 = vector.broadcast %267 : vector<1x8xf32> to vector<16x8xf32>
    %276 = arith.addf %274, %275 : vector<16x8xf32>
    %277 = vector.shape_cast %270 : vector<16x8xf32> to vector<2x8x8xf32>
    %278 = vector.shape_cast %273 : vector<16x8xf32> to vector<2x8x8xf32>
    %279 = vector.shape_cast %276 : vector<16x8xf32> to vector<2x8x8xf32>
    "tpu.trace_start"() <{level = 10 : i32, message = "bqd,bkd->bqk"}> : () -> ()
    %cst_158 = arith.constant dense<0.000000e+00> : vector<2x8x8xf32>
    %280 = tpu.matmul %277, %278, %cst_158 {dimension_numbers = #tpu.dot_dimension_numbers<[2], [2], [1], [1], [0, 0, 0, 1, 1, 1], [0], [0]>} : vector<2x8x8xf32>, vector<2x8x8xf32>, vector<2x8x8xf32> -> vector<2x8x8xf32>
    "tpu.trace_stop"() : () -> ()
    %cst_159 = arith.constant dense<0xFF800000> : vector<2x8xf32>
    %281 = vector.multi_reduction <maximumf>, %280, %cst_159 [2] : vector<2x8x8xf32> to vector<2x8xf32>
    %282 = vector.shape_cast %281 : vector<2x8xf32> to vector<2x8x1xf32>
    %283 = vector.broadcast %282 : vector<2x8x1xf32> to vector<2x8x8xf32>
    %284 = arith.subf %280, %283 : vector<2x8x8xf32>
    %285 = math.exp %284 : vector<2x8x8xf32>
    %cst_160 = arith.constant dense<0.000000e+00> : vector<2x8xf32>
    %286 = vector.multi_reduction <add>, %285, %cst_160 [2] : vector<2x8x8xf32> to vector<2x8xf32>
    %287 = vector.shape_cast %286 : vector<2x8xf32> to vector<2x8x1xf32>
    %288 = tpu.reciprocal %287 {approx = true} : vector<2x8x1xf32> -> vector<2x8x1xf32>
    %289 = vector.broadcast %288 : vector<2x8x1xf32> to vector<2x8x8xf32>
    %290 = arith.mulf %285, %289 : vector<2x8x8xf32>
    %291 = arith.addf %249, %290 : vector<2x8x8xf32>
    "tpu.trace_start"() <{level = 10 : i32, message = "bqk,bkd->bqd"}> : () -> ()
    %cst_161 = arith.constant dense<0.000000e+00> : vector<2x8x8xf32>
    %292 = tpu.matmul %290, %279, %cst_161 {dimension_numbers = #tpu.dot_dimension_numbers<[2], [1], [1], [2], [0, 0, 0, 1, 1, 2], [0], [0]>} : vector<2x8x8xf32>, vector<2x8x8xf32>, vector<2x8x8xf32> -> vector<2x8x8xf32>
    "tpu.trace_stop"() : () -> ()
    %293 = vector.shape_cast %292 : vector<2x8x8xf32> to vector<16x8xf32>
    %294 = vector.extract_strided_slice %209 {offsets = [8, 0], sizes = [8, 32], strides = [1, 1]} : vector<32x32xf32> to vector<8x32xf32>
    %cst_162 = arith.constant dense<0.000000e+00> : vector<16x32xf32>
    %295 = tpu.matmul %293, %294, %cst_162 {dimension_numbers = #tpu.dot_dimension_numbers<[1], [0], [0], [1], [0, 0, 1, 1], [], []>} : vector<16x8xf32>, vector<8x32xf32>, vector<16x32xf32> -> vector<16x32xf32>
    %296 = arith.addf %255, %295 : vector<16x32xf32>
    %c18 = arith.constant 18 : index
    %c0_163 = arith.constant 0 : index
    %c0_164 = arith.constant 0 : index
    %297 = vector.load %arg1[%c18, %c0_163, %c0_164] : memref<36x33x8xf32, #tpu.memory_space<vmem>>, vector<1x32x8xf32>
    %298 = vector.shape_cast %297 : vector<1x32x8xf32> to vector<32x8xf32>
    %c18_165 = arith.constant 18 : index
    %c32_166 = arith.constant 32 : index
    %c0_167 = arith.constant 0 : index
    %299 = vector.load %arg1[%c18_165, %c32_166, %c0_167] : memref<36x33x8xf32, #tpu.memory_space<vmem>>, vector<1x1x8xf32>
    %300 = vector.shape_cast %299 : vector<1x1x8xf32> to vector<1x8xf32>
    %c19 = arith.constant 19 : index
    %c0_168 = arith.constant 0 : index
    %c0_169 = arith.constant 0 : index
    %301 = vector.load %arg1[%c19, %c0_168, %c0_169] : memref<36x33x8xf32, #tpu.memory_space<vmem>>, vector<1x32x8xf32>
    %302 = vector.shape_cast %301 : vector<1x32x8xf32> to vector<32x8xf32>
    %c19_170 = arith.constant 19 : index
    %c32_171 = arith.constant 32 : index
    %c0_172 = arith.constant 0 : index
    %303 = vector.load %arg1[%c19_170, %c32_171, %c0_172] : memref<36x33x8xf32, #tpu.memory_space<vmem>>, vector<1x1x8xf32>
    %304 = vector.shape_cast %303 : vector<1x1x8xf32> to vector<1x8xf32>
    %c20 = arith.constant 20 : index
    %c0_173 = arith.constant 0 : index
    %c0_174 = arith.constant 0 : index
    %305 = vector.load %arg1[%c20, %c0_173, %c0_174] : memref<36x33x8xf32, #tpu.memory_space<vmem>>, vector<1x32x8xf32>
    %306 = vector.shape_cast %305 : vector<1x32x8xf32> to vector<32x8xf32>
    %c20_175 = arith.constant 20 : index
    %c32_176 = arith.constant 32 : index
    %c0_177 = arith.constant 0 : index
    %307 = vector.load %arg1[%c20_175, %c32_176, %c0_177] : memref<36x33x8xf32, #tpu.memory_space<vmem>>, vector<1x1x8xf32>
    %308 = vector.shape_cast %307 : vector<1x1x8xf32> to vector<1x8xf32>
    %cst_178 = arith.constant dense<0.000000e+00> : vector<16x8xf32>
    %309 = tpu.matmul %208, %298, %cst_178 {dimension_numbers = #tpu.dot_dimension_numbers<[1], [0], [0], [1], [0, 0, 1, 1], [], []>} : vector<16x32xf32>, vector<32x8xf32>, vector<16x8xf32> -> vector<16x8xf32>
    %310 = vector.broadcast %300 : vector<1x8xf32> to vector<16x8xf32>
    %311 = arith.addf %309, %310 : vector<16x8xf32>
    %cst_179 = arith.constant dense<0.000000e+00> : vector<16x8xf32>
    %312 = tpu.matmul %208, %302, %cst_179 {dimension_numbers = #tpu.dot_dimension_numbers<[1], [0], [0], [1], [0, 0, 1, 1], [], []>} : vector<16x32xf32>, vector<32x8xf32>, vector<16x8xf32> -> vector<16x8xf32>
    %313 = vector.broadcast %304 : vector<1x8xf32> to vector<16x8xf32>
    %314 = arith.addf %312, %313 : vector<16x8xf32>
    %cst_180 = arith.constant dense<0.000000e+00> : vector<16x8xf32>
    %315 = tpu.matmul %208, %306, %cst_180 {dimension_numbers = #tpu.dot_dimension_numbers<[1], [0], [0], [1], [0, 0, 1, 1], [], []>} : vector<16x32xf32>, vector<32x8xf32>, vector<16x8xf32> -> vector<16x8xf32>
    %316 = vector.broadcast %308 : vector<1x8xf32> to vector<16x8xf32>
    %317 = arith.addf %315, %316 : vector<16x8xf32>
    %318 = vector.shape_cast %311 : vector<16x8xf32> to vector<2x8x8xf32>
    %319 = vector.shape_cast %314 : vector<16x8xf32> to vector<2x8x8xf32>
    %320 = vector.shape_cast %317 : vector<16x8xf32> to vector<2x8x8xf32>
    "tpu.trace_start"() <{level = 10 : i32, message = "bqd,bkd->bqk"}> : () -> ()
    %cst_181 = arith.constant dense<0.000000e+00> : vector<2x8x8xf32>
    %321 = tpu.matmul %318, %319, %cst_181 {dimension_numbers = #tpu.dot_dimension_numbers<[2], [2], [1], [1], [0, 0, 0, 1, 1, 1], [0], [0]>} : vector<2x8x8xf32>, vector<2x8x8xf32>, vector<2x8x8xf32> -> vector<2x8x8xf32>
    "tpu.trace_stop"() : () -> ()
    %cst_182 = arith.constant dense<0xFF800000> : vector<2x8xf32>
    %322 = vector.multi_reduction <maximumf>, %321, %cst_182 [2] : vector<2x8x8xf32> to vector<2x8xf32>
    %323 = vector.shape_cast %322 : vector<2x8xf32> to vector<2x8x1xf32>
    %324 = vector.broadcast %323 : vector<2x8x1xf32> to vector<2x8x8xf32>
    %325 = arith.subf %321, %324 : vector<2x8x8xf32>
    %326 = math.exp %325 : vector<2x8x8xf32>
    %cst_183 = arith.constant dense<0.000000e+00> : vector<2x8xf32>
    %327 = vector.multi_reduction <add>, %326, %cst_183 [2] : vector<2x8x8xf32> to vector<2x8xf32>
    %328 = vector.shape_cast %327 : vector<2x8xf32> to vector<2x8x1xf32>
    %329 = tpu.reciprocal %328 {approx = true} : vector<2x8x1xf32> -> vector<2x8x1xf32>
    %330 = vector.broadcast %329 : vector<2x8x1xf32> to vector<2x8x8xf32>
    %331 = arith.mulf %326, %330 : vector<2x8x8xf32>
    %332 = arith.addf %291, %331 : vector<2x8x8xf32>
    "tpu.trace_start"() <{level = 10 : i32, message = "bqk,bkd->bqd"}> : () -> ()
    %cst_184 = arith.constant dense<0.000000e+00> : vector<2x8x8xf32>
    %333 = tpu.matmul %331, %320, %cst_184 {dimension_numbers = #tpu.dot_dimension_numbers<[2], [1], [1], [2], [0, 0, 0, 1, 1, 2], [0], [0]>} : vector<2x8x8xf32>, vector<2x8x8xf32>, vector<2x8x8xf32> -> vector<2x8x8xf32>
    "tpu.trace_stop"() : () -> ()
    %334 = vector.shape_cast %333 : vector<2x8x8xf32> to vector<16x8xf32>
    %335 = vector.extract_strided_slice %209 {offsets = [16, 0], sizes = [8, 32], strides = [1, 1]} : vector<32x32xf32> to vector<8x32xf32>
    %cst_185 = arith.constant dense<0.000000e+00> : vector<16x32xf32>
    %336 = tpu.matmul %334, %335, %cst_185 {dimension_numbers = #tpu.dot_dimension_numbers<[1], [0], [0], [1], [0, 0, 1, 1], [], []>} : vector<16x8xf32>, vector<8x32xf32>, vector<16x32xf32> -> vector<16x32xf32>
    %337 = arith.addf %296, %336 : vector<16x32xf32>
    %c21 = arith.constant 21 : index
    %c0_186 = arith.constant 0 : index
    %c0_187 = arith.constant 0 : index
    %338 = vector.load %arg1[%c21, %c0_186, %c0_187] : memref<36x33x8xf32, #tpu.memory_space<vmem>>, vector<1x32x8xf32>
    %339 = vector.shape_cast %338 : vector<1x32x8xf32> to vector<32x8xf32>
    %c21_188 = arith.constant 21 : index
    %c32_189 = arith.constant 32 : index
    %c0_190 = arith.constant 0 : index
    %340 = vector.load %arg1[%c21_188, %c32_189, %c0_190] : memref<36x33x8xf32, #tpu.memory_space<vmem>>, vector<1x1x8xf32>
    %341 = vector.shape_cast %340 : vector<1x1x8xf32> to vector<1x8xf32>
    %c22 = arith.constant 22 : index
    %c0_191 = arith.constant 0 : index
    %c0_192 = arith.constant 0 : index
    %342 = vector.load %arg1[%c22, %c0_191, %c0_192] : memref<36x33x8xf32, #tpu.memory_space<vmem>>, vector<1x32x8xf32>
    %343 = vector.shape_cast %342 : vector<1x32x8xf32> to vector<32x8xf32>
    %c22_193 = arith.constant 22 : index
    %c32_194 = arith.constant 32 : index
    %c0_195 = arith.constant 0 : index
    %344 = vector.load %arg1[%c22_193, %c32_194, %c0_195] : memref<36x33x8xf32, #tpu.memory_space<vmem>>, vector<1x1x8xf32>
    %345 = vector.shape_cast %344 : vector<1x1x8xf32> to vector<1x8xf32>
    %c23 = arith.constant 23 : index
    %c0_196 = arith.constant 0 : index
    %c0_197 = arith.constant 0 : index
    %346 = vector.load %arg1[%c23, %c0_196, %c0_197] : memref<36x33x8xf32, #tpu.memory_space<vmem>>, vector<1x32x8xf32>
    %347 = vector.shape_cast %346 : vector<1x32x8xf32> to vector<32x8xf32>
    %c23_198 = arith.constant 23 : index
    %c32_199 = arith.constant 32 : index
    %c0_200 = arith.constant 0 : index
    %348 = vector.load %arg1[%c23_198, %c32_199, %c0_200] : memref<36x33x8xf32, #tpu.memory_space<vmem>>, vector<1x1x8xf32>
    %349 = vector.shape_cast %348 : vector<1x1x8xf32> to vector<1x8xf32>
    %cst_201 = arith.constant dense<0.000000e+00> : vector<16x8xf32>
    %350 = tpu.matmul %208, %339, %cst_201 {dimension_numbers = #tpu.dot_dimension_numbers<[1], [0], [0], [1], [0, 0, 1, 1], [], []>} : vector<16x32xf32>, vector<32x8xf32>, vector<16x8xf32> -> vector<16x8xf32>
    %351 = vector.broadcast %341 : vector<1x8xf32> to vector<16x8xf32>
    %352 = arith.addf %350, %351 : vector<16x8xf32>
    %cst_202 = arith.constant dense<0.000000e+00> : vector<16x8xf32>
    %353 = tpu.matmul %208, %343, %cst_202 {dimension_numbers = #tpu.dot_dimension_numbers<[1], [0], [0], [1], [0, 0, 1, 1], [], []>} : vector<16x32xf32>, vector<32x8xf32>, vector<16x8xf32> -> vector<16x8xf32>
    %354 = vector.broadcast %345 : vector<1x8xf32> to vector<16x8xf32>
    %355 = arith.addf %353, %354 : vector<16x8xf32>
    %cst_203 = arith.constant dense<0.000000e+00> : vector<16x8xf32>
    %356 = tpu.matmul %208, %347, %cst_203 {dimension_numbers = #tpu.dot_dimension_numbers<[1], [0], [0], [1], [0, 0, 1, 1], [], []>} : vector<16x32xf32>, vector<32x8xf32>, vector<16x8xf32> -> vector<16x8xf32>
    %357 = vector.broadcast %349 : vector<1x8xf32> to vector<16x8xf32>
    %358 = arith.addf %356, %357 : vector<16x8xf32>
    %359 = vector.shape_cast %352 : vector<16x8xf32> to vector<2x8x8xf32>
    %360 = vector.shape_cast %355 : vector<16x8xf32> to vector<2x8x8xf32>
    %361 = vector.shape_cast %358 : vector<16x8xf32> to vector<2x8x8xf32>
    "tpu.trace_start"() <{level = 10 : i32, message = "bqd,bkd->bqk"}> : () -> ()
    %cst_204 = arith.constant dense<0.000000e+00> : vector<2x8x8xf32>
    %362 = tpu.matmul %359, %360, %cst_204 {dimension_numbers = #tpu.dot_dimension_numbers<[2], [2], [1], [1], [0, 0, 0, 1, 1, 1], [0], [0]>} : vector<2x8x8xf32>, vector<2x8x8xf32>, vector<2x8x8xf32> -> vector<2x8x8xf32>
    "tpu.trace_stop"() : () -> ()
    %cst_205 = arith.constant dense<0xFF800000> : vector<2x8xf32>
    %363 = vector.multi_reduction <maximumf>, %362, %cst_205 [2] : vector<2x8x8xf32> to vector<2x8xf32>
    %364 = vector.shape_cast %363 : vector<2x8xf32> to vector<2x8x1xf32>
    %365 = vector.broadcast %364 : vector<2x8x1xf32> to vector<2x8x8xf32>
    %366 = arith.subf %362, %365 : vector<2x8x8xf32>
    %367 = math.exp %366 : vector<2x8x8xf32>
    %cst_206 = arith.constant dense<0.000000e+00> : vector<2x8xf32>
    %368 = vector.multi_reduction <add>, %367, %cst_206 [2] : vector<2x8x8xf32> to vector<2x8xf32>
    %369 = vector.shape_cast %368 : vector<2x8xf32> to vector<2x8x1xf32>
    %370 = tpu.reciprocal %369 {approx = true} : vector<2x8x1xf32> -> vector<2x8x1xf32>
    %371 = vector.broadcast %370 : vector<2x8x1xf32> to vector<2x8x8xf32>
    %372 = arith.mulf %367, %371 : vector<2x8x8xf32>
    %373 = arith.addf %332, %372 : vector<2x8x8xf32>
    "tpu.trace_start"() <{level = 10 : i32, message = "bqk,bkd->bqd"}> : () -> ()
    %cst_207 = arith.constant dense<0.000000e+00> : vector<2x8x8xf32>
    %374 = tpu.matmul %372, %361, %cst_207 {dimension_numbers = #tpu.dot_dimension_numbers<[2], [1], [1], [2], [0, 0, 0, 1, 1, 2], [0], [0]>} : vector<2x8x8xf32>, vector<2x8x8xf32>, vector<2x8x8xf32> -> vector<2x8x8xf32>
    "tpu.trace_stop"() : () -> ()
    %375 = vector.shape_cast %374 : vector<2x8x8xf32> to vector<16x8xf32>
    %376 = vector.extract_strided_slice %209 {offsets = [24, 0], sizes = [8, 32], strides = [1, 1]} : vector<32x32xf32> to vector<8x32xf32>
    %cst_208 = arith.constant dense<0.000000e+00> : vector<16x32xf32>
    %377 = tpu.matmul %375, %376, %cst_208 {dimension_numbers = #tpu.dot_dimension_numbers<[1], [0], [0], [1], [0, 0, 1, 1], [], []>} : vector<16x8xf32>, vector<8x32xf32>, vector<16x32xf32> -> vector<16x32xf32>
    %378 = arith.addf %337, %377 : vector<16x32xf32>
    %cst_209 = arith.constant 2.500000e-01 : f32
    %379 = vector.broadcast %cst_209 : f32 to vector<2x8x8xf32>
    %380 = arith.mulf %373, %379 : vector<2x8x8xf32>
    %381 = arith.addf %208, %378 : vector<16x32xf32>
    %cst_210 = arith.constant dense<0.000000e+00> : vector<16xf32>
    %382 = vector.multi_reduction <add>, %381, %cst_210 [1] : vector<16x32xf32> to vector<16xf32>
    %383 = vector.shape_cast %382 : vector<16xf32> to vector<16x1xf32>
    %cst_211 = arith.constant 3.200000e+01 : f32
    %384 = vector.broadcast %cst_211 : f32 to vector<16x1xf32>
    %385 = arith.divf %383, %384 : vector<16x1xf32>
    %386 = vector.broadcast %385 : vector<16x1xf32> to vector<16x32xf32>
    %387 = arith.subf %381, %386 : vector<16x32xf32>
    %388 = arith.mulf %387, %387 : vector<16x32xf32>
    %cst_212 = arith.constant dense<0.000000e+00> : vector<16xf32>
    %389 = vector.multi_reduction <add>, %388, %cst_212 [1] : vector<16x32xf32> to vector<16xf32>
    %390 = vector.shape_cast %389 : vector<16xf32> to vector<16x1xf32>
    %cst_213 = arith.constant 3.200000e+01 : f32
    %391 = vector.broadcast %cst_213 : f32 to vector<16x1xf32>
    %392 = arith.divf %390, %391 : vector<16x1xf32>
    %393 = vector.broadcast %385 : vector<16x1xf32> to vector<16x32xf32>
    %394 = arith.subf %381, %393 : vector<16x32xf32>
    %cst_214 = arith.constant 9.99999974E-6 : f32
    %395 = vector.broadcast %cst_214 : f32 to vector<16x1xf32>
    %396 = arith.addf %392, %395 : vector<16x1xf32>
    %397 = math.rsqrt %396 : vector<16x1xf32>
    %398 = vector.broadcast %397 : vector<16x1xf32> to vector<16x32xf32>
    %399 = arith.mulf %394, %398 : vector<16x32xf32>
    %400 = vector.broadcast %211 : vector<1x32xf32> to vector<16x32xf32>
    %401 = arith.mulf %399, %400 : vector<16x32xf32>
    %402 = vector.broadcast %212 : vector<1x32xf32> to vector<16x32xf32>
    %403 = arith.addf %401, %402 : vector<16x32xf32>
    %c120 = arith.constant 120 : index
    %c0_215 = arith.constant 0 : index
    %404 = vector.load %arg2[%c120, %c0_215] : memref<536x64xf32, #tpu.memory_space<vmem>>, vector<32x32xf32>
    %c152 = arith.constant 152 : index
    %c0_216 = arith.constant 0 : index
    %405 = vector.load %arg2[%c152, %c0_216] : memref<536x64xf32, #tpu.memory_space<vmem>>, vector<1x32xf32>
    %c153 = arith.constant 153 : index
    %c0_217 = arith.constant 0 : index
    %406 = vector.load %arg2[%c153, %c0_217] : memref<536x64xf32, #tpu.memory_space<vmem>>, vector<1x32xf32>
    %c154 = arith.constant 154 : index
    %c0_218 = arith.constant 0 : index
    %407 = vector.load %arg2[%c154, %c0_218] : memref<536x64xf32, #tpu.memory_space<vmem>>, vector<1x32xf32>
    %cst_219 = arith.constant 0.000000e+00 : f32
    %408 = vector.broadcast %cst_219 : f32 to vector<2x8x8xf32>
    %c24 = arith.constant 24 : index
    %c0_220 = arith.constant 0 : index
    %c0_221 = arith.constant 0 : index
    %409 = vector.load %arg1[%c24, %c0_220, %c0_221] : memref<36x33x8xf32, #tpu.memory_space<vmem>>, vector<1x32x8xf32>
    %410 = vector.shape_cast %409 : vector<1x32x8xf32> to vector<32x8xf32>
    %c24_222 = arith.constant 24 : index
    %c32_223 = arith.constant 32 : index
    %c0_224 = arith.constant 0 : index
    %411 = vector.load %arg1[%c24_222, %c32_223, %c0_224] : memref<36x33x8xf32, #tpu.memory_space<vmem>>, vector<1x1x8xf32>
    %412 = vector.shape_cast %411 : vector<1x1x8xf32> to vector<1x8xf32>
    %c25 = arith.constant 25 : index
    %c0_225 = arith.constant 0 : index
    %c0_226 = arith.constant 0 : index
    %413 = vector.load %arg1[%c25, %c0_225, %c0_226] : memref<36x33x8xf32, #tpu.memory_space<vmem>>, vector<1x32x8xf32>
    %414 = vector.shape_cast %413 : vector<1x32x8xf32> to vector<32x8xf32>
    %c25_227 = arith.constant 25 : index
    %c32_228 = arith.constant 32 : index
    %c0_229 = arith.constant 0 : index
    %415 = vector.load %arg1[%c25_227, %c32_228, %c0_229] : memref<36x33x8xf32, #tpu.memory_space<vmem>>, vector<1x1x8xf32>
    %416 = vector.shape_cast %415 : vector<1x1x8xf32> to vector<1x8xf32>
    %c26 = arith.constant 26 : index
    %c0_230 = arith.constant 0 : index
    %c0_231 = arith.constant 0 : index
    %417 = vector.load %arg1[%c26, %c0_230, %c0_231] : memref<36x33x8xf32, #tpu.memory_space<vmem>>, vector<1x32x8xf32>
    %418 = vector.shape_cast %417 : vector<1x32x8xf32> to vector<32x8xf32>
    %c26_232 = arith.constant 26 : index
    %c32_233 = arith.constant 32 : index
    %c0_234 = arith.constant 0 : index
    %419 = vector.load %arg1[%c26_232, %c32_233, %c0_234] : memref<36x33x8xf32, #tpu.memory_space<vmem>>, vector<1x1x8xf32>
    %420 = vector.shape_cast %419 : vector<1x1x8xf32> to vector<1x8xf32>
    %cst_235 = arith.constant dense<0.000000e+00> : vector<16x8xf32>
    %421 = tpu.matmul %403, %410, %cst_235 {dimension_numbers = #tpu.dot_dimension_numbers<[1], [0], [0], [1], [0, 0, 1, 1], [], []>} : vector<16x32xf32>, vector<32x8xf32>, vector<16x8xf32> -> vector<16x8xf32>
    %422 = vector.broadcast %412 : vector<1x8xf32> to vector<16x8xf32>
    %423 = arith.addf %421, %422 : vector<16x8xf32>
    %cst_236 = arith.constant dense<0.000000e+00> : vector<16x8xf32>
    %424 = tpu.matmul %403, %414, %cst_236 {dimension_numbers = #tpu.dot_dimension_numbers<[1], [0], [0], [1], [0, 0, 1, 1], [], []>} : vector<16x32xf32>, vector<32x8xf32>, vector<16x8xf32> -> vector<16x8xf32>
    %425 = vector.broadcast %416 : vector<1x8xf32> to vector<16x8xf32>
    %426 = arith.addf %424, %425 : vector<16x8xf32>
    %cst_237 = arith.constant dense<0.000000e+00> : vector<16x8xf32>
    %427 = tpu.matmul %403, %418, %cst_237 {dimension_numbers = #tpu.dot_dimension_numbers<[1], [0], [0], [1], [0, 0, 1, 1], [], []>} : vector<16x32xf32>, vector<32x8xf32>, vector<16x8xf32> -> vector<16x8xf32>
    %428 = vector.broadcast %420 : vector<1x8xf32> to vector<16x8xf32>
    %429 = arith.addf %427, %428 : vector<16x8xf32>
    %430 = vector.shape_cast %423 : vector<16x8xf32> to vector<2x8x8xf32>
    %431 = vector.shape_cast %426 : vector<16x8xf32> to vector<2x8x8xf32>
    %432 = vector.shape_cast %429 : vector<16x8xf32> to vector<2x8x8xf32>
    "tpu.trace_start"() <{level = 10 : i32, message = "bqd,bkd->bqk"}> : () -> ()
    %cst_238 = arith.constant dense<0.000000e+00> : vector<2x8x8xf32>
    %433 = tpu.matmul %430, %431, %cst_238 {dimension_numbers = #tpu.dot_dimension_numbers<[2], [2], [1], [1], [0, 0, 0, 1, 1, 1], [0], [0]>} : vector<2x8x8xf32>, vector<2x8x8xf32>, vector<2x8x8xf32> -> vector<2x8x8xf32>
    "tpu.trace_stop"() : () -> ()
    %cst_239 = arith.constant dense<0xFF800000> : vector<2x8xf32>
    %434 = vector.multi_reduction <maximumf>, %433, %cst_239 [2] : vector<2x8x8xf32> to vector<2x8xf32>
    %435 = vector.shape_cast %434 : vector<2x8xf32> to vector<2x8x1xf32>
    %436 = vector.broadcast %435 : vector<2x8x1xf32> to vector<2x8x8xf32>
    %437 = arith.subf %433, %436 : vector<2x8x8xf32>
    %438 = math.exp %437 : vector<2x8x8xf32>
    %cst_240 = arith.constant dense<0.000000e+00> : vector<2x8xf32>
    %439 = vector.multi_reduction <add>, %438, %cst_240 [2] : vector<2x8x8xf32> to vector<2x8xf32>
    %440 = vector.shape_cast %439 : vector<2x8xf32> to vector<2x8x1xf32>
    %441 = tpu.reciprocal %440 {approx = true} : vector<2x8x1xf32> -> vector<2x8x1xf32>
    %442 = vector.broadcast %441 : vector<2x8x1xf32> to vector<2x8x8xf32>
    %443 = arith.mulf %438, %442 : vector<2x8x8xf32>
    %444 = arith.addf %408, %443 : vector<2x8x8xf32>
    "tpu.trace_start"() <{level = 10 : i32, message = "bqk,bkd->bqd"}> : () -> ()
    %cst_241 = arith.constant dense<0.000000e+00> : vector<2x8x8xf32>
    %445 = tpu.matmul %443, %432, %cst_241 {dimension_numbers = #tpu.dot_dimension_numbers<[2], [1], [1], [2], [0, 0, 0, 1, 1, 2], [0], [0]>} : vector<2x8x8xf32>, vector<2x8x8xf32>, vector<2x8x8xf32> -> vector<2x8x8xf32>
    "tpu.trace_stop"() : () -> ()
    %446 = vector.shape_cast %445 : vector<2x8x8xf32> to vector<16x8xf32>
    %447 = vector.extract_strided_slice %404 {offsets = [0, 0], sizes = [8, 32], strides = [1, 1]} : vector<32x32xf32> to vector<8x32xf32>
    %cst_242 = arith.constant dense<0.000000e+00> : vector<16x32xf32>
    %448 = tpu.matmul %446, %447, %cst_242 {dimension_numbers = #tpu.dot_dimension_numbers<[1], [0], [0], [1], [0, 0, 1, 1], [], []>} : vector<16x8xf32>, vector<8x32xf32>, vector<16x32xf32> -> vector<16x32xf32>
    %449 = vector.broadcast %405 : vector<1x32xf32> to vector<16x32xf32>
    %450 = arith.addf %449, %448 : vector<16x32xf32>
    %c27 = arith.constant 27 : index
    %c0_243 = arith.constant 0 : index
    %c0_244 = arith.constant 0 : index
    %451 = vector.load %arg1[%c27, %c0_243, %c0_244] : memref<36x33x8xf32, #tpu.memory_space<vmem>>, vector<1x32x8xf32>
    %452 = vector.shape_cast %451 : vector<1x32x8xf32> to vector<32x8xf32>
    %c27_245 = arith.constant 27 : index
    %c32_246 = arith.constant 32 : index
    %c0_247 = arith.constant 0 : index
    %453 = vector.load %arg1[%c27_245, %c32_246, %c0_247] : memref<36x33x8xf32, #tpu.memory_space<vmem>>, vector<1x1x8xf32>
    %454 = vector.shape_cast %453 : vector<1x1x8xf32> to vector<1x8xf32>
    %c28 = arith.constant 28 : index
    %c0_248 = arith.constant 0 : index
    %c0_249 = arith.constant 0 : index
    %455 = vector.load %arg1[%c28, %c0_248, %c0_249] : memref<36x33x8xf32, #tpu.memory_space<vmem>>, vector<1x32x8xf32>
    %456 = vector.shape_cast %455 : vector<1x32x8xf32> to vector<32x8xf32>
    %c28_250 = arith.constant 28 : index
    %c32_251 = arith.constant 32 : index
    %c0_252 = arith.constant 0 : index
    %457 = vector.load %arg1[%c28_250, %c32_251, %c0_252] : memref<36x33x8xf32, #tpu.memory_space<vmem>>, vector<1x1x8xf32>
    %458 = vector.shape_cast %457 : vector<1x1x8xf32> to vector<1x8xf32>
    %c29 = arith.constant 29 : index
    %c0_253 = arith.constant 0 : index
    %c0_254 = arith.constant 0 : index
    %459 = vector.load %arg1[%c29, %c0_253, %c0_254] : memref<36x33x8xf32, #tpu.memory_space<vmem>>, vector<1x32x8xf32>
    %460 = vector.shape_cast %459 : vector<1x32x8xf32> to vector<32x8xf32>
    %c29_255 = arith.constant 29 : index
    %c32_256 = arith.constant 32 : index
    %c0_257 = arith.constant 0 : index
    %461 = vector.load %arg1[%c29_255, %c32_256, %c0_257] : memref<36x33x8xf32, #tpu.memory_space<vmem>>, vector<1x1x8xf32>
    %462 = vector.shape_cast %461 : vector<1x1x8xf32> to vector<1x8xf32>
    %cst_258 = arith.constant dense<0.000000e+00> : vector<16x8xf32>
    %463 = tpu.matmul %403, %452, %cst_258 {dimension_numbers = #tpu.dot_dimension_numbers<[1], [0], [0], [1], [0, 0, 1, 1], [], []>} : vector<16x32xf32>, vector<32x8xf32>, vector<16x8xf32> -> vector<16x8xf32>
    %464 = vector.broadcast %454 : vector<1x8xf32> to vector<16x8xf32>
    %465 = arith.addf %463, %464 : vector<16x8xf32>
    %cst_259 = arith.constant dense<0.000000e+00> : vector<16x8xf32>
    %466 = tpu.matmul %403, %456, %cst_259 {dimension_numbers = #tpu.dot_dimension_numbers<[1], [0], [0], [1], [0, 0, 1, 1], [], []>} : vector<16x32xf32>, vector<32x8xf32>, vector<16x8xf32> -> vector<16x8xf32>
    %467 = vector.broadcast %458 : vector<1x8xf32> to vector<16x8xf32>
    %468 = arith.addf %466, %467 : vector<16x8xf32>
    %cst_260 = arith.constant dense<0.000000e+00> : vector<16x8xf32>
    %469 = tpu.matmul %403, %460, %cst_260 {dimension_numbers = #tpu.dot_dimension_numbers<[1], [0], [0], [1], [0, 0, 1, 1], [], []>} : vector<16x32xf32>, vector<32x8xf32>, vector<16x8xf32> -> vector<16x8xf32>
    %470 = vector.broadcast %462 : vector<1x8xf32> to vector<16x8xf32>
    %471 = arith.addf %469, %470 : vector<16x8xf32>
    %472 = vector.shape_cast %465 : vector<16x8xf32> to vector<2x8x8xf32>
    %473 = vector.shape_cast %468 : vector<16x8xf32> to vector<2x8x8xf32>
    %474 = vector.shape_cast %471 : vector<16x8xf32> to vector<2x8x8xf32>
    "tpu.trace_start"() <{level = 10 : i32, message = "bqd,bkd->bqk"}> : () -> ()
    %cst_261 = arith.constant dense<0.000000e+00> : vector<2x8x8xf32>
    %475 = tpu.matmul %472, %473, %cst_261 {dimension_numbers = #tpu.dot_dimension_numbers<[2], [2], [1], [1], [0, 0, 0, 1, 1, 1], [0], [0]>} : vector<2x8x8xf32>, vector<2x8x8xf32>, vector<2x8x8xf32> -> vector<2x8x8xf32>
    "tpu.trace_stop"() : () -> ()
    %cst_262 = arith.constant dense<0xFF800000> : vector<2x8xf32>
    %476 = vector.multi_reduction <maximumf>, %475, %cst_262 [2] : vector<2x8x8xf32> to vector<2x8xf32>
    %477 = vector.shape_cast %476 : vector<2x8xf32> to vector<2x8x1xf32>
    %478 = vector.broadcast %477 : vector<2x8x1xf32> to vector<2x8x8xf32>
    %479 = arith.subf %475, %478 : vector<2x8x8xf32>
    %480 = math.exp %479 : vector<2x8x8xf32>
    %cst_263 = arith.constant dense<0.000000e+00> : vector<2x8xf32>
    %481 = vector.multi_reduction <add>, %480, %cst_263 [2] : vector<2x8x8xf32> to vector<2x8xf32>
    %482 = vector.shape_cast %481 : vector<2x8xf32> to vector<2x8x1xf32>
    %483 = tpu.reciprocal %482 {approx = true} : vector<2x8x1xf32> -> vector<2x8x1xf32>
    %484 = vector.broadcast %483 : vector<2x8x1xf32> to vector<2x8x8xf32>
    %485 = arith.mulf %480, %484 : vector<2x8x8xf32>
    %486 = arith.addf %444, %485 : vector<2x8x8xf32>
    "tpu.trace_start"() <{level = 10 : i32, message = "bqk,bkd->bqd"}> : () -> ()
    %cst_264 = arith.constant dense<0.000000e+00> : vector<2x8x8xf32>
    %487 = tpu.matmul %485, %474, %cst_264 {dimension_numbers = #tpu.dot_dimension_numbers<[2], [1], [1], [2], [0, 0, 0, 1, 1, 2], [0], [0]>} : vector<2x8x8xf32>, vector<2x8x8xf32>, vector<2x8x8xf32> -> vector<2x8x8xf32>
    "tpu.trace_stop"() : () -> ()
    %488 = vector.shape_cast %487 : vector<2x8x8xf32> to vector<16x8xf32>
    %489 = vector.extract_strided_slice %404 {offsets = [8, 0], sizes = [8, 32], strides = [1, 1]} : vector<32x32xf32> to vector<8x32xf32>
    %cst_265 = arith.constant dense<0.000000e+00> : vector<16x32xf32>
    %490 = tpu.matmul %488, %489, %cst_265 {dimension_numbers = #tpu.dot_dimension_numbers<[1], [0], [0], [1], [0, 0, 1, 1], [], []>} : vector<16x8xf32>, vector<8x32xf32>, vector<16x32xf32> -> vector<16x32xf32>
    %491 = arith.addf %450, %490 : vector<16x32xf32>
    %c30 = arith.constant 30 : index
    %c0_266 = arith.constant 0 : index
    %c0_267 = arith.constant 0 : index
    %492 = vector.load %arg1[%c30, %c0_266, %c0_267] : memref<36x33x8xf32, #tpu.memory_space<vmem>>, vector<1x32x8xf32>
    %493 = vector.shape_cast %492 : vector<1x32x8xf32> to vector<32x8xf32>
    %c30_268 = arith.constant 30 : index
    %c32_269 = arith.constant 32 : index
    %c0_270 = arith.constant 0 : index
    %494 = vector.load %arg1[%c30_268, %c32_269, %c0_270] : memref<36x33x8xf32, #tpu.memory_space<vmem>>, vector<1x1x8xf32>
    %495 = vector.shape_cast %494 : vector<1x1x8xf32> to vector<1x8xf32>
    %c31 = arith.constant 31 : index
    %c0_271 = arith.constant 0 : index
    %c0_272 = arith.constant 0 : index
    %496 = vector.load %arg1[%c31, %c0_271, %c0_272] : memref<36x33x8xf32, #tpu.memory_space<vmem>>, vector<1x32x8xf32>
    %497 = vector.shape_cast %496 : vector<1x32x8xf32> to vector<32x8xf32>
    %c31_273 = arith.constant 31 : index
    %c32_274 = arith.constant 32 : index
    %c0_275 = arith.constant 0 : index
    %498 = vector.load %arg1[%c31_273, %c32_274, %c0_275] : memref<36x33x8xf32, #tpu.memory_space<vmem>>, vector<1x1x8xf32>
    %499 = vector.shape_cast %498 : vector<1x1x8xf32> to vector<1x8xf32>
    %c32_276 = arith.constant 32 : index
    %c0_277 = arith.constant 0 : index
    %c0_278 = arith.constant 0 : index
    %500 = vector.load %arg1[%c32_276, %c0_277, %c0_278] : memref<36x33x8xf32, #tpu.memory_space<vmem>>, vector<1x32x8xf32>
    %501 = vector.shape_cast %500 : vector<1x32x8xf32> to vector<32x8xf32>
    %c32_279 = arith.constant 32 : index
    %c32_280 = arith.constant 32 : index
    %c0_281 = arith.constant 0 : index
    %502 = vector.load %arg1[%c32_279, %c32_280, %c0_281] : memref<36x33x8xf32, #tpu.memory_space<vmem>>, vector<1x1x8xf32>
    %503 = vector.shape_cast %502 : vector<1x1x8xf32> to vector<1x8xf32>
    %cst_282 = arith.constant dense<0.000000e+00> : vector<16x8xf32>
    %504 = tpu.matmul %403, %493, %cst_282 {dimension_numbers = #tpu.dot_dimension_numbers<[1], [0], [0], [1], [0, 0, 1, 1], [], []>} : vector<16x32xf32>, vector<32x8xf32>, vector<16x8xf32> -> vector<16x8xf32>
    %505 = vector.broadcast %495 : vector<1x8xf32> to vector<16x8xf32>
    %506 = arith.addf %504, %505 : vector<16x8xf32>
    %cst_283 = arith.constant dense<0.000000e+00> : vector<16x8xf32>
    %507 = tpu.matmul %403, %497, %cst_283 {dimension_numbers = #tpu.dot_dimension_numbers<[1], [0], [0], [1], [0, 0, 1, 1], [], []>} : vector<16x32xf32>, vector<32x8xf32>, vector<16x8xf32> -> vector<16x8xf32>
    %508 = vector.broadcast %499 : vector<1x8xf32> to vector<16x8xf32>
    %509 = arith.addf %507, %508 : vector<16x8xf32>
    %cst_284 = arith.constant dense<0.000000e+00> : vector<16x8xf32>
    %510 = tpu.matmul %403, %501, %cst_284 {dimension_numbers = #tpu.dot_dimension_numbers<[1], [0], [0], [1], [0, 0, 1, 1], [], []>} : vector<16x32xf32>, vector<32x8xf32>, vector<16x8xf32> -> vector<16x8xf32>
    %511 = vector.broadcast %503 : vector<1x8xf32> to vector<16x8xf32>
    %512 = arith.addf %510, %511 : vector<16x8xf32>
    %513 = vector.shape_cast %506 : vector<16x8xf32> to vector<2x8x8xf32>
    %514 = vector.shape_cast %509 : vector<16x8xf32> to vector<2x8x8xf32>
    %515 = vector.shape_cast %512 : vector<16x8xf32> to vector<2x8x8xf32>
    "tpu.trace_start"() <{level = 10 : i32, message = "bqd,bkd->bqk"}> : () -> ()
    %cst_285 = arith.constant dense<0.000000e+00> : vector<2x8x8xf32>
    %516 = tpu.matmul %513, %514, %cst_285 {dimension_numbers = #tpu.dot_dimension_numbers<[2], [2], [1], [1], [0, 0, 0, 1, 1, 1], [0], [0]>} : vector<2x8x8xf32>, vector<2x8x8xf32>, vector<2x8x8xf32> -> vector<2x8x8xf32>
    "tpu.trace_stop"() : () -> ()
    %cst_286 = arith.constant dense<0xFF800000> : vector<2x8xf32>
    %517 = vector.multi_reduction <maximumf>, %516, %cst_286 [2] : vector<2x8x8xf32> to vector<2x8xf32>
    %518 = vector.shape_cast %517 : vector<2x8xf32> to vector<2x8x1xf32>
    %519 = vector.broadcast %518 : vector<2x8x1xf32> to vector<2x8x8xf32>
    %520 = arith.subf %516, %519 : vector<2x8x8xf32>
    %521 = math.exp %520 : vector<2x8x8xf32>
    %cst_287 = arith.constant dense<0.000000e+00> : vector<2x8xf32>
    %522 = vector.multi_reduction <add>, %521, %cst_287 [2] : vector<2x8x8xf32> to vector<2x8xf32>
    %523 = vector.shape_cast %522 : vector<2x8xf32> to vector<2x8x1xf32>
    %524 = tpu.reciprocal %523 {approx = true} : vector<2x8x1xf32> -> vector<2x8x1xf32>
    %525 = vector.broadcast %524 : vector<2x8x1xf32> to vector<2x8x8xf32>
    %526 = arith.mulf %521, %525 : vector<2x8x8xf32>
    %527 = arith.addf %486, %526 : vector<2x8x8xf32>
    "tpu.trace_start"() <{level = 10 : i32, message = "bqk,bkd->bqd"}> : () -> ()
    %cst_288 = arith.constant dense<0.000000e+00> : vector<2x8x8xf32>
    %528 = tpu.matmul %526, %515, %cst_288 {dimension_numbers = #tpu.dot_dimension_numbers<[2], [1], [1], [2], [0, 0, 0, 1, 1, 2], [0], [0]>} : vector<2x8x8xf32>, vector<2x8x8xf32>, vector<2x8x8xf32> -> vector<2x8x8xf32>
    "tpu.trace_stop"() : () -> ()
    %529 = vector.shape_cast %528 : vector<2x8x8xf32> to vector<16x8xf32>
    %530 = vector.extract_strided_slice %404 {offsets = [16, 0], sizes = [8, 32], strides = [1, 1]} : vector<32x32xf32> to vector<8x32xf32>
    %cst_289 = arith.constant dense<0.000000e+00> : vector<16x32xf32>
    %531 = tpu.matmul %529, %530, %cst_289 {dimension_numbers = #tpu.dot_dimension_numbers<[1], [0], [0], [1], [0, 0, 1, 1], [], []>} : vector<16x8xf32>, vector<8x32xf32>, vector<16x32xf32> -> vector<16x32xf32>
    %532 = arith.addf %491, %531 : vector<16x32xf32>
    %c33_290 = arith.constant 33 : index
    %c0_291 = arith.constant 0 : index
    %c0_292 = arith.constant 0 : index
    %533 = vector.load %arg1[%c33_290, %c0_291, %c0_292] : memref<36x33x8xf32, #tpu.memory_space<vmem>>, vector<1x32x8xf32>
    %534 = vector.shape_cast %533 : vector<1x32x8xf32> to vector<32x8xf32>
    %c33_293 = arith.constant 33 : index
    %c32_294 = arith.constant 32 : index
    %c0_295 = arith.constant 0 : index
    %535 = vector.load %arg1[%c33_293, %c32_294, %c0_295] : memref<36x33x8xf32, #tpu.memory_space<vmem>>, vector<1x1x8xf32>
    %536 = vector.shape_cast %535 : vector<1x1x8xf32> to vector<1x8xf32>
    %c34 = arith.constant 34 : index
    %c0_296 = arith.constant 0 : index
    %c0_297 = arith.constant 0 : index
    %537 = vector.load %arg1[%c34, %c0_296, %c0_297] : memref<36x33x8xf32, #tpu.memory_space<vmem>>, vector<1x32x8xf32>
    %538 = vector.shape_cast %537 : vector<1x32x8xf32> to vector<32x8xf32>
    %c34_298 = arith.constant 34 : index
    %c32_299 = arith.constant 32 : index
    %c0_300 = arith.constant 0 : index
    %539 = vector.load %arg1[%c34_298, %c32_299, %c0_300] : memref<36x33x8xf32, #tpu.memory_space<vmem>>, vector<1x1x8xf32>
    %540 = vector.shape_cast %539 : vector<1x1x8xf32> to vector<1x8xf32>
    %c35 = arith.constant 35 : index
    %c0_301 = arith.constant 0 : index
    %c0_302 = arith.constant 0 : index
    %541 = vector.load %arg1[%c35, %c0_301, %c0_302] : memref<36x33x8xf32, #tpu.memory_space<vmem>>, vector<1x32x8xf32>
    %542 = vector.shape_cast %541 : vector<1x32x8xf32> to vector<32x8xf32>
    %c35_303 = arith.constant 35 : index
    %c32_304 = arith.constant 32 : index
    %c0_305 = arith.constant 0 : index
    %543 = vector.load %arg1[%c35_303, %c32_304, %c0_305] : memref<36x33x8xf32, #tpu.memory_space<vmem>>, vector<1x1x8xf32>
    %544 = vector.shape_cast %543 : vector<1x1x8xf32> to vector<1x8xf32>
    %cst_306 = arith.constant dense<0.000000e+00> : vector<16x8xf32>
    %545 = tpu.matmul %403, %534, %cst_306 {dimension_numbers = #tpu.dot_dimension_numbers<[1], [0], [0], [1], [0, 0, 1, 1], [], []>} : vector<16x32xf32>, vector<32x8xf32>, vector<16x8xf32> -> vector<16x8xf32>
    %546 = vector.broadcast %536 : vector<1x8xf32> to vector<16x8xf32>
    %547 = arith.addf %545, %546 : vector<16x8xf32>
    %cst_307 = arith.constant dense<0.000000e+00> : vector<16x8xf32>
    %548 = tpu.matmul %403, %538, %cst_307 {dimension_numbers = #tpu.dot_dimension_numbers<[1], [0], [0], [1], [0, 0, 1, 1], [], []>} : vector<16x32xf32>, vector<32x8xf32>, vector<16x8xf32> -> vector<16x8xf32>
    %549 = vector.broadcast %540 : vector<1x8xf32> to vector<16x8xf32>
    %550 = arith.addf %548, %549 : vector<16x8xf32>
    %cst_308 = arith.constant dense<0.000000e+00> : vector<16x8xf32>
    %551 = tpu.matmul %403, %542, %cst_308 {dimension_numbers = #tpu.dot_dimension_numbers<[1], [0], [0], [1], [0, 0, 1, 1], [], []>} : vector<16x32xf32>, vector<32x8xf32>, vector<16x8xf32> -> vector<16x8xf32>
    %552 = vector.broadcast %544 : vector<1x8xf32> to vector<16x8xf32>
    %553 = arith.addf %551, %552 : vector<16x8xf32>
    %554 = vector.shape_cast %547 : vector<16x8xf32> to vector<2x8x8xf32>
    %555 = vector.shape_cast %550 : vector<16x8xf32> to vector<2x8x8xf32>
    %556 = vector.shape_cast %553 : vector<16x8xf32> to vector<2x8x8xf32>
    "tpu.trace_start"() <{level = 10 : i32, message = "bqd,bkd->bqk"}> : () -> ()
    %cst_309 = arith.constant dense<0.000000e+00> : vector<2x8x8xf32>
    %557 = tpu.matmul %554, %555, %cst_309 {dimension_numbers = #tpu.dot_dimension_numbers<[2], [2], [1], [1], [0, 0, 0, 1, 1, 1], [0], [0]>} : vector<2x8x8xf32>, vector<2x8x8xf32>, vector<2x8x8xf32> -> vector<2x8x8xf32>
    "tpu.trace_stop"() : () -> ()
    %cst_310 = arith.constant dense<0xFF800000> : vector<2x8xf32>
    %558 = vector.multi_reduction <maximumf>, %557, %cst_310 [2] : vector<2x8x8xf32> to vector<2x8xf32>
    %559 = vector.shape_cast %558 : vector<2x8xf32> to vector<2x8x1xf32>
    %560 = vector.broadcast %559 : vector<2x8x1xf32> to vector<2x8x8xf32>
    %561 = arith.subf %557, %560 : vector<2x8x8xf32>
    %562 = math.exp %561 : vector<2x8x8xf32>
    %cst_311 = arith.constant dense<0.000000e+00> : vector<2x8xf32>
    %563 = vector.multi_reduction <add>, %562, %cst_311 [2] : vector<2x8x8xf32> to vector<2x8xf32>
    %564 = vector.shape_cast %563 : vector<2x8xf32> to vector<2x8x1xf32>
    %565 = tpu.reciprocal %564 {approx = true} : vector<2x8x1xf32> -> vector<2x8x1xf32>
    %566 = vector.broadcast %565 : vector<2x8x1xf32> to vector<2x8x8xf32>
    %567 = arith.mulf %562, %566 : vector<2x8x8xf32>
    %568 = arith.addf %527, %567 : vector<2x8x8xf32>
    "tpu.trace_start"() <{level = 10 : i32, message = "bqk,bkd->bqd"}> : () -> ()
    %cst_312 = arith.constant dense<0.000000e+00> : vector<2x8x8xf32>
    %569 = tpu.matmul %567, %556, %cst_312 {dimension_numbers = #tpu.dot_dimension_numbers<[2], [1], [1], [2], [0, 0, 0, 1, 1, 2], [0], [0]>} : vector<2x8x8xf32>, vector<2x8x8xf32>, vector<2x8x8xf32> -> vector<2x8x8xf32>
    "tpu.trace_stop"() : () -> ()
    %570 = vector.shape_cast %569 : vector<2x8x8xf32> to vector<16x8xf32>
    %571 = vector.extract_strided_slice %404 {offsets = [24, 0], sizes = [8, 32], strides = [1, 1]} : vector<32x32xf32> to vector<8x32xf32>
    %cst_313 = arith.constant dense<0.000000e+00> : vector<16x32xf32>
    %572 = tpu.matmul %570, %571, %cst_313 {dimension_numbers = #tpu.dot_dimension_numbers<[1], [0], [0], [1], [0, 0, 1, 1], [], []>} : vector<16x8xf32>, vector<8x32xf32>, vector<16x32xf32> -> vector<16x32xf32>
    %573 = arith.addf %532, %572 : vector<16x32xf32>
    %cst_314 = arith.constant 2.500000e-01 : f32
    %574 = vector.broadcast %cst_314 : f32 to vector<2x8x8xf32>
    %575 = arith.mulf %568, %574 : vector<2x8x8xf32>
    %576 = arith.addf %403, %573 : vector<16x32xf32>
    %cst_315 = arith.constant dense<0.000000e+00> : vector<16xf32>
    %577 = vector.multi_reduction <add>, %576, %cst_315 [1] : vector<16x32xf32> to vector<16xf32>
    %578 = vector.shape_cast %577 : vector<16xf32> to vector<16x1xf32>
    %cst_316 = arith.constant 3.200000e+01 : f32
    %579 = vector.broadcast %cst_316 : f32 to vector<16x1xf32>
    %580 = arith.divf %578, %579 : vector<16x1xf32>
    %581 = vector.broadcast %580 : vector<16x1xf32> to vector<16x32xf32>
    %582 = arith.subf %576, %581 : vector<16x32xf32>
    %583 = arith.mulf %582, %582 : vector<16x32xf32>
    %cst_317 = arith.constant dense<0.000000e+00> : vector<16xf32>
    %584 = vector.multi_reduction <add>, %583, %cst_317 [1] : vector<16x32xf32> to vector<16xf32>
    %585 = vector.shape_cast %584 : vector<16xf32> to vector<16x1xf32>
    %cst_318 = arith.constant 3.200000e+01 : f32
    %586 = vector.broadcast %cst_318 : f32 to vector<16x1xf32>
    %587 = arith.divf %585, %586 : vector<16x1xf32>
    %588 = vector.broadcast %580 : vector<16x1xf32> to vector<16x32xf32>
    %589 = arith.subf %576, %588 : vector<16x32xf32>
    %cst_319 = arith.constant 9.99999974E-6 : f32
    %590 = vector.broadcast %cst_319 : f32 to vector<16x1xf32>
    %591 = arith.addf %587, %590 : vector<16x1xf32>
    %592 = math.rsqrt %591 : vector<16x1xf32>
    %593 = vector.broadcast %592 : vector<16x1xf32> to vector<16x32xf32>
    %594 = arith.mulf %589, %593 : vector<16x32xf32>
    %595 = vector.broadcast %406 : vector<1x32xf32> to vector<16x32xf32>
    %596 = arith.mulf %594, %595 : vector<16x32xf32>
    %597 = vector.broadcast %407 : vector<1x32xf32> to vector<16x32xf32>
    %598 = arith.addf %596, %597 : vector<16x32xf32>
    %599 = vector.shape_cast %598 : vector<16x32xf32> to vector<2x8x32xf32>
    %c416 = arith.constant 416 : index
    %c0_320 = arith.constant 0 : index
    %600 = vector.load %arg2[%c416, %c0_320] : memref<536x64xf32, #tpu.memory_space<vmem>>, vector<1x64xf32>
    %c160 = arith.constant 160 : index
    %c0_321 = arith.constant 0 : index
    %601 = vector.load %arg2[%c160, %c0_321] : memref<536x64xf32, #tpu.memory_space<vmem>>, vector<32x64xf32>
    %602 = vector.extract_strided_slice %599 {offsets = [0, 0, 0], sizes = [2, 1, 32], strides = [1, 1, 1]} : vector<2x8x32xf32> to vector<2x1x32xf32>
    %603 = vector.shape_cast %602 : vector<2x1x32xf32> to vector<2x32xf32>
    %cst_322 = arith.constant dense<0.000000e+00> : vector<2x64xf32>
    %604 = tpu.matmul %603, %601, %cst_322 {dimension_numbers = #tpu.dot_dimension_numbers<[1], [0], [0], [1], [0, 0, 1, 1], [], []>} : vector<2x32xf32>, vector<32x64xf32>, vector<2x64xf32> -> vector<2x64xf32>
    %605 = vector.broadcast %600 : vector<1x64xf32> to vector<2x64xf32>
    %606 = arith.addf %605, %604 : vector<2x64xf32>
    %c192 = arith.constant 192 : index
    %c0_323 = arith.constant 0 : index
    %607 = vector.load %arg2[%c192, %c0_323] : memref<536x64xf32, #tpu.memory_space<vmem>>, vector<32x64xf32>
    %608 = vector.extract_strided_slice %599 {offsets = [0, 1, 0], sizes = [2, 1, 32], strides = [1, 1, 1]} : vector<2x8x32xf32> to vector<2x1x32xf32>
    %609 = vector.shape_cast %608 : vector<2x1x32xf32> to vector<2x32xf32>
    %cst_324 = arith.constant dense<0.000000e+00> : vector<2x64xf32>
    %610 = tpu.matmul %609, %607, %cst_324 {dimension_numbers = #tpu.dot_dimension_numbers<[1], [0], [0], [1], [0, 0, 1, 1], [], []>} : vector<2x32xf32>, vector<32x64xf32>, vector<2x64xf32> -> vector<2x64xf32>
    %611 = arith.addf %606, %610 : vector<2x64xf32>
    %c224 = arith.constant 224 : index
    %c0_325 = arith.constant 0 : index
    %612 = vector.load %arg2[%c224, %c0_325] : memref<536x64xf32, #tpu.memory_space<vmem>>, vector<32x64xf32>
    %613 = vector.extract_strided_slice %599 {offsets = [0, 2, 0], sizes = [2, 1, 32], strides = [1, 1, 1]} : vector<2x8x32xf32> to vector<2x1x32xf32>
    %614 = vector.shape_cast %613 : vector<2x1x32xf32> to vector<2x32xf32>
    %cst_326 = arith.constant dense<0.000000e+00> : vector<2x64xf32>
    %615 = tpu.matmul %614, %612, %cst_326 {dimension_numbers = #tpu.dot_dimension_numbers<[1], [0], [0], [1], [0, 0, 1, 1], [], []>} : vector<2x32xf32>, vector<32x64xf32>, vector<2x64xf32> -> vector<2x64xf32>
    %616 = arith.addf %611, %615 : vector<2x64xf32>
    %c256 = arith.constant 256 : index
    %c0_327 = arith.constant 0 : index
    %617 = vector.load %arg2[%c256, %c0_327] : memref<536x64xf32, #tpu.memory_space<vmem>>, vector<32x64xf32>
    %618 = vector.extract_strided_slice %599 {offsets = [0, 3, 0], sizes = [2, 1, 32], strides = [1, 1, 1]} : vector<2x8x32xf32> to vector<2x1x32xf32>
    %619 = vector.shape_cast %618 : vector<2x1x32xf32> to vector<2x32xf32>
    %cst_328 = arith.constant dense<0.000000e+00> : vector<2x64xf32>
    %620 = tpu.matmul %619, %617, %cst_328 {dimension_numbers = #tpu.dot_dimension_numbers<[1], [0], [0], [1], [0, 0, 1, 1], [], []>} : vector<2x32xf32>, vector<32x64xf32>, vector<2x64xf32> -> vector<2x64xf32>
    %621 = arith.addf %616, %620 : vector<2x64xf32>
    %c288 = arith.constant 288 : index
    %c0_329 = arith.constant 0 : index
    %622 = vector.load %arg2[%c288, %c0_329] : memref<536x64xf32, #tpu.memory_space<vmem>>, vector<32x64xf32>
    %623 = vector.extract_strided_slice %599 {offsets = [0, 4, 0], sizes = [2, 1, 32], strides = [1, 1, 1]} : vector<2x8x32xf32> to vector<2x1x32xf32>
    %624 = vector.shape_cast %623 : vector<2x1x32xf32> to vector<2x32xf32>
    %cst_330 = arith.constant dense<0.000000e+00> : vector<2x64xf32>
    %625 = tpu.matmul %624, %622, %cst_330 {dimension_numbers = #tpu.dot_dimension_numbers<[1], [0], [0], [1], [0, 0, 1, 1], [], []>} : vector<2x32xf32>, vector<32x64xf32>, vector<2x64xf32> -> vector<2x64xf32>
    %626 = arith.addf %621, %625 : vector<2x64xf32>
    %c320 = arith.constant 320 : index
    %c0_331 = arith.constant 0 : index
    %627 = vector.load %arg2[%c320, %c0_331] : memref<536x64xf32, #tpu.memory_space<vmem>>, vector<32x64xf32>
    %628 = vector.extract_strided_slice %599 {offsets = [0, 5, 0], sizes = [2, 1, 32], strides = [1, 1, 1]} : vector<2x8x32xf32> to vector<2x1x32xf32>
    %629 = vector.shape_cast %628 : vector<2x1x32xf32> to vector<2x32xf32>
    %cst_332 = arith.constant dense<0.000000e+00> : vector<2x64xf32>
    %630 = tpu.matmul %629, %627, %cst_332 {dimension_numbers = #tpu.dot_dimension_numbers<[1], [0], [0], [1], [0, 0, 1, 1], [], []>} : vector<2x32xf32>, vector<32x64xf32>, vector<2x64xf32> -> vector<2x64xf32>
    %631 = arith.addf %626, %630 : vector<2x64xf32>
    %c352 = arith.constant 352 : index
    %c0_333 = arith.constant 0 : index
    %632 = vector.load %arg2[%c352, %c0_333] : memref<536x64xf32, #tpu.memory_space<vmem>>, vector<32x64xf32>
    %633 = vector.extract_strided_slice %599 {offsets = [0, 6, 0], sizes = [2, 1, 32], strides = [1, 1, 1]} : vector<2x8x32xf32> to vector<2x1x32xf32>
    %634 = vector.shape_cast %633 : vector<2x1x32xf32> to vector<2x32xf32>
    %cst_334 = arith.constant dense<0.000000e+00> : vector<2x64xf32>
    %635 = tpu.matmul %634, %632, %cst_334 {dimension_numbers = #tpu.dot_dimension_numbers<[1], [0], [0], [1], [0, 0, 1, 1], [], []>} : vector<2x32xf32>, vector<32x64xf32>, vector<2x64xf32> -> vector<2x64xf32>
    %636 = arith.addf %631, %635 : vector<2x64xf32>
    %c384 = arith.constant 384 : index
    %c0_335 = arith.constant 0 : index
    %637 = vector.load %arg2[%c384, %c0_335] : memref<536x64xf32, #tpu.memory_space<vmem>>, vector<32x64xf32>
    %638 = vector.extract_strided_slice %599 {offsets = [0, 7, 0], sizes = [2, 1, 32], strides = [1, 1, 1]} : vector<2x8x32xf32> to vector<2x1x32xf32>
    %639 = vector.shape_cast %638 : vector<2x1x32xf32> to vector<2x32xf32>
    %cst_336 = arith.constant dense<0.000000e+00> : vector<2x64xf32>
    %640 = tpu.matmul %639, %637, %cst_336 {dimension_numbers = #tpu.dot_dimension_numbers<[1], [0], [0], [1], [0, 0, 1, 1], [], []>} : vector<2x32xf32>, vector<32x64xf32>, vector<2x64xf32> -> vector<2x64xf32>
    %641 = arith.addf %636, %640 : vector<2x64xf32>
    %cst_337 = arith.constant 0.000000e+00 : f32
    %642 = vector.broadcast %cst_337 : f32 to vector<2x64xf32>
    %643 = arith.maximumf %641, %642 : vector<2x64xf32>
    %c424 = arith.constant 424 : index
    %c0_338 = arith.constant 0 : index
    %644 = vector.load %arg2[%c424, %c0_338] : memref<536x64xf32, #tpu.memory_space<vmem>>, vector<64x32xf32>
    %cst_339 = arith.constant dense<0.000000e+00> : vector<2x32xf32>
    %645 = tpu.matmul %643, %644, %cst_339 {dimension_numbers = #tpu.dot_dimension_numbers<[1], [0], [0], [1], [0, 0, 1, 1], [], []>} : vector<2x64xf32>, vector<64x32xf32>, vector<2x32xf32> -> vector<2x32xf32>
    %c488 = arith.constant 488 : index
    %c0_340 = arith.constant 0 : index
    %646 = vector.load %arg2[%c488, %c0_340] : memref<536x64xf32, #tpu.memory_space<vmem>>, vector<1x32xf32>
    %647 = vector.broadcast %646 : vector<1x32xf32> to vector<2x32xf32>
    %648 = arith.addf %645, %647 : vector<2x32xf32>
    %cst_341 = arith.constant 0.000000e+00 : f32
    %649 = vector.broadcast %cst_341 : f32 to vector<2x32xf32>
    %650 = arith.maximumf %648, %649 : vector<2x32xf32>
    %c496 = arith.constant 496 : index
    %c0_342 = arith.constant 0 : index
    %651 = vector.load %arg2[%c496, %c0_342] : memref<536x64xf32, #tpu.memory_space<vmem>>, vector<32x1xf32>
    %cst_343 = arith.constant dense<0.000000e+00> : vector<2x1xf32>
    %652 = tpu.matmul %650, %651, %cst_343 {dimension_numbers = #tpu.dot_dimension_numbers<[1], [0], [0], [1], [0, 0, 1, 1], [], []>} : vector<2x32xf32>, vector<32x1xf32>, vector<2x1xf32> -> vector<2x1xf32>
    %c528 = arith.constant 528 : index
    %c0_344 = arith.constant 0 : index
    %653 = vector.load %arg2[%c528, %c0_344] : memref<536x64xf32, #tpu.memory_space<vmem>>, vector<1x1xf32>
    %654 = vector.broadcast %653 : vector<1x1xf32> to vector<2x1xf32>
    %655 = arith.addf %652, %654 : vector<2x1xf32>
    %cst_345 = arith.constant 0.000000e+00 : f32
    %656 = vector.broadcast %cst_345 : f32 to vector<2x1xf32>
    %657 = arith.maximumf %655, %656 : vector<2x1xf32>
    %658 = math.absf %655 : vector<2x1xf32>
    %cst_346 = arith.constant 0.000000e+00 : f32
    %659 = vector.broadcast %cst_346 : f32 to vector<2x1xf32>
    %660 = arith.subf %659, %658 : vector<2x1xf32>
    %661 = math.exp %660 : vector<2x1xf32>
    %cst_347 = arith.constant 1.000000e+00 : f32
    %662 = vector.broadcast %cst_347 : f32 to vector<2x1xf32>
    %663 = arith.addf %662, %661 : vector<2x1xf32>
    %664 = math.log %663 : vector<2x1xf32>
    %665 = arith.addf %657, %664 : vector<2x1xf32>
    %c0_348 = arith.constant 0 : index
    %c0_349 = arith.constant 0 : index
    %666 = vector.load %arg3[%c0_348, %c0_349] : memref<2x1xf32, #tpu.memory_space<vmem>>, vector<2x1xf32>
    tpu.vector_store %arg3[%c0_348, %c0_349], %665 {strides = array<i32>} : memref<2x1xf32, #tpu.memory_space<vmem>>, vector<2x1xf32>,
    %667 = vector.shape_cast %185 : vector<2x8x8xf32> to vector<1x2x8x8xf32>
    %668 = vector.shape_cast %380 : vector<2x8x8xf32> to vector<1x2x8x8xf32>
    %669 = vector.shape_cast %575 : vector<2x8x8xf32> to vector<1x2x8x8xf32>
    %670 = tpu.concatenate %667, %668, %669 in 0 : vector<1x2x8x8xf32>, vector<1x2x8x8xf32>, vector<1x2x8x8xf32> -> vector<3x2x8x8xf32>
    %c0_350 = arith.constant 0 : index
    %c0_351 = arith.constant 0 : index
    %c0_352 = arith.constant 0 : index
    %c0_353 = arith.constant 0 : index
    %671 = vector.load %arg4[%c0_350, %c0_351, %c0_352, %c0_353] : memref<3x2x8x8xf32, #tpu.memory_space<vmem>>, vector<3x2x8x8xf32>
    tpu.vector_store %arg4[%c0_350, %c0_351, %c0_352, %c0_353], %670 {strides = array<i32>} : memref<3x2x8x8xf32, #tpu.memory_space<vmem>>, vector<3x2x8x8xf32>,
    return
  }
}

</mosaic_0001>

<llo_original>
// kernel: tpu_custom_call.1
$region0: #{tpu_custom_call.1}
  #allocation0 [shape = 'u32[]', space=smem, size = 0x4, offset = 0x4, fixed_abs, tag = 'smem constant byte address 0x4 - core index']
  #allocation1 [shape = 'u32[72,128]{1,0:T(1,128)}', space=vmem, size = 0x9000, scoped, tag = 'internal scratch']
  %s0 = inlined_call_operand.vmem [shape: f32[16,1], index: 0, kind: input, shape index: {}]
  %s1 = inlined_call_operand.vmem [shape: f32[36,33,8], index: 1, kind: input, shape index: {}]
  %s2 = inlined_call_operand.vmem [shape: f32[536,64], index: 2, kind: input, shape index: {}]
  %s3 = inlined_call_operand.vmem [shape: f32[2,1], index: 3, kind: output, shape index: {0}]
  %s4 = inlined_call_operand.hbm [shape: f32[3,2,8,8], index: 4, kind: output, shape index: {1}]
  %5 = xla_tuple %s3, %s4
  %s6 = sld [smem:[#allocation0]]
  $region30: #{tpu_custom_call.1} parent=0
    _
  %s8 = ssub.s32 1, %s6
  %s9 = scalar_select 0, %s8, %s6
  $region1: #{tpu_custom_call.1} parent=0
    #allocation2 [shape = 'u8[24576]{0}', space=vmem, size = 0x6000, scoped, tag = 'output window, operand 1, single buffered']
    #allocation3 [shape = 's32[1]{0}', space=sflag, size = 0x4, scoped, tag = 'scoped memory for tpu_custom_call.1']
    %10 = vsyncpa [#allocation3], 0
    // Predicated region
    $region2: #{tpu_custom_call.1} parent=1 // pred_check
      _
    $region3: #{tpu_custom_call.1} parent=1 // pred_check_branch
      %12 = sbr.rel (0) target = $region5
    $region4: #{tpu_custom_call.1} parent=1 // pred_region
      _
    $region5: #{tpu_custom_call.1} parent=1 // pred_fallthru
      _
    // Predicated region
    $region6: #{tpu_custom_call.1} parent=1 // pred_check
      _
    $region7: #{tpu_custom_call.1} parent=1 // pred_check_branch
      %14 = sbr.rel (0) target = $region9
    $region8: #{tpu_custom_call.1} parent=1 // pred_region
      _
    $region9: #{tpu_custom_call.1} parent=1 // pred_fallthru
      _
    // Predicated region
    $region10: #{tpu_custom_call.1} parent=1 // pred_check
      _
    $region11: #{tpu_custom_call.1} parent=1 // pred_check_branch
      %16 = sbr.rel (0) target = $region13
    $region12: #{tpu_custom_call.1} parent=1 // pred_region
      _
    $region13: #{tpu_custom_call.1} parent=1 // pred_fallthru
      _
    %v17 = vld [vmem:[%s0] sm:$0xff]
    %v18 = vld [vmem:[%s0 + $0x8] sm:$0xff]
    %v19 = vld [vmem:[%s2 + $0x20] sm:$0x1]
    %v20 = vld [vmem:[%s2 + $0x21] sm:$0x1]
    %22 = vset.pattern.permute.xlu0 0
    %23 = vperm.xlu0 %22, %v17
    %v24 = vpop.permute.xlu0 %23
    %27 = vset.pattern.permute.xlu0 0
    %28 = vperm.xlu0 %27, %v18
    %v29 = vpop.permute.xlu0 %28
    %v31 = vperm.slane %v19, 0
    %v32 = vmul.f32 %v24, %v31
    %v33 = vmul.f32 %v29, %v31
    %v34 = vperm.slane %v20, 0
    %v35 = vadd.f32 %v32, %v34
    %v36 = vadd.f32 %v33, %v34
    %v37 = vmax.f32 %v35, 0.0
    %v38 = vmax.f32 %v36, 0.0
    %v39 = vld [vmem:[%s2] sm:$0xff]
    %v40 = vld [vmem:[%s2 + $0x8] sm:$0xff]
    %v41 = vld [vmem:[%s2 + $0x10] sm:$0xff]
    %v42 = vld [vmem:[%s2 + $0x18] sm:$0xff]
    %vm43 = vcmask 130048
    %v45 = vsel %vm43, %v37, 0
    %v48 = vsel %vm43, %v38, 0
    %50 = vmatpush.msra.mxu0 0.0
    %51 = vmatpush.msra.mxu0 0.0
    %52 = vmatpush.msra.mxu0 0.0
    %53 = vmatpush.msra.mxu0 0.0
    %54 = vmatpush.msra.mxu0 0.0
    %55 = vmatpush.msra.mxu0 0.0
    %56 = vmatpush.msra.mxu0 0.0
    %57 = vmatpush.msra.mxu0 0.0
    %58 = vmatpush.msra.mxu0 0.0
    %59 = vmatpush.msra.mxu0 0.0
    %60 = vmatpush.msra.mxu0 0.0
    %61 = vmatpush.msra.mxu0 0.0
    %62 = vmatpush.msra.mxu0 0.0
    %63 = vmatpush.msra.mxu0 0.0
    %64 = vmatpush.msra.mxu0 %v40
    %65 = vmatpush.msra.mxu0 %v39
    %66 = vmatmul.f32.gmra.mxu0 %v45
    %v67 = vpop.f32.mrf.mxu0
    %v68 = vadd.f32 %v41, %v67
    %69 = vmatmul.f32.gmra.mxu0 %v48
    %v70 = vpop.f32.mrf.mxu0
    %v71 = vadd.f32 %v42, %v70
    %72 = vdwg.mxu0
    %v73 = vld [vmem:[%s2 + $0x28] sm:$0xff]
    %v74 = vld [vmem:[%s2 + $0x30] sm:$0xff]
    %v75 = vld [vmem:[%s2 + $0x38] sm:$0xff]
    %v76 = vld [vmem:[%s2 + $0x40] sm:$0xff]
    %v77 = vld [vmem:[%s2 + $0x48] sm:$0x1]
    %v78 = vld [vmem:[%s2 + $0x49] sm:$0x1]
    %v79 = vld [vmem:[%s2 + $0x4a] sm:$0x1]
    %v80 = vld [vmem:[%s1] sm:$0xff]
    %v81 = vld [vmem:[%s1 + $0x8] sm:$0xff]
    %v82 = vld [vmem:[%s1 + $0x10] sm:$0xff]
    %v83 = vld [vmem:[%s1 + $0x18] sm:$0xff]
    %v84 = vld [vmem:[%s1 + $0x20] sm:$0x1]
    %s85 = scalar_lea.vmem %s1, 40
    %v86 = vld [vmem:[%s85] sm:$0xff]
    %v87 = vld [vmem:[%s85 + $0x8] sm:$0xff]
    %v88 = vld [vmem:[%s85 + $0x10] sm:$0xff]
    %v89 = vld [vmem:[%s85 + $0x18] sm:$0xff]
    %v90 = vld [vmem:[%s85 + $0x20] sm:$0x1]
    %s91 = scalar_lea.vmem %s1, 80
    %v92 = vld [vmem:[%s91] sm:$0xff]
    %v93 = vld [vmem:[%s91 + $0x8] sm:$0xff]
    %v94 = vld [vmem:[%s91 + $0x10] sm:$0xff]
    %v95 = vld [vmem:[%s91 + $0x18] sm:$0xff]
    %v96 = vld [vmem:[%s91 + $0x20] sm:$0x1]
    %v97 = vperm.slane %v84, 0
    %vm98 = vcmask 261120
    %v100 = vsel %vm98, %v68, 0
    %v103 = vsel %vm98, %v71, 0
    %105 = vmatpush.msra.mxu0 0.0
    %106 = vmatpush.msra.mxu0 0.0
    %107 = vmatpush.msra.mxu0 0.0
    %108 = vmatpush.msra.mxu0 0.0
    %109 = vmatpush.msra.mxu0 0.0
    %110 = vmatpush.msra.mxu0 0.0
    %111 = vmatpush.msra.mxu0 0.0
    %112 = vmatpush.msra.mxu0 0.0
    %113 = vmatpush.msra.mxu0 0.0
    %114 = vmatpush.msra.mxu0 0.0
    %115 = vmatpush.msra.mxu0 0.0
    %116 = vmatpush.msra.mxu0 0.0
    %117 = vmatpush.msra.mxu0 %v83
    %118 = vmatpush.msra.mxu0 %v82
    %119 = vmatpush.msra.mxu0 %v81
    %120 = vmatpush.msra.mxu0 %v80
    %121 = vmatmul.f32.gmra.mxu0 %v100
    %v122 = vpop.f32.mrf.mxu0
    %v123 = vadd.f32 %v97, %v122
    %124 = vmatmul.f32.gmra.mxu0 %v103
    %v125 = vpop.f32.mrf.mxu0
    %v126 = vadd.f32 %v97, %v125
    %127 = vdwg.mxu0
    %v128 = vperm.slane %v90, 0
    %129 = vmatpush.msra.mxu0 0.0
    %130 = vmatpush.msra.mxu0 0.0
    %131 = vmatpush.msra.mxu0 0.0
    %132 = vmatpush.msra.mxu0 0.0
    %133 = vmatpush.msra.mxu0 0.0
    %134 = vmatpush.msra.mxu0 0.0
    %135 = vmatpush.msra.mxu0 0.0
    %136 = vmatpush.msra.mxu0 0.0
    %137 = vmatpush.msra.mxu0 0.0
    %138 = vmatpush.msra.mxu0 0.0
    %139 = vmatpush.msra.mxu0 0.0
    %140 = vmatpush.msra.mxu0 0.0
    %141 = vmatpush.msra.mxu0 %v89
    %142 = vmatpush.msra.mxu0 %v88
    %143 = vmatpush.msra.mxu0 %v87
    %144 = vmatpush.msra.mxu0 %v86
    %145 = vmatmul.f32.gmra.mxu0 %v100
    %v146 = vpop.f32.mrf.mxu0
    %v147 = vadd.f32 %v128, %v146
    %148 = vmatmul.f32.gmra.mxu0 %v103
    %v149 = vpop.f32.mrf.mxu0
    %v150 = vadd.f32 %v128, %v149
    %151 = vdwg.mxu0
    %v152 = vperm.slane %v96, 0
    %153 = vmatpush.msra.mxu0 0.0
    %154 = vmatpush.msra.mxu0 0.0
    %155 = vmatpush.msra.mxu0 0.0
    %156 = vmatpush.msra.mxu0 0.0
    %157 = vmatpush.msra.mxu0 0.0
    %158 = vmatpush.msra.mxu0 0.0
    %159 = vmatpush.msra.mxu0 0.0
    %160 = vmatpush.msra.mxu0 0.0
    %161 = vmatpush.msra.mxu0 0.0
    %162 = vmatpush.msra.mxu0 0.0
    %163 = vmatpush.msra.mxu0 0.0
    %164 = vmatpush.msra.mxu0 0.0
    %165 = vmatpush.msra.mxu0 %v95
    %166 = vmatpush.msra.mxu0 %v94
    %167 = vmatpush.msra.mxu0 %v93
    %168 = vmatpush.msra.mxu0 %v92
    %169 = vmatmul.f32.gmra.mxu0 %v100
    %v170 = vpop.f32.mrf.mxu0
    %v171 = vadd.f32 %v152, %v170
    %172 = vmatmul.f32.gmra.mxu0 %v103
    %v173 = vpop.f32.mrf.mxu0
    %v174 = vadd.f32 %v152, %v173
    %175 = vdwg.mxu0
    %vm176 = vcmask 64512
    %v178 = vsel %vm176, %v123, 0
    %v181 = vsel %vm176, %v147, 0
    %183 = vmatpush.xpose.msra.mxu0 0.0
    %184 = vmatpush.xpose.msra.mxu0 0.0
    %185 = vmatpush.xpose.msra.mxu0 0.0
    %186 = vmatpush.xpose.msra.mxu0 0.0
    %187 = vmatpush.xpose.msra.mxu0 0.0
    %188 = vmatpush.xpose.msra.mxu0 0.0
    %189 = vmatpush.xpose.msra.mxu0 0.0
    %190 = vmatpush.xpose.msra.mxu0 0.0
    %191 = vmatpush.xpose.msra.mxu0 0.0
    %192 = vmatpush.xpose.msra.mxu0 0.0
    %193 = vmatpush.xpose.msra.mxu0 0.0
    %194 = vmatpush.xpose.msra.mxu0 0.0
    %195 = vmatpush.xpose.msra.mxu0 0.0
    %196 = vmatpush.xpose.msra.mxu0 0.0
    %197 = vmatpush.xpose.msra.mxu0 0.0
    %198 = vmatpush.xpose.msra.mxu0 %v181
    %199 = vmatmul.f32.gmra.mxu0 %v178
    %v200 = vpop.f32.mrf.mxu0
    %v201 = vadd.f32 0.0, %v200
    %202 = vdwg.mxu0
    %v204 = vsel %vm176, %v126, 0
    %v207 = vsel %vm176, %v150, 0
    %209 = vmatpush.xpose.msra.mxu0 0.0
    %210 = vmatpush.xpose.msra.mxu0 0.0
    %211 = vmatpush.xpose.msra.mxu0 0.0
    %212 = vmatpush.xpose.msra.mxu0 0.0
    %213 = vmatpush.xpose.msra.mxu0 0.0
    %214 = vmatpush.xpose.msra.mxu0 0.0
    %215 = vmatpush.xpose.msra.mxu0 0.0
    %216 = vmatpush.xpose.msra.mxu0 0.0
    %217 = vmatpush.xpose.msra.mxu0 0.0
    %218 = vmatpush.xpose.msra.mxu0 0.0
    %219 = vmatpush.xpose.msra.mxu0 0.0
    %220 = vmatpush.xpose.msra.mxu0 0.0
    %221 = vmatpush.xpose.msra.mxu0 0.0
    %222 = vmatpush.xpose.msra.mxu0 0.0
    %223 = vmatpush.xpose.msra.mxu0 0.0
    %224 = vmatpush.xpose.msra.mxu0 %v207
    %225 = vmatmul.f32.gmra.mxu0 %v204
    %v226 = vpop.f32.mrf.mxu0
    %v227 = vadd.f32 0.0, %v226
    %228 = vdwg.mxu0
    %v229 = vsel %vm176, %v201, -inf
    %230 = vmax.xlane.f32.xlu0 %v229
    %v231 = vpop.xlane.xlu0 %230
    %v232 = vsel %vm176, %v227, -inf
    %233 = vmax.xlane.f32.xlu0 %v232
    %v234 = vpop.xlane.xlu0 %233
    %v235 = vsub.f32 %v201, %v231
    %v236 = vsub.f32 %v227, %v234
    %v237 = vmul.f32 %v235, 1.442695
    %v238 = vpow.pop %v237
    %v239 = vmul.f32 %v236, 1.442695
    %v240 = vpow.pop %v239
    %v241 = vsel %vm176, %v238, 0.0
    %242 = vadd.xlane.f32.xlu0 %v241
    %v243 = vpop.xlane.xlu0 %242
    %v244 = vsel %vm176, %v240, 0.0
    %245 = vadd.xlane.f32.xlu0 %v244
    %v246 = vpop.xlane.xlu0 %245
    %v247 = vrcp.pop %v243
    %v248 = vrcp.pop %v246
    %v249 = vmul.f32 %v238, %v247
    %v250 = vmul.f32 %v240, %v248
    %v251 = vadd.f32 %v249, 0.0
    %v252 = vadd.f32 %v250, 0.0
    %v254 = vsel %vm176, %v249, 0
    %256 = vmatpush.msra.mxu0 0.0
    %257 = vmatpush.msra.mxu0 0.0
    %258 = vmatpush.msra.mxu0 0.0
    %259 = vmatpush.msra.mxu0 0.0
    %260 = vmatpush.msra.mxu0 0.0
    %261 = vmatpush.msra.mxu0 0.0
    %262 = vmatpush.msra.mxu0 0.0
    %263 = vmatpush.msra.mxu0 0.0
    %264 = vmatpush.msra.mxu0 0.0
    %265 = vmatpush.msra.mxu0 0.0
    %266 = vmatpush.msra.mxu0 0.0
    %267 = vmatpush.msra.mxu0 0.0
    %268 = vmatpush.msra.mxu0 0.0
    %269 = vmatpush.msra.mxu0 0.0
    %270 = vmatpush.msra.mxu0 0.0
    %271 = vmatpush.msra.mxu0 %v171
    %272 = vmatmul.f32.gmra.mxu0 %v254
    %v273 = vpop.f32.mrf.mxu0
    %v274 = vadd.f32 0.0, %v273
    %275 = vdwg.mxu0
    %v277 = vsel %vm176, %v250, 0
    %279 = vmatpush.msra.mxu0 0.0
    %280 = vmatpush.msra.mxu0 0.0
    %281 = vmatpush.msra.mxu0 0.0
    %282 = vmatpush.msra.mxu0 0.0
    %283 = vmatpush.msra.mxu0 0.0
    %284 = vmatpush.msra.mxu0 0.0
    %285 = vmatpush.msra.mxu0 0.0
    %286 = vmatpush.msra.mxu0 0.0
    %287 = vmatpush.msra.mxu0 0.0
    %288 = vmatpush.msra.mxu0 0.0
    %289 = vmatpush.msra.mxu0 0.0
    %290 = vmatpush.msra.mxu0 0.0
    %291 = vmatpush.msra.mxu0 0.0
    %292 = vmatpush.msra.mxu0 0.0
    %293 = vmatpush.msra.mxu0 0.0
    %294 = vmatpush.msra.mxu0 %v174
    %295 = vmatmul.f32.gmra.mxu0 %v277
    %v296 = vpop.f32.mrf.mxu0
    %v297 = vadd.f32 0.0, %v296
    %298 = vdwg.mxu0
    %v300 = vsel %vm176, %v274, 0
    %v303 = vsel %vm176, %v297, 0
    %305 = vmatpush.msra.mxu0 0.0
    %306 = vmatpush.msra.mxu0 0.0
    %307 = vmatpush.msra.mxu0 0.0
    %308 = vmatpush.msra.mxu0 0.0
    %309 = vmatpush.msra.mxu0 0.0
    %310 = vmatpush.msra.mxu0 0.0
    %311 = vmatpush.msra.mxu0 0.0
    %312 = vmatpush.msra.mxu0 0.0
    %313 = vmatpush.msra.mxu0 0.0
    %314 = vmatpush.msra.mxu0 0.0
    %315 = vmatpush.msra.mxu0 0.0
    %316 = vmatpush.msra.mxu0 0.0
    %317 = vmatpush.msra.mxu0 0.0
    %318 = vmatpush.msra.mxu0 0.0
    %319 = vmatpush.msra.mxu0 0.0
    %320 = vmatpush.msra.mxu0 %v73
    %321 = vmatmul.f32.gmra.mxu0 %v300
    %v322 = vpop.f32.mrf.mxu0
    %v323 = vadd.f32 0.0, %v322
    %324 = vmatmul.f32.gmra.mxu0 %v303
    %v325 = vpop.f32.mrf.mxu0
    %v326 = vadd.f32 0.0, %v325
    %327 = vdwg.mxu0
    %v328 = vperm.slane %v77, 0
    %v329 = vadd.f32 %v328, %v323
    %v330 = vadd.f32 %v328, %v326
    %s331 = scalar_lea.vmem %s1, 120
    %v332 = vld [vmem:[%s331] sm:$0xff]
    %v333 = vld [vmem:[%s331 + $0x8] sm:$0xff]
    %v334 = vld [vmem:[%s331 + $0x10] sm:$0xff]
    %v335 = vld [vmem:[%s331 + $0x18] sm:$0xff]
    %v336 = vld [vmem:[%s331 + $0x20] sm:$0x1]
    %s337 = scalar_lea.vmem %s1, 160
    %v338 = vld [vmem:[%s337] sm:$0xff]
    %v339 = vld [vmem:[%s337 + $0x8] sm:$0xff]
    %v340 = vld [vmem:[%s337 + $0x10] sm:$0xff]
    %v341 = vld [vmem:[%s337 + $0x18] sm:$0xff]
    %v342 = vld [vmem:[%s337 + $0x20] sm:$0x1]
    %s343 = scalar_lea.vmem %s1, 200
    %v344 = vld [vmem:[%s343] sm:$0xff]
    %v345 = vld [vmem:[%s343 + $0x8] sm:$0xff]
    %v346 = vld [vmem:[%s343 + $0x10] sm:$0xff]
    %v347 = vld [vmem:[%s343 + $0x18] sm:$0xff]
    %v348 = vld [vmem:[%s343 + $0x20] sm:$0x1]
    %v349 = vperm.slane %v336, 0
    %350 = vmatpush.msra.mxu0 0.0
    %351 = vmatpush.msra.mxu0 0.0
    %352 = vmatpush.msra.mxu0 0.0
    %353 = vmatpush.msra.mxu0 0.0
    %354 = vmatpush.msra.mxu0 0.0
    %355 = vmatpush.msra.mxu0 0.0
    %356 = vmatpush.msra.mxu0 0.0
    %357 = vmatpush.msra.mxu0 0.0
    %358 = vmatpush.msra.mxu0 0.0
    %359 = vmatpush.msra.mxu0 0.0
    %360 = vmatpush.msra.mxu0 0.0
    %361 = vmatpush.msra.mxu0 0.0
    %362 = vmatpush.msra.mxu0 %v335
    %363 = vmatpush.msra.mxu0 %v334
    %364 = vmatpush.msra.mxu0 %v333
    %365 = vmatpush.msra.mxu0 %v332
    %366 = vmatmul.f32.gmra.mxu0 %v100
    %v367 = vpop.f32.mrf.mxu0
    %v368 = vadd.f32 %v349, %v367
    %369 = vmatmul.f32.gmra.mxu0 %v103
    %v370 = vpop.f32.mrf.mxu0
    %v371 = vadd.f32 %v349, %v370
    %372 = vdwg.mxu0
    %v373 = vperm.slane %v342, 0
    %374 = vmatpush.msra.mxu0 0.0
    %375 = vmatpush.msra.mxu0 0.0
    %376 = vmatpush.msra.mxu0 0.0
    %377 = vmatpush.msra.mxu0 0.0
    %378 = vmatpush.msra.mxu0 0.0
    %379 = vmatpush.msra.mxu0 0.0
    %380 = vmatpush.msra.mxu0 0.0
    %381 = vmatpush.msra.mxu0 0.0
    %382 = vmatpush.msra.mxu0 0.0
    %383 = vmatpush.msra.mxu0 0.0
    %384 = vmatpush.msra.mxu0 0.0
    %385 = vmatpush.msra.mxu0 0.0
    %386 = vmatpush.msra.mxu0 %v341
    %387 = vmatpush.msra.mxu0 %v340
    %388 = vmatpush.msra.mxu0 %v339
    %389 = vmatpush.msra.mxu0 %v338
    %390 = vmatmul.f32.gmra.mxu0 %v100
    %v391 = vpop.f32.mrf.mxu0
    %v392 = vadd.f32 %v373, %v391
    %393 = vmatmul.f32.gmra.mxu0 %v103
    %v394 = vpop.f32.mrf.mxu0
    %v395 = vadd.f32 %v373, %v394
    %396 = vdwg.mxu0
    %v397 = vperm.slane %v348, 0
    %398 = vmatpush.msra.mxu0 0.0
    %399 = vmatpush.msra.mxu0 0.0
    %400 = vmatpush.msra.mxu0 0.0
    %401 = vmatpush.msra.mxu0 0.0
    %402 = vmatpush.msra.mxu0 0.0
    %403 = vmatpush.msra.mxu0 0.0
    %404 = vmatpush.msra.mxu0 0.0
    %405 = vmatpush.msra.mxu0 0.0
    %406 = vmatpush.msra.mxu0 0.0
    %407 = vmatpush.msra.mxu0 0.0
    %408 = vmatpush.msra.mxu0 0.0
    %409 = vmatpush.msra.mxu0 0.0
    %410 = vmatpush.msra.mxu0 %v347
    %411 = vmatpush.msra.mxu0 %v346
    %412 = vmatpush.msra.mxu0 %v345
    %413 = vmatpush.msra.mxu0 %v344
    %414 = vmatmul.f32.gmra.mxu0 %v100
    %v415 = vpop.f32.mrf.mxu0
    %v416 = vadd.f32 %v397, %v415
    %417 = vmatmul.f32.gmra.mxu0 %v103
    %v418 = vpop.f32.mrf.mxu0
    %v419 = vadd.f32 %v397, %v418
    %420 = vdwg.mxu0
    %v422 = vsel %vm176, %v368, 0
    %v425 = vsel %vm176, %v392, 0
    %427 = vmatpush.xpose.msra.mxu0 0.0
    %428 = vmatpush.xpose.msra.mxu0 0.0
    %429 = vmatpush.xpose.msra.mxu0 0.0
    %430 = vmatpush.xpose.msra.mxu0 0.0
    %431 = vmatpush.xpose.msra.mxu0 0.0
    %432 = vmatpush.xpose.msra.mxu0 0.0
    %433 = vmatpush.xpose.msra.mxu0 0.0
    %434 = vmatpush.xpose.msra.mxu0 0.0
    %435 = vmatpush.xpose.msra.mxu0 0.0
    %436 = vmatpush.xpose.msra.mxu0 0.0
    %437 = vmatpush.xpose.msra.mxu0 0.0
    %438 = vmatpush.xpose.msra.mxu0 0.0
    %439 = vmatpush.xpose.msra.mxu0 0.0
    %440 = vmatpush.xpose.msra.mxu0 0.0
    %441 = vmatpush.xpose.msra.mxu0 0.0
    %442 = vmatpush.xpose.msra.mxu0 %v425
    %443 = vmatmul.f32.gmra.mxu0 %v422
    %v444 = vpop.f32.mrf.mxu0
    %v445 = vadd.f32 0.0, %v444
    %446 = vdwg.mxu0
    %v448 = vsel %vm176, %v371, 0
    %v451 = vsel %vm176, %v395, 0
    %453 = vmatpush.xpose.msra.mxu0 0.0
    %454 = vmatpush.xpose.msra.mxu0 0.0
    %455 = vmatpush.xpose.msra.mxu0 0.0
    %456 = vmatpush.xpose.msra.mxu0 0.0
    %457 = vmatpush.xpose.msra.mxu0 0.0
    %458 = vmatpush.xpose.msra.mxu0 0.0
    %459 = vmatpush.xpose.msra.mxu0 0.0
    %460 = vmatpush.xpose.msra.mxu0 0.0
    %461 = vmatpush.xpose.msra.mxu0 0.0
    %462 = vmatpush.xpose.msra.mxu0 0.0
    %463 = vmatpush.xpose.msra.mxu0 0.0
    %464 = vmatpush.xpose.msra.mxu0 0.0
    %465 = vmatpush.xpose.msra.mxu0 0.0
    %466 = vmatpush.xpose.msra.mxu0 0.0
    %467 = vmatpush.xpose.msra.mxu0 0.0
    %468 = vmatpush.xpose.msra.mxu0 %v451
    %469 = vmatmul.f32.gmra.mxu0 %v448
    %v470 = vpop.f32.mrf.mxu0
    %v471 = vadd.f32 0.0, %v470
    %472 = vdwg.mxu0
    %v473 = vsel %vm176, %v445, -inf
    %474 = vmax.xlane.f32.xlu0 %v473
    %v475 = vpop.xlane.xlu0 %474
    %v476 = vsel %vm176, %v471, -inf
    %477 = vmax.xlane.f32.xlu0 %v476
    %v478 = vpop.xlane.xlu0 %477
    %v479 = vsub.f32 %v445, %v475
    %v480 = vsub.f32 %v471, %v478
    %v481 = vmul.f32 %v479, 1.442695
    %v482 = vpow.pop %v481
    %v483 = vmul.f32 %v480, 1.442695
    %v484 = vpow.pop %v483
    %v485 = vsel %vm176, %v482, 0.0
    %486 = vadd.xlane.f32.xlu0 %v485
    %v487 = vpop.xlane.xlu0 %486
    %v488 = vsel %vm176, %v484, 0.0
    %489 = vadd.xlane.f32.xlu0 %v488
    %v490 = vpop.xlane.xlu0 %489
    %v491 = vrcp.pop %v487
    %v492 = vrcp.pop %v490
    %v493 = vmul.f32 %v482, %v491
    %v494 = vmul.f32 %v484, %v492
    %v495 = vadd.f32 %v251, %v493
    %v496 = vadd.f32 %v252, %v494
    %v498 = vsel %vm176, %v493, 0
    %500 = vmatpush.msra.mxu0 0.0
    %501 = vmatpush.msra.mxu0 0.0
    %502 = vmatpush.msra.mxu0 0.0
    %503 = vmatpush.msra.mxu0 0.0
    %504 = vmatpush.msra.mxu0 0.0
    %505 = vmatpush.msra.mxu0 0.0
    %506 = vmatpush.msra.mxu0 0.0
    %507 = vmatpush.msra.mxu0 0.0
    %508 = vmatpush.msra.mxu0 0.0
    %509 = vmatpush.msra.mxu0 0.0
    %510 = vmatpush.msra.mxu0 0.0
    %511 = vmatpush.msra.mxu0 0.0
    %512 = vmatpush.msra.mxu0 0.0
    %513 = vmatpush.msra.mxu0 0.0
    %514 = vmatpush.msra.mxu0 0.0
    %515 = vmatpush.msra.mxu0 %v416
    %516 = vmatmul.f32.gmra.mxu0 %v498
    %v517 = vpop.f32.mrf.mxu0
    %v518 = vadd.f32 0.0, %v517
    %519 = vdwg.mxu0
    %v521 = vsel %vm176, %v494, 0
    %523 = vmatpush.msra.mxu0 0.0
    %524 = vmatpush.msra.mxu0 0.0
    %525 = vmatpush.msra.mxu0 0.0
    %526 = vmatpush.msra.mxu0 0.0
    %527 = vmatpush.msra.mxu0 0.0
    %528 = vmatpush.msra.mxu0 0.0
    %529 = vmatpush.msra.mxu0 0.0
    %530 = vmatpush.msra.mxu0 0.0
    %531 = vmatpush.msra.mxu0 0.0
    %532 = vmatpush.msra.mxu0 0.0
    %533 = vmatpush.msra.mxu0 0.0
    %534 = vmatpush.msra.mxu0 0.0
    %535 = vmatpush.msra.mxu0 0.0
    %536 = vmatpush.msra.mxu0 0.0
    %537 = vmatpush.msra.mxu0 0.0
    %538 = vmatpush.msra.mxu0 %v419
    %539 = vmatmul.f32.gmra.mxu0 %v521
    %v540 = vpop.f32.mrf.mxu0
    %v541 = vadd.f32 0.0, %v540
    %542 = vdwg.mxu0
    %v544 = vsel %vm176, %v518, 0
    %v547 = vsel %vm176, %v541, 0
    %549 = vmatpush.msra.mxu0 0.0
    %550 = vmatpush.msra.mxu0 0.0
    %551 = vmatpush.msra.mxu0 0.0
    %552 = vmatpush.msra.mxu0 0.0
    %553 = vmatpush.msra.mxu0 0.0
    %554 = vmatpush.msra.mxu0 0.0
    %555 = vmatpush.msra.mxu0 0.0
    %556 = vmatpush.msra.mxu0 0.0
    %557 = vmatpush.msra.mxu0 0.0
    %558 = vmatpush.msra.mxu0 0.0
    %559 = vmatpush.msra.mxu0 0.0
    %560 = vmatpush.msra.mxu0 0.0
    %561 = vmatpush.msra.mxu0 0.0
    %562 = vmatpush.msra.mxu0 0.0
    %563 = vmatpush.msra.mxu0 0.0
    %564 = vmatpush.msra.mxu0 %v74
    %565 = vmatmul.f32.gmra.mxu0 %v544
    %v566 = vpop.f32.mrf.mxu0
    %v567 = vadd.f32 0.0, %v566
    %568 = vmatmul.f32.gmra.mxu0 %v547
    %v569 = vpop.f32.mrf.mxu0
    %v570 = vadd.f32 0.0, %v569
    %571 = vdwg.mxu0
    %v572 = vadd.f32 %v329, %v567
    %v573 = vadd.f32 %v330, %v570
    %s574 = scalar_lea.vmem %s1, 240
    %v575 = vld [vmem:[%s574] sm:$0xff]
    %v576 = vld [vmem:[%s574 + $0x8] sm:$0xff]
    %v577 = vld [vmem:[%s574 + $0x10] sm:$0xff]
    %v578 = vld [vmem:[%s574 + $0x18] sm:$0xff]
    %v579 = vld [vmem:[%s574 + $0x20] sm:$0x1]
    %s580 = scalar_lea.vmem %s1, 280
    %v581 = vld [vmem:[%s580] sm:$0xff]
    %v582 = vld [vmem:[%s580 + $0x8] sm:$0xff]
    %v583 = vld [vmem:[%s580 + $0x10] sm:$0xff]
    %v584 = vld [vmem:[%s580 + $0x18] sm:$0xff]
    %v585 = vld [vmem:[%s580 + $0x20] sm:$0x1]
    %s586 = scalar_lea.vmem %s1, 320
    %v587 = vld [vmem:[%s586] sm:$0xff]
    %v588 = vld [vmem:[%s586 + $0x8] sm:$0xff]
    %v589 = vld [vmem:[%s586 + $0x10] sm:$0xff]
    %v590 = vld [vmem:[%s586 + $0x18] sm:$0xff]
    %v591 = vld [vmem:[%s586 + $0x20] sm:$0x1]
    %v592 = vperm.slane %v579, 0
    %593 = vmatpush.msra.mxu0 0.0
    %594 = vmatpush.msra.mxu0 0.0
    %595 = vmatpush.msra.mxu0 0.0
    %596 = vmatpush.msra.mxu0 0.0
    %597 = vmatpush.msra.mxu0 0.0
    %598 = vmatpush.msra.mxu0 0.0
    %599 = vmatpush.msra.mxu0 0.0
    %600 = vmatpush.msra.mxu0 0.0
    %601 = vmatpush.msra.mxu0 0.0
    %602 = vmatpush.msra.mxu0 0.0
    %603 = vmatpush.msra.mxu0 0.0
    %604 = vmatpush.msra.mxu0 0.0
    %605 = vmatpush.msra.mxu0 %v578
    %606 = vmatpush.msra.mxu0 %v577
    %607 = vmatpush.msra.mxu0 %v576
    %608 = vmatpush.msra.mxu0 %v575
    %609 = vmatmul.f32.gmra.mxu0 %v100
    %v610 = vpop.f32.mrf.mxu0
    %v611 = vadd.f32 %v592, %v610
    %612 = vmatmul.f32.gmra.mxu0 %v103
    %v613 = vpop.f32.mrf.mxu0
    %v614 = vadd.f32 %v592, %v613
    %615 = vdwg.mxu0
    %v616 = vperm.slane %v585, 0
    %617 = vmatpush.msra.mxu0 0.0
    %618 = vmatpush.msra.mxu0 0.0
    %619 = vmatpush.msra.mxu0 0.0
    %620 = vmatpush.msra.mxu0 0.0
    %621 = vmatpush.msra.mxu0 0.0
    %622 = vmatpush.msra.mxu0 0.0
    %623 = vmatpush.msra.mxu0 0.0
    %624 = vmatpush.msra.mxu0 0.0
    %625 = vmatpush.msra.mxu0 0.0
    %626 = vmatpush.msra.mxu0 0.0
    %627 = vmatpush.msra.mxu0 0.0
    %628 = vmatpush.msra.mxu0 0.0
    %629 = vmatpush.msra.mxu0 %v584
    %630 = vmatpush.msra.mxu0 %v583
    %631 = vmatpush.msra.mxu0 %v582
    %632 = vmatpush.msra.mxu0 %v581
    %633 = vmatmul.f32.gmra.mxu0 %v100
    %v634 = vpop.f32.mrf.mxu0
    %v635 = vadd.f32 %v616, %v634
    %636 = vmatmul.f32.gmra.mxu0 %v103
    %v637 = vpop.f32.mrf.mxu0
    %v638 = vadd.f32 %v616, %v637
    %639 = vdwg.mxu0
    %v640 = vperm.slane %v591, 0
    %641 = vmatpush.msra.mxu0 0.0
    %642 = vmatpush.msra.mxu0 0.0
    %643 = vmatpush.msra.mxu0 0.0
    %644 = vmatpush.msra.mxu0 0.0
    %645 = vmatpush.msra.mxu0 0.0
    %646 = vmatpush.msra.mxu0 0.0
    %647 = vmatpush.msra.mxu0 0.0
    %648 = vmatpush.msra.mxu0 0.0
    %649 = vmatpush.msra.mxu0 0.0
    %650 = vmatpush.msra.mxu0 0.0
    %651 = vmatpush.msra.mxu0 0.0
    %652 = vmatpush.msra.mxu0 0.0
    %653 = vmatpush.msra.mxu0 %v590
    %654 = vmatpush.msra.mxu0 %v589
    %655 = vmatpush.msra.mxu0 %v588
    %656 = vmatpush.msra.mxu0 %v587
    %657 = vmatmul.f32.gmra.mxu0 %v100
    %v658 = vpop.f32.mrf.mxu0
    %v659 = vadd.f32 %v640, %v658
    %660 = vmatmul.f32.gmra.mxu0 %v103
    %v661 = vpop.f32.mrf.mxu0
    %v662 = vadd.f32 %v640, %v661
    %663 = vdwg.mxu0
    %v665 = vsel %vm176, %v611, 0
    %v668 = vsel %vm176, %v635, 0
    %670 = vmatpush.xpose.msra.mxu0 0.0
    %671 = vmatpush.xpose.msra.mxu0 0.0
    %672 = vmatpush.xpose.msra.mxu0 0.0
    %673 = vmatpush.xpose.msra.mxu0 0.0
    %674 = vmatpush.xpose.msra.mxu0 0.0
    %675 = vmatpush.xpose.msra.mxu0 0.0
    %676 = vmatpush.xpose.msra.mxu0 0.0
    %677 = vmatpush.xpose.msra.mxu0 0.0
    %678 = vmatpush.xpose.msra.mxu0 0.0
    %679 = vmatpush.xpose.msra.mxu0 0.0
    %680 = vmatpush.xpose.msra.mxu0 0.0
    %681 = vmatpush.xpose.msra.mxu0 0.0
    %682 = vmatpush.xpose.msra.mxu0 0.0
    %683 = vmatpush.xpose.msra.mxu0 0.0
    %684 = vmatpush.xpose.msra.mxu0 0.0
    %685 = vmatpush.xpose.msra.mxu0 %v668
    %686 = vmatmul.f32.gmra.mxu0 %v665
    %v687 = vpop.f32.mrf.mxu0
    %v688 = vadd.f32 0.0, %v687
    %689 = vdwg.mxu0
    %v691 = vsel %vm176, %v614, 0
    %v694 = vsel %vm176, %v638, 0
    %696 = vmatpush.xpose.msra.mxu0 0.0
    %697 = vmatpush.xpose.msra.mxu0 0.0
    %698 = vmatpush.xpose.msra.mxu0 0.0
    %699 = vmatpush.xpose.msra.mxu0 0.0
    %700 = vmatpush.xpose.msra.mxu0 0.0
    %701 = vmatpush.xpose.msra.mxu0 0.0
    %702 = vmatpush.xpose.msra.mxu0 0.0
    %703 = vmatpush.xpose.msra.mxu0 0.0
    %704 = vmatpush.xpose.msra.mxu0 0.0
    %705 = vmatpush.xpose.msra.mxu0 0.0
    %706 = vmatpush.xpose.msra.mxu0 0.0
    %707 = vmatpush.xpose.msra.mxu0 0.0
    %708 = vmatpush.xpose.msra.mxu0 0.0
    %709 = vmatpush.xpose.msra.mxu0 0.0
    %710 = vmatpush.xpose.msra.mxu0 0.0
    %711 = vmatpush.xpose.msra.mxu0 %v694
    %712 = vmatmul.f32.gmra.mxu0 %v691
    %v713 = vpop.f32.mrf.mxu0
    %v714 = vadd.f32 0.0, %v713
    %715 = vdwg.mxu0
    %v716 = vsel %vm176, %v688, -inf
    %717 = vmax.xlane.f32.xlu0 %v716
    %v718 = vpop.xlane.xlu0 %717
    %v719 = vsel %vm176, %v714, -inf
    %720 = vmax.xlane.f32.xlu0 %v719
    %v721 = vpop.xlane.xlu0 %720
    %v722 = vsub.f32 %v688, %v718
    %v723 = vsub.f32 %v714, %v721
    %v724 = vmul.f32 %v722, 1.442695
    %v725 = vpow.pop %v724
    %v726 = vmul.f32 %v723, 1.442695
    %v727 = vpow.pop %v726
    %v728 = vsel %vm176, %v725, 0.0
    %729 = vadd.xlane.f32.xlu0 %v728
    %v730 = vpop.xlane.xlu0 %729
    %v731 = vsel %vm176, %v727, 0.0
    %732 = vadd.xlane.f32.xlu0 %v731
    %v733 = vpop.xlane.xlu0 %732
    %v734 = vrcp.pop %v730
    %v735 = vrcp.pop %v733
    %v736 = vmul.f32 %v725, %v734
    %v737 = vmul.f32 %v727, %v735
    %v738 = vadd.f32 %v495, %v736
    %v739 = vadd.f32 %v496, %v737
    %v741 = vsel %vm176, %v736, 0
    %743 = vmatpush.msra.mxu0 0.0
    %744 = vmatpush.msra.mxu0 0.0
    %745 = vmatpush.msra.mxu0 0.0
    %746 = vmatpush.msra.mxu0 0.0
    %747 = vmatpush.msra.mxu0 0.0
    %748 = vmatpush.msra.mxu0 0.0
    %749 = vmatpush.msra.mxu0 0.0
    %750 = vmatpush.msra.mxu0 0.0
    %751 = vmatpush.msra.mxu0 0.0
    %752 = vmatpush.msra.mxu0 0.0
    %753 = vmatpush.msra.mxu0 0.0
    %754 = vmatpush.msra.mxu0 0.0
    %755 = vmatpush.msra.mxu0 0.0
    %756 = vmatpush.msra.mxu0 0.0
    %757 = vmatpush.msra.mxu0 0.0
    %758 = vmatpush.msra.mxu0 %v659
    %759 = vmatmul.f32.gmra.mxu0 %v741
    %v760 = vpop.f32.mrf.mxu0
    %v761 = vadd.f32 0.0, %v760
    %762 = vdwg.mxu0
    %v764 = vsel %vm176, %v737, 0
    %766 = vmatpush.msra.mxu0 0.0
    %767 = vmatpush.msra.mxu0 0.0
    %768 = vmatpush.msra.mxu0 0.0
    %769 = vmatpush.msra.mxu0 0.0
    %770 = vmatpush.msra.mxu0 0.0
    %771 = vmatpush.msra.mxu0 0.0
    %772 = vmatpush.msra.mxu0 0.0
    %773 = vmatpush.msra.mxu0 0.0
    %774 = vmatpush.msra.mxu0 0.0
    %775 = vmatpush.msra.mxu0 0.0
    %776 = vmatpush.msra.mxu0 0.0
    %777 = vmatpush.msra.mxu0 0.0
    %778 = vmatpush.msra.mxu0 0.0
    %779 = vmatpush.msra.mxu0 0.0
    %780 = vmatpush.msra.mxu0 0.0
    %781 = vmatpush.msra.mxu0 %v662
    %782 = vmatmul.f32.gmra.mxu0 %v764
    %v783 = vpop.f32.mrf.mxu0
    %v784 = vadd.f32 0.0, %v783
    %785 = vdwg.mxu0
    %v787 = vsel %vm176, %v761, 0
    %v790 = vsel %vm176, %v784, 0
    %792 = vmatpush.msra.mxu0 0.0
    %793 = vmatpush.msra.mxu0 0.0
    %794 = vmatpush.msra.mxu0 0.0
    %795 = vmatpush.msra.mxu0 0.0
    %796 = vmatpush.msra.mxu0 0.0
    %797 = vmatpush.msra.mxu0 0.0
    %798 = vmatpush.msra.mxu0 0.0
    %799 = vmatpush.msra.mxu0 0.0
    %800 = vmatpush.msra.mxu0 0.0
    %801 = vmatpush.msra.mxu0 0.0
    %802 = vmatpush.msra.mxu0 0.0
    %803 = vmatpush.msra.mxu0 0.0
    %804 = vmatpush.msra.mxu0 0.0
    %805 = vmatpush.msra.mxu0 0.0
    %806 = vmatpush.msra.mxu0 0.0
    %807 = vmatpush.msra.mxu0 %v75
    %808 = vmatmul.f32.gmra.mxu0 %v787
    %v809 = vpop.f32.mrf.mxu0
    %v810 = vadd.f32 0.0, %v809
    %811 = vmatmul.f32.gmra.mxu0 %v790
    %v812 = vpop.f32.mrf.mxu0
    %v813 = vadd.f32 0.0, %v812
    %814 = vdwg.mxu0
    %v815 = vadd.f32 %v572, %v810
    %v816 = vadd.f32 %v573, %v813
    %s817 = scalar_lea.vmem %s1, 360
    %v818 = vld [vmem:[%s817] sm:$0xff]
    %v819 = vld [vmem:[%s817 + $0x8] sm:$0xff]
    %v820 = vld [vmem:[%s817 + $0x10] sm:$0xff]
    %v821 = vld [vmem:[%s817 + $0x18] sm:$0xff]
    %v822 = vld [vmem:[%s817 + $0x20] sm:$0x1]
    %s823 = scalar_lea.vmem %s1, 400
    %v824 = vld [vmem:[%s823] sm:$0xff]
    %v825 = vld [vmem:[%s823 + $0x8] sm:$0xff]
    %v826 = vld [vmem:[%s823 + $0x10] sm:$0xff]
    %v827 = vld [vmem:[%s823 + $0x18] sm:$0xff]
    %v828 = vld [vmem:[%s823 + $0x20] sm:$0x1]
    %s829 = scalar_lea.vmem %s1, 440
    %v830 = vld [vmem:[%s829] sm:$0xff]
    %v831 = vld [vmem:[%s829 + $0x8] sm:$0xff]
    %v832 = vld [vmem:[%s829 + $0x10] sm:$0xff]
    %v833 = vld [vmem:[%s829 + $0x18] sm:$0xff]
    %v834 = vld [vmem:[%s829 + $0x20] sm:$0x1]
    %v835 = vperm.slane %v822, 0
    %836 = vmatpush.msra.mxu0 0.0
    %837 = vmatpush.msra.mxu0 0.0
    %838 = vmatpush.msra.mxu0 0.0
    %839 = vmatpush.msra.mxu0 0.0
    %840 = vmatpush.msra.mxu0 0.0
    %841 = vmatpush.msra.mxu0 0.0
    %842 = vmatpush.msra.mxu0 0.0
    %843 = vmatpush.msra.mxu0 0.0
    %844 = vmatpush.msra.mxu0 0.0
    %845 = vmatpush.msra.mxu0 0.0
    %846 = vmatpush.msra.mxu0 0.0
    %847 = vmatpush.msra.mxu0 0.0
    %848 = vmatpush.msra.mxu0 %v821
    %849 = vmatpush.msra.mxu0 %v820
    %850 = vmatpush.msra.mxu0 %v819
    %851 = vmatpush.msra.mxu0 %v818
    %852 = vmatmul.f32.gmra.mxu0 %v100
    %v853 = vpop.f32.mrf.mxu0
    %v854 = vadd.f32 %v835, %v853
    %855 = vmatmul.f32.gmra.mxu0 %v103
    %v856 = vpop.f32.mrf.mxu0
    %v857 = vadd.f32 %v835, %v856
    %858 = vdwg.mxu0
    %v859 = vperm.slane %v828, 0
    %860 = vmatpush.msra.mxu0 0.0
    %861 = vmatpush.msra.mxu0 0.0
    %862 = vmatpush.msra.mxu0 0.0
    %863 = vmatpush.msra.mxu0 0.0
    %864 = vmatpush.msra.mxu0 0.0
    %865 = vmatpush.msra.mxu0 0.0
    %866 = vmatpush.msra.mxu0 0.0
    %867 = vmatpush.msra.mxu0 0.0
    %868 = vmatpush.msra.mxu0 0.0
    %869 = vmatpush.msra.mxu0 0.0
    %870 = vmatpush.msra.mxu0 0.0
    %871 = vmatpush.msra.mxu0 0.0
    %872 = vmatpush.msra.mxu0 %v827
    %873 = vmatpush.msra.mxu0 %v826
    %874 = vmatpush.msra.mxu0 %v825
    %875 = vmatpush.msra.mxu0 %v824
    %876 = vmatmul.f32.gmra.mxu0 %v100
    %v877 = vpop.f32.mrf.mxu0
    %v878 = vadd.f32 %v859, %v877
    %879 = vmatmul.f32.gmra.mxu0 %v103
    %v880 = vpop.f32.mrf.mxu0
    %v881 = vadd.f32 %v859, %v880
    %882 = vdwg.mxu0
    %v883 = vperm.slane %v834, 0
    %884 = vmatpush.msra.mxu0 0.0
    %885 = vmatpush.msra.mxu0 0.0
    %886 = vmatpush.msra.mxu0 0.0
    %887 = vmatpush.msra.mxu0 0.0
    %888 = vmatpush.msra.mxu0 0.0
    %889 = vmatpush.msra.mxu0 0.0
    %890 = vmatpush.msra.mxu0 0.0
    %891 = vmatpush.msra.mxu0 0.0
    %892 = vmatpush.msra.mxu0 0.0
    %893 = vmatpush.msra.mxu0 0.0
    %894 = vmatpush.msra.mxu0 0.0
    %895 = vmatpush.msra.mxu0 0.0
    %896 = vmatpush.msra.mxu0 %v833
    %897 = vmatpush.msra.mxu0 %v832
    %898 = vmatpush.msra.mxu0 %v831
    %899 = vmatpush.msra.mxu0 %v830
    %900 = vmatmul.f32.gmra.mxu0 %v100
    %v901 = vpop.f32.mrf.mxu0
    %v902 = vadd.f32 %v883, %v901
    %903 = vmatmul.f32.gmra.mxu0 %v103
    %v904 = vpop.f32.mrf.mxu0
    %v905 = vadd.f32 %v883, %v904
    %906 = vdwg.mxu0
    %v908 = vsel %vm176, %v854, 0
    %v911 = vsel %vm176, %v878, 0
    %913 = vmatpush.xpose.msra.mxu0 0.0
    %914 = vmatpush.xpose.msra.mxu0 0.0
    %915 = vmatpush.xpose.msra.mxu0 0.0
    %916 = vmatpush.xpose.msra.mxu0 0.0
    %917 = vmatpush.xpose.msra.mxu0 0.0
    %918 = vmatpush.xpose.msra.mxu0 0.0
    %919 = vmatpush.xpose.msra.mxu0 0.0
    %920 = vmatpush.xpose.msra.mxu0 0.0
    %921 = vmatpush.xpose.msra.mxu0 0.0
    %922 = vmatpush.xpose.msra.mxu0 0.0
    %923 = vmatpush.xpose.msra.mxu0 0.0
    %924 = vmatpush.xpose.msra.mxu0 0.0
    %925 = vmatpush.xpose.msra.mxu0 0.0
    %926 = vmatpush.xpose.msra.mxu0 0.0
    %927 = vmatpush.xpose.msra.mxu0 0.0
    %928 = vmatpush.xpose.msra.mxu0 %v911
    %929 = vmatmul.f32.gmra.mxu0 %v908
    %v930 = vpop.f32.mrf.mxu0
    %v931 = vadd.f32 0.0, %v930
    %932 = vdwg.mxu0
    %v934 = vsel %vm176, %v857, 0
    %v937 = vsel %vm176, %v881, 0
    %939 = vmatpush.xpose.msra.mxu0 0.0
    %940 = vmatpush.xpose.msra.mxu0 0.0
    %941 = vmatpush.xpose.msra.mxu0 0.0
    %942 = vmatpush.xpose.msra.mxu0 0.0
    %943 = vmatpush.xpose.msra.mxu0 0.0
    %944 = vmatpush.xpose.msra.mxu0 0.0
    %945 = vmatpush.xpose.msra.mxu0 0.0
    %946 = vmatpush.xpose.msra.mxu0 0.0
    %947 = vmatpush.xpose.msra.mxu0 0.0
    %948 = vmatpush.xpose.msra.mxu0 0.0
    %949 = vmatpush.xpose.msra.mxu0 0.0
    %950 = vmatpush.xpose.msra.mxu0 0.0
    %951 = vmatpush.xpose.msra.mxu0 0.0
    %952 = vmatpush.xpose.msra.mxu0 0.0
    %953 = vmatpush.xpose.msra.mxu0 0.0
    %954 = vmatpush.xpose.msra.mxu0 %v937
    %955 = vmatmul.f32.gmra.mxu0 %v934
    %v956 = vpop.f32.mrf.mxu0
    %v957 = vadd.f32 0.0, %v956
    %958 = vdwg.mxu0
    %v959 = vsel %vm176, %v931, -inf
    %960 = vmax.xlane.f32.xlu0 %v959
    %v961 = vpop.xlane.xlu0 %960
    %v962 = vsel %vm176, %v957, -inf
    %963 = vmax.xlane.f32.xlu0 %v962
    %v964 = vpop.xlane.xlu0 %963
    %v965 = vsub.f32 %v931, %v961
    %v966 = vsub.f32 %v957, %v964
    %v967 = vmul.f32 %v965, 1.442695
    %v968 = vpow.pop %v967
    %v969 = vmul.f32 %v966, 1.442695
    %v970 = vpow.pop %v969
    %v971 = vsel %vm176, %v968, 0.0
    %972 = vadd.xlane.f32.xlu0 %v971
    %v973 = vpop.xlane.xlu0 %972
    %v974 = vsel %vm176, %v970, 0.0
    %975 = vadd.xlane.f32.xlu0 %v974
    %v976 = vpop.xlane.xlu0 %975
    %v977 = vrcp.pop %v973
    %v978 = vrcp.pop %v976
    %v979 = vmul.f32 %v968, %v977
    %v980 = vmul.f32 %v970, %v978
    %v981 = vadd.f32 %v738, %v979
    %v982 = vadd.f32 %v739, %v980
    %v984 = vsel %vm176, %v979, 0
    %986 = vmatpush.msra.mxu0 0.0
    %987 = vmatpush.msra.mxu0 0.0
    %988 = vmatpush.msra.mxu0 0.0
    %989 = vmatpush.msra.mxu0 0.0
    %990 = vmatpush.msra.mxu0 0.0
    %991 = vmatpush.msra.mxu0 0.0
    %992 = vmatpush.msra.mxu0 0.0
    %993 = vmatpush.msra.mxu0 0.0
    %994 = vmatpush.msra.mxu0 0.0
    %995 = vmatpush.msra.mxu0 0.0
    %996 = vmatpush.msra.mxu0 0.0
    %997 = vmatpush.msra.mxu0 0.0
    %998 = vmatpush.msra.mxu0 0.0
    %999 = vmatpush.msra.mxu0 0.0
    %1000 = vmatpush.msra.mxu0 0.0
    %1001 = vmatpush.msra.mxu0 %v902
    %1002 = vmatmul.f32.gmra.mxu0 %v984
    %v1003 = vpop.f32.mrf.mxu0
    %v1004 = vadd.f32 0.0, %v1003
    %1005 = vdwg.mxu0
    %v1007 = vsel %vm176, %v980, 0
    %1009 = vmatpush.msra.mxu0 0.0
    %1010 = vmatpush.msra.mxu0 0.0
    %1011 = vmatpush.msra.mxu0 0.0
    %1012 = vmatpush.msra.mxu0 0.0
    %1013 = vmatpush.msra.mxu0 0.0
    %1014 = vmatpush.msra.mxu0 0.0
    %1015 = vmatpush.msra.mxu0 0.0
    %1016 = vmatpush.msra.mxu0 0.0
    %1017 = vmatpush.msra.mxu0 0.0
    %1018 = vmatpush.msra.mxu0 0.0
    %1019 = vmatpush.msra.mxu0 0.0
    %1020 = vmatpush.msra.mxu0 0.0
    %1021 = vmatpush.msra.mxu0 0.0
    %1022 = vmatpush.msra.mxu0 0.0
    %1023 = vmatpush.msra.mxu0 0.0
    %1024 = vmatpush.msra.mxu0 %v905
    %1025 = vmatmul.f32.gmra.mxu0 %v1007
    %v1026 = vpop.f32.mrf.mxu0
    %v1027 = vadd.f32 0.0, %v1026
    %1028 = vdwg.mxu0
    %v1030 = vsel %vm176, %v1004, 0
    %v1033 = vsel %vm176, %v1027, 0
    %1035 = vmatpush.msra.mxu0 0.0
    %1036 = vmatpush.msra.mxu0 0.0
    %1037 = vmatpush.msra.mxu0 0.0
    %1038 = vmatpush.msra.mxu0 0.0
    %1039 = vmatpush.msra.mxu0 0.0
    %1040 = vmatpush.msra.mxu0 0.0
    %1041 = vmatpush.msra.mxu0 0.0
    %1042 = vmatpush.msra.mxu0 0.0
    %1043 = vmatpush.msra.mxu0 0.0
    %1044 = vmatpush.msra.mxu0 0.0
    %1045 = vmatpush.msra.mxu0 0.0
    %1046 = vmatpush.msra.mxu0 0.0
    %1047 = vmatpush.msra.mxu0 0.0
    %1048 = vmatpush.msra.mxu0 0.0
    %1049 = vmatpush.msra.mxu0 0.0
    %1050 = vmatpush.msra.mxu0 %v76
    %1051 = vmatmul.f32.gmra.mxu0 %v1030
    %v1052 = vpop.f32.mrf.mxu0
    %v1053 = vadd.f32 0.0, %v1052
    %1054 = vmatmul.f32.gmra.mxu0 %v1033
    %v1055 = vpop.f32.mrf.mxu0
    %v1056 = vadd.f32 0.0, %v1055
    %1057 = vdwg.mxu0
    %v1058 = vadd.f32 %v815, %v1053
    %v1059 = vadd.f32 %v816, %v1056
    %v1060 = vmul.f32 %v981, 0.25
    %v1061 = vmul.f32 %v982, 0.25
    %v1062 = vadd.f32 %v68, %v1058
    %v1063 = vadd.f32 %v71, %v1059
    %v1064 = vsel %vm98, %v1062, 0.0
    %1065 = vadd.xlane.f32.xlu0 %v1064
    %v1066 = vpop.xlane.xlu0 %1065
    %v1067 = vsel %vm98, %v1063, 0.0
    %1068 = vadd.xlane.f32.xlu0 %v1067
    %v1069 = vpop.xlane.xlu0 %1068
    %v1070 = vrcp.pop 32.0
    %v1071 = vmul.f32 32.0, %v1070
    %v1072 = vsub.f32 1.0, %v1071
    %v1073 = vmul.f32 %v1070, %v1072
    %v1074 = vadd.f32 %v1070, %v1073
    %vm1075 = vweird.f32 %v1070
    %v1076 = vsel %vm1075, %v1070, %v1074
    %v1077 = vmul.f32 %v1066, %v1076
    %v1078 = vmul.f32 %v1069, %v1076
    %v1079 = vsub.f32 %v1062, %v1077
    %v1080 = vsub.f32 %v1063, %v1078
    %v1081 = vmul.f32 %v1079, %v1079
    %v1082 = vmul.f32 %v1080, %v1080
    %v1083 = vsel %vm98, %v1081, 0.0
    %1084 = vadd.xlane.f32.xlu0 %v1083
    %v1085 = vpop.xlane.xlu0 %1084
    %v1086 = vsel %vm98, %v1082, 0.0
    %1087 = vadd.xlane.f32.xlu0 %v1086
    %v1088 = vpop.xlane.xlu0 %1087
    %v1089 = vmul.f32 %v1085, %v1076
    %v1090 = vmul.f32 %v1088, %v1076
    %v1091 = vadd.f32 %v1089, 1e-05
    %v1092 = vadd.f32 %v1090, 1e-05
    %v1093 = vrsqrt.pop %v1091
    %v1094 = vmul.f32 %v1093, %v1091
    %v1095 = vmul.f32 %v1094, %v1093
    %v1096 = vmul.f32 0.5, %v1095
    %v1097 = vsub.f32 1.5, %v1096
    %v1098 = vmul.f32 %v1093, %v1097
    %vm1099 = vweird.f32 %v1091
    %vm1100 = vweird.f32 %v1093
    %vm1101 = vmor %vm1099, %vm1100
    %v1102 = vsel %vm1101, %v1093, %v1098
    %v1103 = vrsqrt.pop %v1092
    %v1104 = vmul.f32 %v1103, %v1092
    %v1105 = vmul.f32 %v1104, %v1103
    %v1106 = vmul.f32 0.5, %v1105
    %v1107 = vsub.f32 1.5, %v1106
    %v1108 = vmul.f32 %v1103, %v1107
    %vm1109 = vweird.f32 %v1092
    %vm1110 = vweird.f32 %v1103
    %vm1111 = vmor %vm1109, %vm1110
    %v1112 = vsel %vm1111, %v1103, %v1108
    %v1113 = vmul.f32 %v1079, %v1102
    %v1114 = vmul.f32 %v1080, %v1112
    %v1115 = vperm.slane %v78, 0
    %v1116 = vmul.f32 %v1113, %v1115
    %v1117 = vmul.f32 %v1114, %v1115
    %v1118 = vperm.slane %v79, 0
    %v1119 = vadd.f32 %v1116, %v1118
    %v1120 = vadd.f32 %v1117, %v1118
    %v1121 = vld [vmem:[%s2 + $0x50] sm:$0xff]
    %v1122 = vld [vmem:[%s2 + $0x58] sm:$0xff]
    %v1123 = vld [vmem:[%s2 + $0x60] sm:$0xff]
    %v1124 = vld [vmem:[%s2 + $0x68] sm:$0xff]
    %v1125 = vld [vmem:[%s2 + $0x70] sm:$0x1]
    %v1126 = vld [vmem:[%s2 + $0x71] sm:$0x1]
    %v1127 = vld [vmem:[%s2 + $0x72] sm:$0x1]
    %s1128 = scalar_lea.vmem %s1, 480
    %v1129 = vld [vmem:[%s1128] sm:$0xff]
    %v1130 = vld [vmem:[%s1128 + $0x8] sm:$0xff]
    %v1131 = vld [vmem:[%s1128 + $0x10] sm:$0xff]
    %v1132 = vld [vmem:[%s1128 + $0x18] sm:$0xff]
    %v1133 = vld [vmem:[%s1128 + $0x20] sm:$0x1]
    %s1134 = scalar_lea.vmem %s1, 520
    %v1135 = vld [vmem:[%s1134] sm:$0xff]
    %v1136 = vld [vmem:[%s1134 + $0x8] sm:$0xff]
    %v1137 = vld [vmem:[%s1134 + $0x10] sm:$0xff]
    %v1138 = vld [vmem:[%s1134 + $0x18] sm:$0xff]
    %v1139 = vld [vmem:[%s1134 + $0x20] sm:$0x1]
    %s1140 = scalar_lea.vmem %s1, 560
    %v1141 = vld [vmem:[%s1140] sm:$0xff]
    %v1142 = vld [vmem:[%s1140 + $0x8] sm:$0xff]
    %v1143 = vld [vmem:[%s1140 + $0x10] sm:$0xff]
    %v1144 = vld [vmem:[%s1140 + $0x18] sm:$0xff]
    %v1145 = vld [vmem:[%s1140 + $0x20] sm:$0x1]
    %v1146 = vperm.slane %v1133, 0
    %v1148 = vsel %vm98, %v1119, 0
    %v1151 = vsel %vm98, %v1120, 0
    %1153 = vmatpush.msra.mxu0 0.0
    %1154 = vmatpush.msra.mxu0 0.0
    %1155 = vmatpush.msra.mxu0 0.0
    %1156 = vmatpush.msra.mxu0 0.0
    %1157 = vmatpush.msra.mxu0 0.0
    %1158 = vmatpush.msra.mxu0 0.0
    %1159 = vmatpush.msra.mxu0 0.0
    %1160 = vmatpush.msra.mxu0 0.0
    %1161 = vmatpush.msra.mxu0 0.0
    %1162 = vmatpush.msra.mxu0 0.0
    %1163 = vmatpush.msra.mxu0 0.0
    %1164 = vmatpush.msra.mxu0 0.0
    %1165 = vmatpush.msra.mxu0 %v1132
    %1166 = vmatpush.msra.mxu0 %v1131
    %1167 = vmatpush.msra.mxu0 %v1130
    %1168 = vmatpush.msra.mxu0 %v1129
    %1169 = vmatmul.f32.gmra.mxu0 %v1148
    %v1170 = vpop.f32.mrf.mxu0
    %v1171 = vadd.f32 %v1146, %v1170
    %1172 = vmatmul.f32.gmra.mxu0 %v1151
    %v1173 = vpop.f32.mrf.mxu0
    %v1174 = vadd.f32 %v1146, %v1173
    %1175 = vdwg.mxu0
    %v1176 = vperm.slane %v1139, 0
    %1177 = vmatpush.msra.mxu0 0.0
    %1178 = vmatpush.msra.mxu0 0.0
    %1179 = vmatpush.msra.mxu0 0.0
    %1180 = vmatpush.msra.mxu0 0.0
    %1181 = vmatpush.msra.mxu0 0.0
    %1182 = vmatpush.msra.mxu0 0.0
    %1183 = vmatpush.msra.mxu0 0.0
    %1184 = vmatpush.msra.mxu0 0.0
    %1185 = vmatpush.msra.mxu0 0.0
    %1186 = vmatpush.msra.mxu0 0.0
    %1187 = vmatpush.msra.mxu0 0.0
    %1188 = vmatpush.msra.mxu0 0.0
    %1189 = vmatpush.msra.mxu0 %v1138
    %1190 = vmatpush.msra.mxu0 %v1137
    %1191 = vmatpush.msra.mxu0 %v1136
    %1192 = vmatpush.msra.mxu0 %v1135
    %1193 = vmatmul.f32.gmra.mxu0 %v1148
    %v1194 = vpop.f32.mrf.mxu0
    %v1195 = vadd.f32 %v1176, %v1194
    %1196 = vmatmul.f32.gmra.mxu0 %v1151
    %v1197 = vpop.f32.mrf.mxu0
    %v1198 = vadd.f32 %v1176, %v1197
    %1199 = vdwg.mxu0
    %v1200 = vperm.slane %v1145, 0
    %1201 = vmatpush.msra.mxu0 0.0
    %1202 = vmatpush.msra.mxu0 0.0
    %1203 = vmatpush.msra.mxu0 0.0
    %1204 = vmatpush.msra.mxu0 0.0
    %1205 = vmatpush.msra.mxu0 0.0
    %1206 = vmatpush.msra.mxu0 0.0
    %1207 = vmatpush.msra.mxu0 0.0
    %1208 = vmatpush.msra.mxu0 0.0
    %1209 = vmatpush.msra.mxu0 0.0
    %1210 = vmatpush.msra.mxu0 0.0
    %1211 = vmatpush.msra.mxu0 0.0
    %1212 = vmatpush.msra.mxu0 0.0
    %1213 = vmatpush.msra.mxu0 %v1144
    %1214 = vmatpush.msra.mxu0 %v1143
    %1215 = vmatpush.msra.mxu0 %v1142
    %1216 = vmatpush.msra.mxu0 %v1141
    %1217 = vmatmul.f32.gmra.mxu0 %v1148
    %v1218 = vpop.f32.mrf.mxu0
    %v1219 = vadd.f32 %v1200, %v1218
    %1220 = vmatmul.f32.gmra.mxu0 %v1151
    %v1221 = vpop.f32.mrf.mxu0
    %v1222 = vadd.f32 %v1200, %v1221
    %1223 = vdwg.mxu0
    %v1225 = vsel %vm176, %v1171, 0
    %v1228 = vsel %vm176, %v1195, 0
    %1230 = vmatpush.xpose.msra.mxu0 0.0
    %1231 = vmatpush.xpose.msra.mxu0 0.0
    %1232 = vmatpush.xpose.msra.mxu0 0.0
    %1233 = vmatpush.xpose.msra.mxu0 0.0
    %1234 = vmatpush.xpose.msra.mxu0 0.0
    %1235 = vmatpush.xpose.msra.mxu0 0.0
    %1236 = vmatpush.xpose.msra.mxu0 0.0
    %1237 = vmatpush.xpose.msra.mxu0 0.0
    %1238 = vmatpush.xpose.msra.mxu0 0.0
    %1239 = vmatpush.xpose.msra.mxu0 0.0
    %1240 = vmatpush.xpose.msra.mxu0 0.0
    %1241 = vmatpush.xpose.msra.mxu0 0.0
    %1242 = vmatpush.xpose.msra.mxu0 0.0
    %1243 = vmatpush.xpose.msra.mxu0 0.0
    %1244 = vmatpush.xpose.msra.mxu0 0.0
    %1245 = vmatpush.xpose.msra.mxu0 %v1228
    %1246 = vmatmul.f32.gmra.mxu0 %v1225
    %v1247 = vpop.f32.mrf.mxu0
    %v1248 = vadd.f32 0.0, %v1247
    %1249 = vdwg.mxu0
    %v1251 = vsel %vm176, %v1174, 0
    %v1254 = vsel %vm176, %v1198, 0
    %1256 = vmatpush.xpose.msra.mxu0 0.0
    %1257 = vmatpush.xpose.msra.mxu0 0.0
    %1258 = vmatpush.xpose.msra.mxu0 0.0
    %1259 = vmatpush.xpose.msra.mxu0 0.0
    %1260 = vmatpush.xpose.msra.mxu0 0.0
    %1261 = vmatpush.xpose.msra.mxu0 0.0
    %1262 = vmatpush.xpose.msra.mxu0 0.0
    %1263 = vmatpush.xpose.msra.mxu0 0.0
    %1264 = vmatpush.xpose.msra.mxu0 0.0
    %1265 = vmatpush.xpose.msra.mxu0 0.0
    %1266 = vmatpush.xpose.msra.mxu0 0.0
    %1267 = vmatpush.xpose.msra.mxu0 0.0
    %1268 = vmatpush.xpose.msra.mxu0 0.0
    %1269 = vmatpush.xpose.msra.mxu0 0.0
    %1270 = vmatpush.xpose.msra.mxu0 0.0
    %1271 = vmatpush.xpose.msra.mxu0 %v1254
    %1272 = vmatmul.f32.gmra.mxu0 %v1251
    %v1273 = vpop.f32.mrf.mxu0
    %v1274 = vadd.f32 0.0, %v1273
    %1275 = vdwg.mxu0
    %v1276 = vsel %vm176, %v1248, -inf
    %1277 = vmax.xlane.f32.xlu0 %v1276
    %v1278 = vpop.xlane.xlu0 %1277
    %v1279 = vsel %vm176, %v1274, -inf
    %1280 = vmax.xlane.f32.xlu0 %v1279
    %v1281 = vpop.xlane.xlu0 %1280
    %v1282 = vsub.f32 %v1248, %v1278
    %v1283 = vsub.f32 %v1274, %v1281
    %v1284 = vmul.f32 %v1282, 1.442695
    %v1285 = vpow.pop %v1284
    %v1286 = vmul.f32 %v1283, 1.442695
    %v1287 = vpow.pop %v1286
    %v1288 = vsel %vm176, %v1285, 0.0
    %1289 = vadd.xlane.f32.xlu0 %v1288
    %v1290 = vpop.xlane.xlu0 %1289
    %v1291 = vsel %vm176, %v1287, 0.0
    %1292 = vadd.xlane.f32.xlu0 %v1291
    %v1293 = vpop.xlane.xlu0 %1292
    %v1294 = vrcp.pop %v1290
    %v1295 = vrcp.pop %v1293
    %v1296 = vmul.f32 %v1285, %v1294
    %v1297 = vmul.f32 %v1287, %v1295
    %v1298 = vadd.f32 %v1296, 0.0
    %v1299 = vadd.f32 %v1297, 0.0
    %v1301 = vsel %vm176, %v1296, 0
    %1303 = vmatpush.msra.mxu0 0.0
    %1304 = vmatpush.msra.mxu0 0.0
    %1305 = vmatpush.msra.mxu0 0.0
    %1306 = vmatpush.msra.mxu0 0.0
    %1307 = vmatpush.msra.mxu0 0.0
    %1308 = vmatpush.msra.mxu0 0.0
    %1309 = vmatpush.msra.mxu0 0.0
    %1310 = vmatpush.msra.mxu0 0.0
    %1311 = vmatpush.msra.mxu0 0.0
    %1312 = vmatpush.msra.mxu0 0.0
    %1313 = vmatpush.msra.mxu0 0.0
    %1314 = vmatpush.msra.mxu0 0.0
    %1315 = vmatpush.msra.mxu0 0.0
    %1316 = vmatpush.msra.mxu0 0.0
    %1317 = vmatpush.msra.mxu0 0.0
    %1318 = vmatpush.msra.mxu0 %v1219
    %1319 = vmatmul.f32.gmra.mxu0 %v1301
    %v1320 = vpop.f32.mrf.mxu0
    %v1321 = vadd.f32 0.0, %v1320
    %1322 = vdwg.mxu0
    %v1324 = vsel %vm176, %v1297, 0
    %1326 = vmatpush.msra.mxu0 0.0
    %1327 = vmatpush.msra.mxu0 0.0
    %1328 = vmatpush.msra.mxu0 0.0
    %1329 = vmatpush.msra.mxu0 0.0
    %1330 = vmatpush.msra.mxu0 0.0
    %1331 = vmatpush.msra.mxu0 0.0
    %1332 = vmatpush.msra.mxu0 0.0
    %1333 = vmatpush.msra.mxu0 0.0
    %1334 = vmatpush.msra.mxu0 0.0
    %1335 = vmatpush.msra.mxu0 0.0
    %1336 = vmatpush.msra.mxu0 0.0
    %1337 = vmatpush.msra.mxu0 0.0
    %1338 = vmatpush.msra.mxu0 0.0
    %1339 = vmatpush.msra.mxu0 0.0
    %1340 = vmatpush.msra.mxu0 0.0
    %1341 = vmatpush.msra.mxu0 %v1222
    %1342 = vmatmul.f32.gmra.mxu0 %v1324
    %v1343 = vpop.f32.mrf.mxu0
    %v1344 = vadd.f32 0.0, %v1343
    %1345 = vdwg.mxu0
    %v1347 = vsel %vm176, %v1321, 0
    %v1350 = vsel %vm176, %v1344, 0
    %1352 = vmatpush.msra.mxu0 0.0
    %1353 = vmatpush.msra.mxu0 0.0
    %1354 = vmatpush.msra.mxu0 0.0
    %1355 = vmatpush.msra.mxu0 0.0
    %1356 = vmatpush.msra.mxu0 0.0
    %1357 = vmatpush.msra.mxu0 0.0
    %1358 = vmatpush.msra.mxu0 0.0
    %1359 = vmatpush.msra.mxu0 0.0
    %1360 = vmatpush.msra.mxu0 0.0
    %1361 = vmatpush.msra.mxu0 0.0
    %1362 = vmatpush.msra.mxu0 0.0
    %1363 = vmatpush.msra.mxu0 0.0
    %1364 = vmatpush.msra.mxu0 0.0
    %1365 = vmatpush.msra.mxu0 0.0
    %1366 = vmatpush.msra.mxu0 0.0
    %1367 = vmatpush.msra.mxu0 %v1121
    %1368 = vmatmul.f32.gmra.mxu0 %v1347
    %v1369 = vpop.f32.mrf.mxu0
    %v1370 = vadd.f32 0.0, %v1369
    %1371 = vmatmul.f32.gmra.mxu0 %v1350
    %v1372 = vpop.f32.mrf.mxu0
    %v1373 = vadd.f32 0.0, %v1372
    %1374 = vdwg.mxu0
    %v1375 = vperm.slane %v1125, 0
    %v1376 = vadd.f32 %v1375, %v1370
    %v1377 = vadd.f32 %v1375, %v1373
    %s1378 = scalar_lea.vmem %s1, 600
    %v1379 = vld [vmem:[%s1378] sm:$0xff]
    %v1380 = vld [vmem:[%s1378 + $0x8] sm:$0xff]
    %v1381 = vld [vmem:[%s1378 + $0x10] sm:$0xff]
    %v1382 = vld [vmem:[%s1378 + $0x18] sm:$0xff]
    %v1383 = vld [vmem:[%s1378 + $0x20] sm:$0x1]
    %s1384 = scalar_lea.vmem %s1, 640
    %v1385 = vld [vmem:[%s1384] sm:$0xff]
    %v1386 = vld [vmem:[%s1384 + $0x8] sm:$0xff]
    %v1387 = vld [vmem:[%s1384 + $0x10] sm:$0xff]
    %v1388 = vld [vmem:[%s1384 + $0x18] sm:$0xff]
    %v1389 = vld [vmem:[%s1384 + $0x20] sm:$0x1]
    %s1390 = scalar_lea.vmem %s1, 680
    %v1391 = vld [vmem:[%s1390] sm:$0xff]
    %v1392 = vld [vmem:[%s1390 + $0x8] sm:$0xff]
    %v1393 = vld [vmem:[%s1390 + $0x10] sm:$0xff]
    %v1394 = vld [vmem:[%s1390 + $0x18] sm:$0xff]
    %v1395 = vld [vmem:[%s1390 + $0x20] sm:$0x1]
    %v1396 = vperm.slane %v1383, 0
    %1397 = vmatpush.msra.mxu0 0.0
    %1398 = vmatpush.msra.mxu0 0.0
    %1399 = vmatpush.msra.mxu0 0.0
    %1400 = vmatpush.msra.mxu0 0.0
    %1401 = vmatpush.msra.mxu0 0.0
    %1402 = vmatpush.msra.mxu0 0.0
    %1403 = vmatpush.msra.mxu0 0.0
    %1404 = vmatpush.msra.mxu0 0.0
    %1405 = vmatpush.msra.mxu0 0.0
    %1406 = vmatpush.msra.mxu0 0.0
    %1407 = vmatpush.msra.mxu0 0.0
    %1408 = vmatpush.msra.mxu0 0.0
    %1409 = vmatpush.msra.mxu0 %v1382
    %1410 = vmatpush.msra.mxu0 %v1381
    %1411 = vmatpush.msra.mxu0 %v1380
    %1412 = vmatpush.msra.mxu0 %v1379
    %1413 = vmatmul.f32.gmra.mxu0 %v1148
    %v1414 = vpop.f32.mrf.mxu0
    %v1415 = vadd.f32 %v1396, %v1414
    %1416 = vmatmul.f32.gmra.mxu0 %v1151
    %v1417 = vpop.f32.mrf.mxu0
    %v1418 = vadd.f32 %v1396, %v1417
    %1419 = vdwg.mxu0
    %v1420 = vperm.slane %v1389, 0
    %1421 = vmatpush.msra.mxu0 0.0
    %1422 = vmatpush.msra.mxu0 0.0
    %1423 = vmatpush.msra.mxu0 0.0
    %1424 = vmatpush.msra.mxu0 0.0
    %1425 = vmatpush.msra.mxu0 0.0
    %1426 = vmatpush.msra.mxu0 0.0
    %1427 = vmatpush.msra.mxu0 0.0
    %1428 = vmatpush.msra.mxu0 0.0
    %1429 = vmatpush.msra.mxu0 0.0
    %1430 = vmatpush.msra.mxu0 0.0
    %1431 = vmatpush.msra.mxu0 0.0
    %1432 = vmatpush.msra.mxu0 0.0
    %1433 = vmatpush.msra.mxu0 %v1388
    %1434 = vmatpush.msra.mxu0 %v1387
    %1435 = vmatpush.msra.mxu0 %v1386
    %1436 = vmatpush.msra.mxu0 %v1385
    %1437 = vmatmul.f32.gmra.mxu0 %v1148
    %v1438 = vpop.f32.mrf.mxu0
    %v1439 = vadd.f32 %v1420, %v1438
    %1440 = vmatmul.f32.gmra.mxu0 %v1151
    %v1441 = vpop.f32.mrf.mxu0
    %v1442 = vadd.f32 %v1420, %v1441
    %1443 = vdwg.mxu0
    %v1444 = vperm.slane %v1395, 0
    %1445 = vmatpush.msra.mxu0 0.0
    %1446 = vmatpush.msra.mxu0 0.0
    %1447 = vmatpush.msra.mxu0 0.0
    %1448 = vmatpush.msra.mxu0 0.0
    %1449 = vmatpush.msra.mxu0 0.0
    %1450 = vmatpush.msra.mxu0 0.0
    %1451 = vmatpush.msra.mxu0 0.0
    %1452 = vmatpush.msra.mxu0 0.0
    %1453 = vmatpush.msra.mxu0 0.0
    %1454 = vmatpush.msra.mxu0 0.0
    %1455 = vmatpush.msra.mxu0 0.0
    %1456 = vmatpush.msra.mxu0 0.0
    %1457 = vmatpush.msra.mxu0 %v1394
    %1458 = vmatpush.msra.mxu0 %v1393
    %1459 = vmatpush.msra.mxu0 %v1392
    %1460 = vmatpush.msra.mxu0 %v1391
    %1461 = vmatmul.f32.gmra.mxu0 %v1148
    %v1462 = vpop.f32.mrf.mxu0
    %v1463 = vadd.f32 %v1444, %v1462
    %1464 = vmatmul.f32.gmra.mxu0 %v1151
    %v1465 = vpop.f32.mrf.mxu0
    %v1466 = vadd.f32 %v1444, %v1465
    %1467 = vdwg.mxu0
    %v1469 = vsel %vm176, %v1415, 0
    %v1472 = vsel %vm176, %v1439, 0
    %1474 = vmatpush.xpose.msra.mxu0 0.0
    %1475 = vmatpush.xpose.msra.mxu0 0.0
    %1476 = vmatpush.xpose.msra.mxu0 0.0
    %1477 = vmatpush.xpose.msra.mxu0 0.0
    %1478 = vmatpush.xpose.msra.mxu0 0.0
    %1479 = vmatpush.xpose.msra.mxu0 0.0
    %1480 = vmatpush.xpose.msra.mxu0 0.0
    %1481 = vmatpush.xpose.msra.mxu0 0.0
    %1482 = vmatpush.xpose.msra.mxu0 0.0
    %1483 = vmatpush.xpose.msra.mxu0 0.0
    %1484 = vmatpush.xpose.msra.mxu0 0.0
    %1485 = vmatpush.xpose.msra.mxu0 0.0
    %1486 = vmatpush.xpose.msra.mxu0 0.0
    %1487 = vmatpush.xpose.msra.mxu0 0.0
    %1488 = vmatpush.xpose.msra.mxu0 0.0
    %1489 = vmatpush.xpose.msra.mxu0 %v1472
    %1490 = vmatmul.f32.gmra.mxu0 %v1469
    %v1491 = vpop.f32.mrf.mxu0
    %v1492 = vadd.f32 0.0, %v1491
    %1493 = vdwg.mxu0
    %v1495 = vsel %vm176, %v1418, 0
    %v1498 = vsel %vm176, %v1442, 0
    %1500 = vmatpush.xpose.msra.mxu0 0.0
    %1501 = vmatpush.xpose.msra.mxu0 0.0
    %1502 = vmatpush.xpose.msra.mxu0 0.0
    %1503 = vmatpush.xpose.msra.mxu0 0.0
    %1504 = vmatpush.xpose.msra.mxu0 0.0
    %1505 = vmatpush.xpose.msra.mxu0 0.0
    %1506 = vmatpush.xpose.msra.mxu0 0.0
    %1507 = vmatpush.xpose.msra.mxu0 0.0
    %1508 = vmatpush.xpose.msra.mxu0 0.0
    %1509 = vmatpush.xpose.msra.mxu0 0.0
    %1510 = vmatpush.xpose.msra.mxu0 0.0
    %1511 = vmatpush.xpose.msra.mxu0 0.0
    %1512 = vmatpush.xpose.msra.mxu0 0.0
    %1513 = vmatpush.xpose.msra.mxu0 0.0
    %1514 = vmatpush.xpose.msra.mxu0 0.0
    %1515 = vmatpush.xpose.msra.mxu0 %v1498
    %1516 = vmatmul.f32.gmra.mxu0 %v1495
    %v1517 = vpop.f32.mrf.mxu0
    %v1518 = vadd.f32 0.0, %v1517
    %1519 = vdwg.mxu0
    %v1520 = vsel %vm176, %v1492, -inf
    %1521 = vmax.xlane.f32.xlu0 %v1520
    %v1522 = vpop.xlane.xlu0 %1521
    %v1523 = vsel %vm176, %v1518, -inf
    %1524 = vmax.xlane.f32.xlu0 %v1523
    %v1525 = vpop.xlane.xlu0 %1524
    %v1526 = vsub.f32 %v1492, %v1522
    %v1527 = vsub.f32 %v1518, %v1525
    %v1528 = vmul.f32 %v1526, 1.442695
    %v1529 = vpow.pop %v1528
    %v1530 = vmul.f32 %v1527, 1.442695
    %v1531 = vpow.pop %v1530
    %v1532 = vsel %vm176, %v1529, 0.0
    %1533 = vadd.xlane.f32.xlu0 %v1532
    %v1534 = vpop.xlane.xlu0 %1533
    %v1535 = vsel %vm176, %v1531, 0.0
    %1536 = vadd.xlane.f32.xlu0 %v1535
    %v1537 = vpop.xlane.xlu0 %1536
    %v1538 = vrcp.pop %v1534
    %v1539 = vrcp.pop %v1537
    %v1540 = vmul.f32 %v1529, %v1538
    %v1541 = vmul.f32 %v1531, %v1539
    %v1542 = vadd.f32 %v1298, %v1540
    %v1543 = vadd.f32 %v1299, %v1541
    %v1545 = vsel %vm176, %v1540, 0
    %1547 = vmatpush.msra.mxu0 0.0
    %1548 = vmatpush.msra.mxu0 0.0
    %1549 = vmatpush.msra.mxu0 0.0
    %1550 = vmatpush.msra.mxu0 0.0
    %1551 = vmatpush.msra.mxu0 0.0
    %1552 = vmatpush.msra.mxu0 0.0
    %1553 = vmatpush.msra.mxu0 0.0
    %1554 = vmatpush.msra.mxu0 0.0
    %1555 = vmatpush.msra.mxu0 0.0
    %1556 = vmatpush.msra.mxu0 0.0
    %1557 = vmatpush.msra.mxu0 0.0
    %1558 = vmatpush.msra.mxu0 0.0
    %1559 = vmatpush.msra.mxu0 0.0
    %1560 = vmatpush.msra.mxu0 0.0
    %1561 = vmatpush.msra.mxu0 0.0
    %1562 = vmatpush.msra.mxu0 %v1463
    %1563 = vmatmul.f32.gmra.mxu0 %v1545
    %v1564 = vpop.f32.mrf.mxu0
    %v1565 = vadd.f32 0.0, %v1564
    %1566 = vdwg.mxu0
    %v1568 = vsel %vm176, %v1541, 0
    %1570 = vmatpush.msra.mxu0 0.0
    %1571 = vmatpush.msra.mxu0 0.0
    %1572 = vmatpush.msra.mxu0 0.0
    %1573 = vmatpush.msra.mxu0 0.0
    %1574 = vmatpush.msra.mxu0 0.0
    %1575 = vmatpush.msra.mxu0 0.0
    %1576 = vmatpush.msra.mxu0 0.0
    %1577 = vmatpush.msra.mxu0 0.0
    %1578 = vmatpush.msra.mxu0 0.0
    %1579 = vmatpush.msra.mxu0 0.0
    %1580 = vmatpush.msra.mxu0 0.0
    %1581 = vmatpush.msra.mxu0 0.0
    %1582 = vmatpush.msra.mxu0 0.0
    %1583 = vmatpush.msra.mxu0 0.0
    %1584 = vmatpush.msra.mxu0 0.0
    %1585 = vmatpush.msra.mxu0 %v1466
    %1586 = vmatmul.f32.gmra.mxu0 %v1568
    %v1587 = vpop.f32.mrf.mxu0
    %v1588 = vadd.f32 0.0, %v1587
    %1589 = vdwg.mxu0
    %v1591 = vsel %vm176, %v1565, 0
    %v1594 = vsel %vm176, %v1588, 0
    %1596 = vmatpush.msra.mxu0 0.0
    %1597 = vmatpush.msra.mxu0 0.0
    %1598 = vmatpush.msra.mxu0 0.0
    %1599 = vmatpush.msra.mxu0 0.0
    %1600 = vmatpush.msra.mxu0 0.0
    %1601 = vmatpush.msra.mxu0 0.0
    %1602 = vmatpush.msra.mxu0 0.0
    %1603 = vmatpush.msra.mxu0 0.0
    %1604 = vmatpush.msra.mxu0 0.0
    %1605 = vmatpush.msra.mxu0 0.0
    %1606 = vmatpush.msra.mxu0 0.0
    %1607 = vmatpush.msra.mxu0 0.0
    %1608 = vmatpush.msra.mxu0 0.0
    %1609 = vmatpush.msra.mxu0 0.0
    %1610 = vmatpush.msra.mxu0 0.0
    %1611 = vmatpush.msra.mxu0 %v1122
    %1612 = vmatmul.f32.gmra.mxu0 %v1591
    %v1613 = vpop.f32.mrf.mxu0
    %v1614 = vadd.f32 0.0, %v1613
    %1615 = vmatmul.f32.gmra.mxu0 %v1594
    %v1616 = vpop.f32.mrf.mxu0
    %v1617 = vadd.f32 0.0, %v1616
    %1618 = vdwg.mxu0
    %v1619 = vadd.f32 %v1376, %v1614
    %v1620 = vadd.f32 %v1377, %v1617
    %s1621 = scalar_lea.vmem %s1, 720
    %v1622 = vld [vmem:[%s1621] sm:$0xff]
    %v1623 = vld [vmem:[%s1621 + $0x8] sm:$0xff]
    %v1624 = vld [vmem:[%s1621 + $0x10] sm:$0xff]
    %v1625 = vld [vmem:[%s1621 + $0x18] sm:$0xff]
    %v1626 = vld [vmem:[%s1621 + $0x20] sm:$0x1]
    %s1627 = scalar_lea.vmem %s1, 760
    %v1628 = vld [vmem:[%s1627] sm:$0xff]
    %v1629 = vld [vmem:[%s1627 + $0x8] sm:$0xff]
    %v1630 = vld [vmem:[%s1627 + $0x10] sm:$0xff]
    %v1631 = vld [vmem:[%s1627 + $0x18] sm:$0xff]
    %v1632 = vld [vmem:[%s1627 + $0x20] sm:$0x1]
    %s1633 = scalar_lea.vmem %s1, 800
    %v1634 = vld [vmem:[%s1633] sm:$0xff]
    %v1635 = vld [vmem:[%s1633 + $0x8] sm:$0xff]
    %v1636 = vld [vmem:[%s1633 + $0x10] sm:$0xff]
    %v1637 = vld [vmem:[%s1633 + $0x18] sm:$0xff]
    %v1638 = vld [vmem:[%s1633 + $0x20] sm:$0x1]
    %v1639 = vperm.slane %v1626, 0
    %1640 = vmatpush.msra.mxu0 0.0
    %1641 = vmatpush.msra.mxu0 0.0
    %1642 = vmatpush.msra.mxu0 0.0
    %1643 = vmatpush.msra.mxu0 0.0
    %1644 = vmatpush.msra.mxu0 0.0
    %1645 = vmatpush.msra.mxu0 0.0
    %1646 = vmatpush.msra.mxu0 0.0
    %1647 = vmatpush.msra.mxu0 0.0
    %1648 = vmatpush.msra.mxu0 0.0
    %1649 = vmatpush.msra.mxu0 0.0
    %1650 = vmatpush.msra.mxu0 0.0
    %1651 = vmatpush.msra.mxu0 0.0
    %1652 = vmatpush.msra.mxu0 %v1625
    %1653 = vmatpush.msra.mxu0 %v1624
    %1654 = vmatpush.msra.mxu0 %v1623
    %1655 = vmatpush.msra.mxu0 %v1622
    %1656 = vmatmul.f32.gmra.mxu0 %v1148
    %v1657 = vpop.f32.mrf.mxu0
    %v1658 = vadd.f32 %v1639, %v1657
    %1659 = vmatmul.f32.gmra.mxu0 %v1151
    %v1660 = vpop.f32.mrf.mxu0
    %v1661 = vadd.f32 %v1639, %v1660
    %1662 = vdwg.mxu0
    %v1663 = vperm.slane %v1632, 0
    %1664 = vmatpush.msra.mxu0 0.0
    %1665 = vmatpush.msra.mxu0 0.0
    %1666 = vmatpush.msra.mxu0 0.0
    %1667 = vmatpush.msra.mxu0 0.0
    %1668 = vmatpush.msra.mxu0 0.0
    %1669 = vmatpush.msra.mxu0 0.0
    %1670 = vmatpush.msra.mxu0 0.0
    %1671 = vmatpush.msra.mxu0 0.0
    %1672 = vmatpush.msra.mxu0 0.0
    %1673 = vmatpush.msra.mxu0 0.0
    %1674 = vmatpush.msra.mxu0 0.0
    %1675 = vmatpush.msra.mxu0 0.0
    %1676 = vmatpush.msra.mxu0 %v1631
    %1677 = vmatpush.msra.mxu0 %v1630
    %1678 = vmatpush.msra.mxu0 %v1629
    %1679 = vmatpush.msra.mxu0 %v1628
    %1680 = vmatmul.f32.gmra.mxu0 %v1148
    %v1681 = vpop.f32.mrf.mxu0
    %v1682 = vadd.f32 %v1663, %v1681
    %1683 = vmatmul.f32.gmra.mxu0 %v1151
    %v1684 = vpop.f32.mrf.mxu0
    %v1685 = vadd.f32 %v1663, %v1684
    %1686 = vdwg.mxu0
    %v1687 = vperm.slane %v1638, 0
    %1688 = vmatpush.msra.mxu0 0.0
    %1689 = vmatpush.msra.mxu0 0.0
    %1690 = vmatpush.msra.mxu0 0.0
    %1691 = vmatpush.msra.mxu0 0.0
    %1692 = vmatpush.msra.mxu0 0.0
    %1693 = vmatpush.msra.mxu0 0.0
    %1694 = vmatpush.msra.mxu0 0.0
    %1695 = vmatpush.msra.mxu0 0.0
    %1696 = vmatpush.msra.mxu0 0.0
    %1697 = vmatpush.msra.mxu0 0.0
    %1698 = vmatpush.msra.mxu0 0.0
    %1699 = vmatpush.msra.mxu0 0.0
    %1700 = vmatpush.msra.mxu0 %v1637
    %1701 = vmatpush.msra.mxu0 %v1636
    %1702 = vmatpush.msra.mxu0 %v1635
    %1703 = vmatpush.msra.mxu0 %v1634
    %1704 = vmatmul.f32.gmra.mxu0 %v1148
    %v1705 = vpop.f32.mrf.mxu0
    %v1706 = vadd.f32 %v1687, %v1705
    %1707 = vmatmul.f32.gmra.mxu0 %v1151
    %v1708 = vpop.f32.mrf.mxu0
    %v1709 = vadd.f32 %v1687, %v1708
    %1710 = vdwg.mxu0
    %v1712 = vsel %vm176, %v1658, 0
    %v1715 = vsel %vm176, %v1682, 0
    %1717 = vmatpush.xpose.msra.mxu0 0.0
    %1718 = vmatpush.xpose.msra.mxu0 0.0
    %1719 = vmatpush.xpose.msra.mxu0 0.0
    %1720 = vmatpush.xpose.msra.mxu0 0.0
    %1721 = vmatpush.xpose.msra.mxu0 0.0
    %1722 = vmatpush.xpose.msra.mxu0 0.0
    %1723 = vmatpush.xpose.msra.mxu0 0.0
    %1724 = vmatpush.xpose.msra.mxu0 0.0
    %1725 = vmatpush.xpose.msra.mxu0 0.0
    %1726 = vmatpush.xpose.msra.mxu0 0.0
    %1727 = vmatpush.xpose.msra.mxu0 0.0
    %1728 = vmatpush.xpose.msra.mxu0 0.0
    %1729 = vmatpush.xpose.msra.mxu0 0.0
    %1730 = vmatpush.xpose.msra.mxu0 0.0
    %1731 = vmatpush.xpose.msra.mxu0 0.0
    %1732 = vmatpush.xpose.msra.mxu0 %v1715
    %1733 = vmatmul.f32.gmra.mxu0 %v1712
    %v1734 = vpop.f32.mrf.mxu0
    %v1735 = vadd.f32 0.0, %v1734
    %1736 = vdwg.mxu0
    %v1738 = vsel %vm176, %v1661, 0
    %v1741 = vsel %vm176, %v1685, 0
    %1743 = vmatpush.xpose.msra.mxu0 0.0
    %1744 = vmatpush.xpose.msra.mxu0 0.0
    %1745 = vmatpush.xpose.msra.mxu0 0.0
    %1746 = vmatpush.xpose.msra.mxu0 0.0
    %1747 = vmatpush.xpose.msra.mxu0 0.0
    %1748 = vmatpush.xpose.msra.mxu0 0.0
    %1749 = vmatpush.xpose.msra.mxu0 0.0
    %1750 = vmatpush.xpose.msra.mxu0 0.0
    %1751 = vmatpush.xpose.msra.mxu0 0.0
    %1752 = vmatpush.xpose.msra.mxu0 0.0
    %1753 = vmatpush.xpose.msra.mxu0 0.0
    %1754 = vmatpush.xpose.msra.mxu0 0.0
    %1755 = vmatpush.xpose.msra.mxu0 0.0
    %1756 = vmatpush.xpose.msra.mxu0 0.0
    %1757 = vmatpush.xpose.msra.mxu0 0.0
    %1758 = vmatpush.xpose.msra.mxu0 %v1741
    %1759 = vmatmul.f32.gmra.mxu0 %v1738
    %v1760 = vpop.f32.mrf.mxu0
    %v1761 = vadd.f32 0.0, %v1760
    %1762 = vdwg.mxu0
    %v1763 = vsel %vm176, %v1735, -inf
    %1764 = vmax.xlane.f32.xlu0 %v1763
    %v1765 = vpop.xlane.xlu0 %1764
    %v1766 = vsel %vm176, %v1761, -inf
    %1767 = vmax.xlane.f32.xlu0 %v1766
    %v1768 = vpop.xlane.xlu0 %1767
    %v1769 = vsub.f32 %v1735, %v1765
    %v1770 = vsub.f32 %v1761, %v1768
    %v1771 = vmul.f32 %v1769, 1.442695
    %v1772 = vpow.pop %v1771
    %v1773 = vmul.f32 %v1770, 1.442695
    %v1774 = vpow.pop %v1773
    %v1775 = vsel %vm176, %v1772, 0.0
    %1776 = vadd.xlane.f32.xlu0 %v1775
    %v1777 = vpop.xlane.xlu0 %1776
    %v1778 = vsel %vm176, %v1774, 0.0
    %1779 = vadd.xlane.f32.xlu0 %v1778
    %v1780 = vpop.xlane.xlu0 %1779
    %v1781 = vrcp.pop %v1777
    %v1782 = vrcp.pop %v1780
    %v1783 = vmul.f32 %v1772, %v1781
    %v1784 = vmul.f32 %v1774, %v1782
    %v1785 = vadd.f32 %v1542, %v1783
    %v1786 = vadd.f32 %v1543, %v1784
    %v1788 = vsel %vm176, %v1783, 0
    %1790 = vmatpush.msra.mxu0 0.0
    %1791 = vmatpush.msra.mxu0 0.0
    %1792 = vmatpush.msra.mxu0 0.0
    %1793 = vmatpush.msra.mxu0 0.0
    %1794 = vmatpush.msra.mxu0 0.0
    %1795 = vmatpush.msra.mxu0 0.0
    %1796 = vmatpush.msra.mxu0 0.0
    %1797 = vmatpush.msra.mxu0 0.0
    %1798 = vmatpush.msra.mxu0 0.0
    %1799 = vmatpush.msra.mxu0 0.0
    %1800 = vmatpush.msra.mxu0 0.0
    %1801 = vmatpush.msra.mxu0 0.0
    %1802 = vmatpush.msra.mxu0 0.0
    %1803 = vmatpush.msra.mxu0 0.0
    %1804 = vmatpush.msra.mxu0 0.0
    %1805 = vmatpush.msra.mxu0 %v1706
    %1806 = vmatmul.f32.gmra.mxu0 %v1788
    %v1807 = vpop.f32.mrf.mxu0
    %v1808 = vadd.f32 0.0, %v1807
    %1809 = vdwg.mxu0
    %v1811 = vsel %vm176, %v1784, 0
    %1813 = vmatpush.msra.mxu0 0.0
    %1814 = vmatpush.msra.mxu0 0.0
    %1815 = vmatpush.msra.mxu0 0.0
    %1816 = vmatpush.msra.mxu0 0.0
    %1817 = vmatpush.msra.mxu0 0.0
    %1818 = vmatpush.msra.mxu0 0.0
    %1819 = vmatpush.msra.mxu0 0.0
    %1820 = vmatpush.msra.mxu0 0.0
    %1821 = vmatpush.msra.mxu0 0.0
    %1822 = vmatpush.msra.mxu0 0.0
    %1823 = vmatpush.msra.mxu0 0.0
    %1824 = vmatpush.msra.mxu0 0.0
    %1825 = vmatpush.msra.mxu0 0.0
    %1826 = vmatpush.msra.mxu0 0.0
    %1827 = vmatpush.msra.mxu0 0.0
    %1828 = vmatpush.msra.mxu0 %v1709
    %1829 = vmatmul.f32.gmra.mxu0 %v1811
    %v1830 = vpop.f32.mrf.mxu0
    %v1831 = vadd.f32 0.0, %v1830
    %1832 = vdwg.mxu0
    %v1834 = vsel %vm176, %v1808, 0
    %v1837 = vsel %vm176, %v1831, 0
    %1839 = vmatpush.msra.mxu0 0.0
    %1840 = vmatpush.msra.mxu0 0.0
    %1841 = vmatpush.msra.mxu0 0.0
    %1842 = vmatpush.msra.mxu0 0.0
    %1843 = vmatpush.msra.mxu0 0.0
    %1844 = vmatpush.msra.mxu0 0.0
    %1845 = vmatpush.msra.mxu0 0.0
    %1846 = vmatpush.msra.mxu0 0.0
    %1847 = vmatpush.msra.mxu0 0.0
    %1848 = vmatpush.msra.mxu0 0.0
    %1849 = vmatpush.msra.mxu0 0.0
    %1850 = vmatpush.msra.mxu0 0.0
    %1851 = vmatpush.msra.mxu0 0.0
    %1852 = vmatpush.msra.mxu0 0.0
    %1853 = vmatpush.msra.mxu0 0.0
    %1854 = vmatpush.msra.mxu0 %v1123
    %1855 = vmatmul.f32.gmra.mxu0 %v1834
    %v1856 = vpop.f32.mrf.mxu0
    %v1857 = vadd.f32 0.0, %v1856
    %1858 = vmatmul.f32.gmra.mxu0 %v1837
    %v1859 = vpop.f32.mrf.mxu0
    %v1860 = vadd.f32 0.0, %v1859
    %1861 = vdwg.mxu0
    %v1862 = vadd.f32 %v1619, %v1857
    %v1863 = vadd.f32 %v1620, %v1860
    %s1864 = scalar_lea.vmem %s1, 840
    %v1865 = vld [vmem:[%s1864] sm:$0xff]
    %v1866 = vld [vmem:[%s1864 + $0x8] sm:$0xff]
    %v1867 = vld [vmem:[%s1864 + $0x10] sm:$0xff]
    %v1868 = vld [vmem:[%s1864 + $0x18] sm:$0xff]
    %v1869 = vld [vmem:[%s1864 + $0x20] sm:$0x1]
    %s1870 = scalar_lea.vmem %s1, 880
    %v1871 = vld [vmem:[%s1870] sm:$0xff]
    %v1872 = vld [vmem:[%s1870 + $0x8] sm:$0xff]
    %v1873 = vld [vmem:[%s1870 + $0x10] sm:$0xff]
    %v1874 = vld [vmem:[%s1870 + $0x18] sm:$0xff]
    %v1875 = vld [vmem:[%s1870 + $0x20] sm:$0x1]
    %s1876 = scalar_lea.vmem %s1, 920
    %v1877 = vld [vmem:[%s1876] sm:$0xff]
    %v1878 = vld [vmem:[%s1876 + $0x8] sm:$0xff]
    %v1879 = vld [vmem:[%s1876 + $0x10] sm:$0xff]
    %v1880 = vld [vmem:[%s1876 + $0x18] sm:$0xff]
    %v1881 = vld [vmem:[%s1876 + $0x20] sm:$0x1]
    %v1882 = vperm.slane %v1869, 0
    %1883 = vmatpush.msra.mxu0 0.0
    %1884 = vmatpush.msra.mxu0 0.0
    %1885 = vmatpush.msra.mxu0 0.0
    %1886 = vmatpush.msra.mxu0 0.0
    %1887 = vmatpush.msra.mxu0 0.0
    %1888 = vmatpush.msra.mxu0 0.0
    %1889 = vmatpush.msra.mxu0 0.0
    %1890 = vmatpush.msra.mxu0 0.0
    %1891 = vmatpush.msra.mxu0 0.0
    %1892 = vmatpush.msra.mxu0 0.0
    %1893 = vmatpush.msra.mxu0 0.0
    %1894 = vmatpush.msra.mxu0 0.0
    %1895 = vmatpush.msra.mxu0 %v1868
    %1896 = vmatpush.msra.mxu0 %v1867
    %1897 = vmatpush.msra.mxu0 %v1866
    %1898 = vmatpush.msra.mxu0 %v1865
    %1899 = vmatmul.f32.gmra.mxu0 %v1148
    %v1900 = vpop.f32.mrf.mxu0
    %v1901 = vadd.f32 %v1882, %v1900
    %1902 = vmatmul.f32.gmra.mxu0 %v1151
    %v1903 = vpop.f32.mrf.mxu0
    %v1904 = vadd.f32 %v1882, %v1903
    %1905 = vdwg.mxu0
    %v1906 = vperm.slane %v1875, 0
    %1907 = vmatpush.msra.mxu0 0.0
    %1908 = vmatpush.msra.mxu0 0.0
    %1909 = vmatpush.msra.mxu0 0.0
    %1910 = vmatpush.msra.mxu0 0.0
    %1911 = vmatpush.msra.mxu0 0.0
    %1912 = vmatpush.msra.mxu0 0.0
    %1913 = vmatpush.msra.mxu0 0.0
    %1914 = vmatpush.msra.mxu0 0.0
    %1915 = vmatpush.msra.mxu0 0.0
    %1916 = vmatpush.msra.mxu0 0.0
    %1917 = vmatpush.msra.mxu0 0.0
    %1918 = vmatpush.msra.mxu0 0.0
    %1919 = vmatpush.msra.mxu0 %v1874
    %1920 = vmatpush.msra.mxu0 %v1873
    %1921 = vmatpush.msra.mxu0 %v1872
    %1922 = vmatpush.msra.mxu0 %v1871
    %1923 = vmatmul.f32.gmra.mxu0 %v1148
    %v1924 = vpop.f32.mrf.mxu0
    %v1925 = vadd.f32 %v1906, %v1924
    %1926 = vmatmul.f32.gmra.mxu0 %v1151
    %v1927 = vpop.f32.mrf.mxu0
    %v1928 = vadd.f32 %v1906, %v1927
    %1929 = vdwg.mxu0
    %v1930 = vperm.slane %v1881, 0
    %1931 = vmatpush.msra.mxu0 0.0
    %1932 = vmatpush.msra.mxu0 0.0
    %1933 = vmatpush.msra.mxu0 0.0
    %1934 = vmatpush.msra.mxu0 0.0
    %1935 = vmatpush.msra.mxu0 0.0
    %1936 = vmatpush.msra.mxu0 0.0
    %1937 = vmatpush.msra.mxu0 0.0
    %1938 = vmatpush.msra.mxu0 0.0
    %1939 = vmatpush.msra.mxu0 0.0
    %1940 = vmatpush.msra.mxu0 0.0
    %1941 = vmatpush.msra.mxu0 0.0
    %1942 = vmatpush.msra.mxu0 0.0
    %1943 = vmatpush.msra.mxu0 %v1880
    %1944 = vmatpush.msra.mxu0 %v1879
    %1945 = vmatpush.msra.mxu0 %v1878
    %1946 = vmatpush.msra.mxu0 %v1877
    %1947 = vmatmul.f32.gmra.mxu0 %v1148
    %v1948 = vpop.f32.mrf.mxu0
    %v1949 = vadd.f32 %v1930, %v1948
    %1950 = vmatmul.f32.gmra.mxu0 %v1151
    %v1951 = vpop.f32.mrf.mxu0
    %v1952 = vadd.f32 %v1930, %v1951
    %1953 = vdwg.mxu0
    %v1955 = vsel %vm176, %v1901, 0
    %v1958 = vsel %vm176, %v1925, 0
    %1960 = vmatpush.xpose.msra.mxu0 0.0
    %1961 = vmatpush.xpose.msra.mxu0 0.0
    %1962 = vmatpush.xpose.msra.mxu0 0.0
    %1963 = vmatpush.xpose.msra.mxu0 0.0
    %1964 = vmatpush.xpose.msra.mxu0 0.0
    %1965 = vmatpush.xpose.msra.mxu0 0.0
    %1966 = vmatpush.xpose.msra.mxu0 0.0
    %1967 = vmatpush.xpose.msra.mxu0 0.0
    %1968 = vmatpush.xpose.msra.mxu0 0.0
    %1969 = vmatpush.xpose.msra.mxu0 0.0
    %1970 = vmatpush.xpose.msra.mxu0 0.0
    %1971 = vmatpush.xpose.msra.mxu0 0.0
    %1972 = vmatpush.xpose.msra.mxu0 0.0
    %1973 = vmatpush.xpose.msra.mxu0 0.0
    %1974 = vmatpush.xpose.msra.mxu0 0.0
    %1975 = vmatpush.xpose.msra.mxu0 %v1958
    %1976 = vmatmul.f32.gmra.mxu0 %v1955
    %v1977 = vpop.f32.mrf.mxu0
    %v1978 = vadd.f32 0.0, %v1977
    %1979 = vdwg.mxu0
    %v1981 = vsel %vm176, %v1904, 0
    %v1984 = vsel %vm176, %v1928, 0
    %1986 = vmatpush.xpose.msra.mxu0 0.0
    %1987 = vmatpush.xpose.msra.mxu0 0.0
    %1988 = vmatpush.xpose.msra.mxu0 0.0
    %1989 = vmatpush.xpose.msra.mxu0 0.0
    %1990 = vmatpush.xpose.msra.mxu0 0.0
    %1991 = vmatpush.xpose.msra.mxu0 0.0
    %1992 = vmatpush.xpose.msra.mxu0 0.0
    %1993 = vmatpush.xpose.msra.mxu0 0.0
    %1994 = vmatpush.xpose.msra.mxu0 0.0
    %1995 = vmatpush.xpose.msra.mxu0 0.0
    %1996 = vmatpush.xpose.msra.mxu0 0.0
    %1997 = vmatpush.xpose.msra.mxu0 0.0
    %1998 = vmatpush.xpose.msra.mxu0 0.0
    %1999 = vmatpush.xpose.msra.mxu0 0.0
    %2000 = vmatpush.xpose.msra.mxu0 0.0
    %2001 = vmatpush.xpose.msra.mxu0 %v1984
    %2002 = vmatmul.f32.gmra.mxu0 %v1981
    %v2003 = vpop.f32.mrf.mxu0
    %v2004 = vadd.f32 0.0, %v2003
    %2005 = vdwg.mxu0
    %v2006 = vsel %vm176, %v1978, -inf
    %2007 = vmax.xlane.f32.xlu0 %v2006
    %v2008 = vpop.xlane.xlu0 %2007
    %v2009 = vsel %vm176, %v2004, -inf
    %2010 = vmax.xlane.f32.xlu0 %v2009
    %v2011 = vpop.xlane.xlu0 %2010
    %v2012 = vsub.f32 %v1978, %v2008
    %v2013 = vsub.f32 %v2004, %v2011
    %v2014 = vmul.f32 %v2012, 1.442695
    %v2015 = vpow.pop %v2014
    %v2016 = vmul.f32 %v2013, 1.442695
    %v2017 = vpow.pop %v2016
    %v2018 = vsel %vm176, %v2015, 0.0
    %2019 = vadd.xlane.f32.xlu0 %v2018
    %v2020 = vpop.xlane.xlu0 %2019
    %v2021 = vsel %vm176, %v2017, 0.0
    %2022 = vadd.xlane.f32.xlu0 %v2021
    %v2023 = vpop.xlane.xlu0 %2022
    %v2024 = vrcp.pop %v2020
    %v2025 = vrcp.pop %v2023
    %v2026 = vmul.f32 %v2015, %v2024
    %v2027 = vmul.f32 %v2017, %v2025
    %v2028 = vadd.f32 %v1785, %v2026
    %v2029 = vadd.f32 %v1786, %v2027
    %v2031 = vsel %vm176, %v2026, 0
    %2033 = vmatpush.msra.mxu0 0.0
    %2034 = vmatpush.msra.mxu0 0.0
    %2035 = vmatpush.msra.mxu0 0.0
    %2036 = vmatpush.msra.mxu0 0.0
    %2037 = vmatpush.msra.mxu0 0.0
    %2038 = vmatpush.msra.mxu0 0.0
    %2039 = vmatpush.msra.mxu0 0.0
    %2040 = vmatpush.msra.mxu0 0.0
    %2041 = vmatpush.msra.mxu0 0.0
    %2042 = vmatpush.msra.mxu0 0.0
    %2043 = vmatpush.msra.mxu0 0.0
    %2044 = vmatpush.msra.mxu0 0.0
    %2045 = vmatpush.msra.mxu0 0.0
    %2046 = vmatpush.msra.mxu0 0.0
    %2047 = vmatpush.msra.mxu0 0.0
    %2048 = vmatpush.msra.mxu0 %v1949
    %2049 = vmatmul.f32.gmra.mxu0 %v2031
    %v2050 = vpop.f32.mrf.mxu0
    %v2051 = vadd.f32 0.0, %v2050
    %2052 = vdwg.mxu0
    %v2054 = vsel %vm176, %v2027, 0
    %2056 = vmatpush.msra.mxu0 0.0
    %2057 = vmatpush.msra.mxu0 0.0
    %2058 = vmatpush.msra.mxu0 0.0
    %2059 = vmatpush.msra.mxu0 0.0
    %2060 = vmatpush.msra.mxu0 0.0
    %2061 = vmatpush.msra.mxu0 0.0
    %2062 = vmatpush.msra.mxu0 0.0
    %2063 = vmatpush.msra.mxu0 0.0
    %2064 = vmatpush.msra.mxu0 0.0
    %2065 = vmatpush.msra.mxu0 0.0
    %2066 = vmatpush.msra.mxu0 0.0
    %2067 = vmatpush.msra.mxu0 0.0
    %2068 = vmatpush.msra.mxu0 0.0
    %2069 = vmatpush.msra.mxu0 0.0
    %2070 = vmatpush.msra.mxu0 0.0
    %2071 = vmatpush.msra.mxu0 %v1952
    %2072 = vmatmul.f32.gmra.mxu0 %v2054
    %v2073 = vpop.f32.mrf.mxu0
    %v2074 = vadd.f32 0.0, %v2073
    %2075 = vdwg.mxu0
    %v2077 = vsel %vm176, %v2051, 0
    %v2080 = vsel %vm176, %v2074, 0
    %2082 = vmatpush.msra.mxu0 0.0
    %2083 = vmatpush.msra.mxu0 0.0
    %2084 = vmatpush.msra.mxu0 0.0
    %2085 = vmatpush.msra.mxu0 0.0
    %2086 = vmatpush.msra.mxu0 0.0
    %2087 = vmatpush.msra.mxu0 0.0
    %2088 = vmatpush.msra.mxu0 0.0
    %2089 = vmatpush.msra.mxu0 0.0
    %2090 = vmatpush.msra.mxu0 0.0
    %2091 = vmatpush.msra.mxu0 0.0
    %2092 = vmatpush.msra.mxu0 0.0
    %2093 = vmatpush.msra.mxu0 0.0
    %2094 = vmatpush.msra.mxu0 0.0
    %2095 = vmatpush.msra.mxu0 0.0
    %2096 = vmatpush.msra.mxu0 0.0
    %2097 = vmatpush.msra.mxu0 %v1124
    %2098 = vmatmul.f32.gmra.mxu0 %v2077
    %v2099 = vpop.f32.mrf.mxu0
    %v2100 = vadd.f32 0.0, %v2099
    %2101 = vmatmul.f32.gmra.mxu0 %v2080
    %v2102 = vpop.f32.mrf.mxu0
    %v2103 = vadd.f32 0.0, %v2102
    %2104 = vdwg.mxu0
    %v2105 = vadd.f32 %v1862, %v2100
    %v2106 = vadd.f32 %v1863, %v2103
    %v2107 = vmul.f32 %v2028, 0.25
    %v2108 = vmul.f32 %v2029, 0.25
    %v2109 = vadd.f32 %v1119, %v2105
    %v2110 = vadd.f32 %v1120, %v2106
    %v2111 = vsel %vm98, %v2109, 0.0
    %2112 = vadd.xlane.f32.xlu0 %v2111
    %v2113 = vpop.xlane.xlu0 %2112
    %v2114 = vsel %vm98, %v2110, 0.0
    %2115 = vadd.xlane.f32.xlu0 %v2114
    %v2116 = vpop.xlane.xlu0 %2115
    %v2117 = vmul.f32 %v2113, %v1076
    %v2118 = vmul.f32 %v2116, %v1076
    %v2119 = vsub.f32 %v2109, %v2117
    %v2120 = vsub.f32 %v2110, %v2118
    %v2121 = vmul.f32 %v2119, %v2119
    %v2122 = vmul.f32 %v2120, %v2120
    %v2123 = vsel %vm98, %v2121, 0.0
    %2124 = vadd.xlane.f32.xlu0 %v2123
    %v2125 = vpop.xlane.xlu0 %2124
    %v2126 = vsel %vm98, %v2122, 0.0
    %2127 = vadd.xlane.f32.xlu0 %v2126
    %v2128 = vpop.xlane.xlu0 %2127
    %v2129 = vmul.f32 %v2125, %v1076
    %v2130 = vmul.f32 %v2128, %v1076
    %v2131 = vadd.f32 %v2129, 1e-05
    %v2132 = vadd.f32 %v2130, 1e-05
    %v2133 = vrsqrt.pop %v2131
    %v2134 = vmul.f32 %v2133, %v2131
    %v2135 = vmul.f32 %v2134, %v2133
    %v2136 = vmul.f32 0.5, %v2135
    %v2137 = vsub.f32 1.5, %v2136
    %v2138 = vmul.f32 %v2133, %v2137
    %vm2139 = vweird.f32 %v2131
    %vm2140 = vweird.f32 %v2133
    %vm2141 = vmor %vm2139, %vm2140
    %v2142 = vsel %vm2141, %v2133, %v2138
    %v2143 = vrsqrt.pop %v2132
    %v2144 = vmul.f32 %v2143, %v2132
    %v2145 = vmul.f32 %v2144, %v2143
    %v2146 = vmul.f32 0.5, %v2145
    %v2147 = vsub.f32 1.5, %v2146
    %v2148 = vmul.f32 %v2143, %v2147
    %vm2149 = vweird.f32 %v2132
    %vm2150 = vweird.f32 %v2143
    %vm2151 = vmor %vm2149, %vm2150
    %v2152 = vsel %vm2151, %v2143, %v2148
    %v2153 = vmul.f32 %v2119, %v2142
    %v2154 = vmul.f32 %v2120, %v2152
    %v2155 = vperm.slane %v1126, 0
    %v2156 = vmul.f32 %v2153, %v2155
    %v2157 = vmul.f32 %v2154, %v2155
    %v2158 = vperm.slane %v1127, 0
    %v2159 = vadd.f32 %v2156, %v2158
    %v2160 = vadd.f32 %v2157, %v2158
    %v2161 = vld [vmem:[%s2 + $0x78] sm:$0xff]
    %v2162 = vld [vmem:[%s2 + $0x80] sm:$0xff]
    %v2163 = vld [vmem:[%s2 + $0x88] sm:$0xff]
    %v2164 = vld [vmem:[%s2 + $0x90] sm:$0xff]
    %v2165 = vld [vmem:[%s2 + $0x98] sm:$0x1]
    %v2166 = vld [vmem:[%s2 + $0x99] sm:$0x1]
    %v2167 = vld [vmem:[%s2 + $0x9a] sm:$0x1]
    %s2168 = scalar_lea.vmem %s1, 960
    %v2169 = vld [vmem:[%s2168] sm:$0xff]
    %v2170 = vld [vmem:[%s2168 + $0x8] sm:$0xff]
    %v2171 = vld [vmem:[%s2168 + $0x10] sm:$0xff]
    %v2172 = vld [vmem:[%s2168 + $0x18] sm:$0xff]
    %v2173 = vld [vmem:[%s2168 + $0x20] sm:$0x1]
    %s2174 = scalar_lea.vmem %s1, 1000
    %v2175 = vld [vmem:[%s2174] sm:$0xff]
    %v2176 = vld [vmem:[%s2174 + $0x8] sm:$0xff]
    %v2177 = vld [vmem:[%s2174 + $0x10] sm:$0xff]
    %v2178 = vld [vmem:[%s2174 + $0x18] sm:$0xff]
    %v2179 = vld [vmem:[%s2174 + $0x20] sm:$0x1]
    %s2180 = scalar_lea.vmem %s1, 1040
    %v2181 = vld [vmem:[%s2180] sm:$0xff]
    %v2182 = vld [vmem:[%s2180 + $0x8] sm:$0xff]
    %v2183 = vld [vmem:[%s2180 + $0x10] sm:$0xff]
    %v2184 = vld [vmem:[%s2180 + $0x18] sm:$0xff]
    %v2185 = vld [vmem:[%s2180 + $0x20] sm:$0x1]
    %v2186 = vperm.slane %v2173, 0
    %v2188 = vsel %vm98, %v2159, 0
    %v2191 = vsel %vm98, %v2160, 0
    %2193 = vmatpush.msra.mxu0 0.0
    %2194 = vmatpush.msra.mxu0 0.0
    %2195 = vmatpush.msra.mxu0 0.0
    %2196 = vmatpush.msra.mxu0 0.0
    %2197 = vmatpush.msra.mxu0 0.0
    %2198 = vmatpush.msra.mxu0 0.0
    %2199 = vmatpush.msra.mxu0 0.0
    %2200 = vmatpush.msra.mxu0 0.0
    %2201 = vmatpush.msra.mxu0 0.0
    %2202 = vmatpush.msra.mxu0 0.0
    %2203 = vmatpush.msra.mxu0 0.0
    %2204 = vmatpush.msra.mxu0 0.0
    %2205 = vmatpush.msra.mxu0 %v2172
    %2206 = vmatpush.msra.mxu0 %v2171
    %2207 = vmatpush.msra.mxu0 %v2170
    %2208 = vmatpush.msra.mxu0 %v2169
    %2209 = vmatmul.f32.gmra.mxu0 %v2188
    %v2210 = vpop.f32.mrf.mxu0
    %v2211 = vadd.f32 %v2186, %v2210
    %2212 = vmatmul.f32.gmra.mxu0 %v2191
    %v2213 = vpop.f32.mrf.mxu0
    %v2214 = vadd.f32 %v2186, %v2213
    %2215 = vdwg.mxu0
    %v2216 = vperm.slane %v2179, 0
    %2217 = vmatpush.msra.mxu0 0.0
    %2218 = vmatpush.msra.mxu0 0.0
    %2219 = vmatpush.msra.mxu0 0.0
    %2220 = vmatpush.msra.mxu0 0.0
    %2221 = vmatpush.msra.mxu0 0.0
    %2222 = vmatpush.msra.mxu0 0.0
    %2223 = vmatpush.msra.mxu0 0.0
    %2224 = vmatpush.msra.mxu0 0.0
    %2225 = vmatpush.msra.mxu0 0.0
    %2226 = vmatpush.msra.mxu0 0.0
    %2227 = vmatpush.msra.mxu0 0.0
    %2228 = vmatpush.msra.mxu0 0.0
    %2229 = vmatpush.msra.mxu0 %v2178
    %2230 = vmatpush.msra.mxu0 %v2177
    %2231 = vmatpush.msra.mxu0 %v2176
    %2232 = vmatpush.msra.mxu0 %v2175
    %2233 = vmatmul.f32.gmra.mxu0 %v2188
    %v2234 = vpop.f32.mrf.mxu0
    %v2235 = vadd.f32 %v2216, %v2234
    %2236 = vmatmul.f32.gmra.mxu0 %v2191
    %v2237 = vpop.f32.mrf.mxu0
    %v2238 = vadd.f32 %v2216, %v2237
    %2239 = vdwg.mxu0
    %v2240 = vperm.slane %v2185, 0
    %2241 = vmatpush.msra.mxu0 0.0
    %2242 = vmatpush.msra.mxu0 0.0
    %2243 = vmatpush.msra.mxu0 0.0
    %2244 = vmatpush.msra.mxu0 0.0
    %2245 = vmatpush.msra.mxu0 0.0
    %2246 = vmatpush.msra.mxu0 0.0
    %2247 = vmatpush.msra.mxu0 0.0
    %2248 = vmatpush.msra.mxu0 0.0
    %2249 = vmatpush.msra.mxu0 0.0
    %2250 = vmatpush.msra.mxu0 0.0
    %2251 = vmatpush.msra.mxu0 0.0
    %2252 = vmatpush.msra.mxu0 0.0
    %2253 = vmatpush.msra.mxu0 %v2184
    %2254 = vmatpush.msra.mxu0 %v2183
    %2255 = vmatpush.msra.mxu0 %v2182
    %2256 = vmatpush.msra.mxu0 %v2181
    %2257 = vmatmul.f32.gmra.mxu0 %v2188
    %v2258 = vpop.f32.mrf.mxu0
    %v2259 = vadd.f32 %v2240, %v2258
    %2260 = vmatmul.f32.gmra.mxu0 %v2191
    %v2261 = vpop.f32.mrf.mxu0
    %v2262 = vadd.f32 %v2240, %v2261
    %2263 = vdwg.mxu0
    %v2265 = vsel %vm176, %v2211, 0
    %v2268 = vsel %vm176, %v2235, 0
    %2270 = vmatpush.xpose.msra.mxu0 0.0
    %2271 = vmatpush.xpose.msra.mxu0 0.0
    %2272 = vmatpush.xpose.msra.mxu0 0.0
    %2273 = vmatpush.xpose.msra.mxu0 0.0
    %2274 = vmatpush.xpose.msra.mxu0 0.0
    %2275 = vmatpush.xpose.msra.mxu0 0.0
    %2276 = vmatpush.xpose.msra.mxu0 0.0
    %2277 = vmatpush.xpose.msra.mxu0 0.0
    %2278 = vmatpush.xpose.msra.mxu0 0.0
    %2279 = vmatpush.xpose.msra.mxu0 0.0
    %2280 = vmatpush.xpose.msra.mxu0 0.0
    %2281 = vmatpush.xpose.msra.mxu0 0.0
    %2282 = vmatpush.xpose.msra.mxu0 0.0
    %2283 = vmatpush.xpose.msra.mxu0 0.0
    %2284 = vmatpush.xpose.msra.mxu0 0.0
    %2285 = vmatpush.xpose.msra.mxu0 %v2268
    %2286 = vmatmul.f32.gmra.mxu0 %v2265
    %v2287 = vpop.f32.mrf.mxu0
    %v2288 = vadd.f32 0.0, %v2287
    %2289 = vdwg.mxu0
    %v2291 = vsel %vm176, %v2214, 0
    %v2294 = vsel %vm176, %v2238, 0
    %2296 = vmatpush.xpose.msra.mxu0 0.0
    %2297 = vmatpush.xpose.msra.mxu0 0.0
    %2298 = vmatpush.xpose.msra.mxu0 0.0
    %2299 = vmatpush.xpose.msra.mxu0 0.0
    %2300 = vmatpush.xpose.msra.mxu0 0.0
    %2301 = vmatpush.xpose.msra.mxu0 0.0
    %2302 = vmatpush.xpose.msra.mxu0 0.0
    %2303 = vmatpush.xpose.msra.mxu0 0.0
    %2304 = vmatpush.xpose.msra.mxu0 0.0
    %2305 = vmatpush.xpose.msra.mxu0 0.0
    %2306 = vmatpush.xpose.msra.mxu0 0.0
    %2307 = vmatpush.xpose.msra.mxu0 0.0
    %2308 = vmatpush.xpose.msra.mxu0 0.0
    %2309 = vmatpush.xpose.msra.mxu0 0.0
    %2310 = vmatpush.xpose.msra.mxu0 0.0
    %2311 = vmatpush.xpose.msra.mxu0 %v2294
    %2312 = vmatmul.f32.gmra.mxu0 %v2291
    %v2313 = vpop.f32.mrf.mxu0
    %v2314 = vadd.f32 0.0, %v2313
    %2315 = vdwg.mxu0
    %v2316 = vsel %vm176, %v2288, -inf
    %2317 = vmax.xlane.f32.xlu0 %v2316
    %v2318 = vpop.xlane.xlu0 %2317
    %v2319 = vsel %vm176, %v2314, -inf
    %2320 = vmax.xlane.f32.xlu0 %v2319
    %v2321 = vpop.xlane.xlu0 %2320
    %v2322 = vsub.f32 %v2288, %v2318
    %v2323 = vsub.f32 %v2314, %v2321
    %v2324 = vmul.f32 %v2322, 1.442695
    %v2325 = vpow.pop %v2324
    %v2326 = vmul.f32 %v2323, 1.442695
    %v2327 = vpow.pop %v2326
    %v2328 = vsel %vm176, %v2325, 0.0
    %2329 = vadd.xlane.f32.xlu0 %v2328
    %v2330 = vpop.xlane.xlu0 %2329
    %v2331 = vsel %vm176, %v2327, 0.0
    %2332 = vadd.xlane.f32.xlu0 %v2331
    %v2333 = vpop.xlane.xlu0 %2332
    %v2334 = vrcp.pop %v2330
    %v2335 = vrcp.pop %v2333
    %v2336 = vmul.f32 %v2325, %v2334
    %v2337 = vmul.f32 %v2327, %v2335
    %v2338 = vadd.f32 %v2336, 0.0
    %v2339 = vadd.f32 %v2337, 0.0
    %v2341 = vsel %vm176, %v2336, 0
    %2343 = vmatpush.msra.mxu0 0.0
    %2344 = vmatpush.msra.mxu0 0.0
    %2345 = vmatpush.msra.mxu0 0.0
    %2346 = vmatpush.msra.mxu0 0.0
    %2347 = vmatpush.msra.mxu0 0.0
    %2348 = vmatpush.msra.mxu0 0.0
    %2349 = vmatpush.msra.mxu0 0.0
    %2350 = vmatpush.msra.mxu0 0.0
    %2351 = vmatpush.msra.mxu0 0.0
    %2352 = vmatpush.msra.mxu0 0.0
    %2353 = vmatpush.msra.mxu0 0.0
    %2354 = vmatpush.msra.mxu0 0.0
    %2355 = vmatpush.msra.mxu0 0.0
    %2356 = vmatpush.msra.mxu0 0.0
    %2357 = vmatpush.msra.mxu0 0.0
    %2358 = vmatpush.msra.mxu0 %v2259
    %2359 = vmatmul.f32.gmra.mxu0 %v2341
    %v2360 = vpop.f32.mrf.mxu0
    %v2361 = vadd.f32 0.0, %v2360
    %2362 = vdwg.mxu0
    %v2364 = vsel %vm176, %v2337, 0
    %2366 = vmatpush.msra.mxu0 0.0
    %2367 = vmatpush.msra.mxu0 0.0
    %2368 = vmatpush.msra.mxu0 0.0
    %2369 = vmatpush.msra.mxu0 0.0
    %2370 = vmatpush.msra.mxu0 0.0
    %2371 = vmatpush.msra.mxu0 0.0
    %2372 = vmatpush.msra.mxu0 0.0
    %2373 = vmatpush.msra.mxu0 0.0
    %2374 = vmatpush.msra.mxu0 0.0
    %2375 = vmatpush.msra.mxu0 0.0
    %2376 = vmatpush.msra.mxu0 0.0
    %2377 = vmatpush.msra.mxu0 0.0
    %2378 = vmatpush.msra.mxu0 0.0
    %2379 = vmatpush.msra.mxu0 0.0
    %2380 = vmatpush.msra.mxu0 0.0
    %2381 = vmatpush.msra.mxu0 %v2262
    %2382 = vmatmul.f32.gmra.mxu0 %v2364
    %v2383 = vpop.f32.mrf.mxu0
    %v2384 = vadd.f32 0.0, %v2383
    %2385 = vdwg.mxu0
    %v2387 = vsel %vm176, %v2361, 0
    %v2390 = vsel %vm176, %v2384, 0
    %2392 = vmatpush.msra.mxu0 0.0
    %2393 = vmatpush.msra.mxu0 0.0
    %2394 = vmatpush.msra.mxu0 0.0
    %2395 = vmatpush.msra.mxu0 0.0
    %2396 = vmatpush.msra.mxu0 0.0
    %2397 = vmatpush.msra.mxu0 0.0
    %2398 = vmatpush.msra.mxu0 0.0
    %2399 = vmatpush.msra.mxu0 0.0
    %2400 = vmatpush.msra.mxu0 0.0
    %2401 = vmatpush.msra.mxu0 0.0
    %2402 = vmatpush.msra.mxu0 0.0
    %2403 = vmatpush.msra.mxu0 0.0
    %2404 = vmatpush.msra.mxu0 0.0
    %2405 = vmatpush.msra.mxu0 0.0
    %2406 = vmatpush.msra.mxu0 0.0
    %2407 = vmatpush.msra.mxu0 %v2161
    %2408 = vmatmul.f32.gmra.mxu0 %v2387
    %v2409 = vpop.f32.mrf.mxu0
    %v2410 = vadd.f32 0.0, %v2409
    %2411 = vmatmul.f32.gmra.mxu0 %v2390
    %v2412 = vpop.f32.mrf.mxu0
    %v2413 = vadd.f32 0.0, %v2412
    %2414 = vdwg.mxu0
    %v2415 = vperm.slane %v2165, 0
    %v2416 = vadd.f32 %v2415, %v2410
    %v2417 = vadd.f32 %v2415, %v2413
    %s2418 = scalar_lea.vmem %s1, 1080
    %v2419 = vld [vmem:[%s2418] sm:$0xff]
    %v2420 = vld [vmem:[%s2418 + $0x8] sm:$0xff]
    %v2421 = vld [vmem:[%s2418 + $0x10] sm:$0xff]
    %v2422 = vld [vmem:[%s2418 + $0x18] sm:$0xff]
    %v2423 = vld [vmem:[%s2418 + $0x20] sm:$0x1]
    %s2424 = scalar_lea.vmem %s1, 1120
    %v2425 = vld [vmem:[%s2424] sm:$0xff]
    %v2426 = vld [vmem:[%s2424 + $0x8] sm:$0xff]
    %v2427 = vld [vmem:[%s2424 + $0x10] sm:$0xff]
    %v2428 = vld [vmem:[%s2424 + $0x18] sm:$0xff]
    %v2429 = vld [vmem:[%s2424 + $0x20] sm:$0x1]
    %s2430 = scalar_lea.vmem %s1, 1160
    %v2431 = vld [vmem:[%s2430] sm:$0xff]
    %v2432 = vld [vmem:[%s2430 + $0x8] sm:$0xff]
    %v2433 = vld [vmem:[%s2430 + $0x10] sm:$0xff]
    %v2434 = vld [vmem:[%s2430 + $0x18] sm:$0xff]
    %v2435 = vld [vmem:[%s2430 + $0x20] sm:$0x1]
    %v2436 = vperm.slane %v2423, 0
    %2437 = vmatpush.msra.mxu0 0.0
    %2438 = vmatpush.msra.mxu0 0.0
    %2439 = vmatpush.msra.mxu0 0.0
    %2440 = vmatpush.msra.mxu0 0.0
    %2441 = vmatpush.msra.mxu0 0.0
    %2442 = vmatpush.msra.mxu0 0.0
    %2443 = vmatpush.msra.mxu0 0.0
    %2444 = vmatpush.msra.mxu0 0.0
    %2445 = vmatpush.msra.mxu0 0.0
    %2446 = vmatpush.msra.mxu0 0.0
    %2447 = vmatpush.msra.mxu0 0.0
    %2448 = vmatpush.msra.mxu0 0.0
    %2449 = vmatpush.msra.mxu0 %v2422
    %2450 = vmatpush.msra.mxu0 %v2421
    %2451 = vmatpush.msra.mxu0 %v2420
    %2452 = vmatpush.msra.mxu0 %v2419
    %2453 = vmatmul.f32.gmra.mxu0 %v2188
    %v2454 = vpop.f32.mrf.mxu0
    %v2455 = vadd.f32 %v2436, %v2454
    %2456 = vmatmul.f32.gmra.mxu0 %v2191
    %v2457 = vpop.f32.mrf.mxu0
    %v2458 = vadd.f32 %v2436, %v2457
    %2459 = vdwg.mxu0
    %v2460 = vperm.slane %v2429, 0
    %2461 = vmatpush.msra.mxu0 0.0
    %2462 = vmatpush.msra.mxu0 0.0
    %2463 = vmatpush.msra.mxu0 0.0
    %2464 = vmatpush.msra.mxu0 0.0
    %2465 = vmatpush.msra.mxu0 0.0
    %2466 = vmatpush.msra.mxu0 0.0
    %2467 = vmatpush.msra.mxu0 0.0
    %2468 = vmatpush.msra.mxu0 0.0
    %2469 = vmatpush.msra.mxu0 0.0
    %2470 = vmatpush.msra.mxu0 0.0
    %2471 = vmatpush.msra.mxu0 0.0
    %2472 = vmatpush.msra.mxu0 0.0
    %2473 = vmatpush.msra.mxu0 %v2428
    %2474 = vmatpush.msra.mxu0 %v2427
    %2475 = vmatpush.msra.mxu0 %v2426
    %2476 = vmatpush.msra.mxu0 %v2425
    %2477 = vmatmul.f32.gmra.mxu0 %v2188
    %v2478 = vpop.f32.mrf.mxu0
    %v2479 = vadd.f32 %v2460, %v2478
    %2480 = vmatmul.f32.gmra.mxu0 %v2191
    %v2481 = vpop.f32.mrf.mxu0
    %v2482 = vadd.f32 %v2460, %v2481
    %2483 = vdwg.mxu0
    %v2484 = vperm.slane %v2435, 0
    %2485 = vmatpush.msra.mxu0 0.0
    %2486 = vmatpush.msra.mxu0 0.0
    %2487 = vmatpush.msra.mxu0 0.0
    %2488 = vmatpush.msra.mxu0 0.0
    %2489 = vmatpush.msra.mxu0 0.0
    %2490 = vmatpush.msra.mxu0 0.0
    %2491 = vmatpush.msra.mxu0 0.0
    %2492 = vmatpush.msra.mxu0 0.0
    %2493 = vmatpush.msra.mxu0 0.0
    %2494 = vmatpush.msra.mxu0 0.0
    %2495 = vmatpush.msra.mxu0 0.0
    %2496 = vmatpush.msra.mxu0 0.0
    %2497 = vmatpush.msra.mxu0 %v2434
    %2498 = vmatpush.msra.mxu0 %v2433
    %2499 = vmatpush.msra.mxu0 %v2432
    %2500 = vmatpush.msra.mxu0 %v2431
    %2501 = vmatmul.f32.gmra.mxu0 %v2188
    %v2502 = vpop.f32.mrf.mxu0
    %v2503 = vadd.f32 %v2484, %v2502
    %2504 = vmatmul.f32.gmra.mxu0 %v2191
    %v2505 = vpop.f32.mrf.mxu0
    %v2506 = vadd.f32 %v2484, %v2505
    %2507 = vdwg.mxu0
    %v2509 = vsel %vm176, %v2455, 0
    %v2512 = vsel %vm176, %v2479, 0
    %2514 = vmatpush.xpose.msra.mxu0 0.0
    %2515 = vmatpush.xpose.msra.mxu0 0.0
    %2516 = vmatpush.xpose.msra.mxu0 0.0
    %2517 = vmatpush.xpose.msra.mxu0 0.0
    %2518 = vmatpush.xpose.msra.mxu0 0.0
    %2519 = vmatpush.xpose.msra.mxu0 0.0
    %2520 = vmatpush.xpose.msra.mxu0 0.0
    %2521 = vmatpush.xpose.msra.mxu0 0.0
    %2522 = vmatpush.xpose.msra.mxu0 0.0
    %2523 = vmatpush.xpose.msra.mxu0 0.0
    %2524 = vmatpush.xpose.msra.mxu0 0.0
    %2525 = vmatpush.xpose.msra.mxu0 0.0
    %2526 = vmatpush.xpose.msra.mxu0 0.0
    %2527 = vmatpush.xpose.msra.mxu0 0.0
    %2528 = vmatpush.xpose.msra.mxu0 0.0
    %2529 = vmatpush.xpose.msra.mxu0 %v2512
    %2530 = vmatmul.f32.gmra.mxu0 %v2509
    %v2531 = vpop.f32.mrf.mxu0
    %v2532 = vadd.f32 0.0, %v2531
    %2533 = vdwg.mxu0
    %v2535 = vsel %vm176, %v2458, 0
    %v2538 = vsel %vm176, %v2482, 0
    %2540 = vmatpush.xpose.msra.mxu0 0.0
    %2541 = vmatpush.xpose.msra.mxu0 0.0
    %2542 = vmatpush.xpose.msra.mxu0 0.0
    %2543 = vmatpush.xpose.msra.mxu0 0.0
    %2544 = vmatpush.xpose.msra.mxu0 0.0
    %2545 = vmatpush.xpose.msra.mxu0 0.0
    %2546 = vmatpush.xpose.msra.mxu0 0.0
    %2547 = vmatpush.xpose.msra.mxu0 0.0
    %2548 = vmatpush.xpose.msra.mxu0 0.0
    %2549 = vmatpush.xpose.msra.mxu0 0.0
    %2550 = vmatpush.xpose.msra.mxu0 0.0
    %2551 = vmatpush.xpose.msra.mxu0 0.0
    %2552 = vmatpush.xpose.msra.mxu0 0.0
    %2553 = vmatpush.xpose.msra.mxu0 0.0
    %2554 = vmatpush.xpose.msra.mxu0 0.0
    %2555 = vmatpush.xpose.msra.mxu0 %v2538
    %2556 = vmatmul.f32.gmra.mxu0 %v2535
    %v2557 = vpop.f32.mrf.mxu0
    %v2558 = vadd.f32 0.0, %v2557
    %2559 = vdwg.mxu0
    %v2560 = vsel %vm176, %v2532, -inf
    %2561 = vmax.xlane.f32.xlu0 %v2560
    %v2562 = vpop.xlane.xlu0 %2561
    %v2563 = vsel %vm176, %v2558, -inf
    %2564 = vmax.xlane.f32.xlu0 %v2563
    %v2565 = vpop.xlane.xlu0 %2564
    %v2566 = vsub.f32 %v2532, %v2562
    %v2567 = vsub.f32 %v2558, %v2565
    %v2568 = vmul.f32 %v2566, 1.442695
    %v2569 = vpow.pop %v2568
    %v2570 = vmul.f32 %v2567, 1.442695
    %v2571 = vpow.pop %v2570
    %v2572 = vsel %vm176, %v2569, 0.0
    %2573 = vadd.xlane.f32.xlu0 %v2572
    %v2574 = vpop.xlane.xlu0 %2573
    %v2575 = vsel %vm176, %v2571, 0.0
    %2576 = vadd.xlane.f32.xlu0 %v2575
    %v2577 = vpop.xlane.xlu0 %2576
    %v2578 = vrcp.pop %v2574
    %v2579 = vrcp.pop %v2577
    %v2580 = vmul.f32 %v2569, %v2578
    %v2581 = vmul.f32 %v2571, %v2579
    %v2582 = vadd.f32 %v2338, %v2580
    %v2583 = vadd.f32 %v2339, %v2581
    %v2585 = vsel %vm176, %v2580, 0
    %2587 = vmatpush.msra.mxu0 0.0
    %2588 = vmatpush.msra.mxu0 0.0
    %2589 = vmatpush.msra.mxu0 0.0
    %2590 = vmatpush.msra.mxu0 0.0
    %2591 = vmatpush.msra.mxu0 0.0
    %2592 = vmatpush.msra.mxu0 0.0
    %2593 = vmatpush.msra.mxu0 0.0
    %2594 = vmatpush.msra.mxu0 0.0
    %2595 = vmatpush.msra.mxu0 0.0
    %2596 = vmatpush.msra.mxu0 0.0
    %2597 = vmatpush.msra.mxu0 0.0
    %2598 = vmatpush.msra.mxu0 0.0
    %2599 = vmatpush.msra.mxu0 0.0
    %2600 = vmatpush.msra.mxu0 0.0
    %2601 = vmatpush.msra.mxu0 0.0
    %2602 = vmatpush.msra.mxu0 %v2503
    %2603 = vmatmul.f32.gmra.mxu0 %v2585
    %v2604 = vpop.f32.mrf.mxu0
    %v2605 = vadd.f32 0.0, %v2604
    %2606 = vdwg.mxu0
    %v2608 = vsel %vm176, %v2581, 0
    %2610 = vmatpush.msra.mxu0 0.0
    %2611 = vmatpush.msra.mxu0 0.0
    %2612 = vmatpush.msra.mxu0 0.0
    %2613 = vmatpush.msra.mxu0 0.0
    %2614 = vmatpush.msra.mxu0 0.0
    %2615 = vmatpush.msra.mxu0 0.0
    %2616 = vmatpush.msra.mxu0 0.0
    %2617 = vmatpush.msra.mxu0 0.0
    %2618 = vmatpush.msra.mxu0 0.0
    %2619 = vmatpush.msra.mxu0 0.0
    %2620 = vmatpush.msra.mxu0 0.0
    %2621 = vmatpush.msra.mxu0 0.0
    %2622 = vmatpush.msra.mxu0 0.0
    %2623 = vmatpush.msra.mxu0 0.0
    %2624 = vmatpush.msra.mxu0 0.0
    %2625 = vmatpush.msra.mxu0 %v2506
    %2626 = vmatmul.f32.gmra.mxu0 %v2608
    %v2627 = vpop.f32.mrf.mxu0
    %v2628 = vadd.f32 0.0, %v2627
    %2629 = vdwg.mxu0
    %v2631 = vsel %vm176, %v2605, 0
    %v2634 = vsel %vm176, %v2628, 0
    %2636 = vmatpush.msra.mxu0 0.0
    %2637 = vmatpush.msra.mxu0 0.0
    %2638 = vmatpush.msra.mxu0 0.0
    %2639 = vmatpush.msra.mxu0 0.0
    %2640 = vmatpush.msra.mxu0 0.0
    %2641 = vmatpush.msra.mxu0 0.0
    %2642 = vmatpush.msra.mxu0 0.0
    %2643 = vmatpush.msra.mxu0 0.0
    %2644 = vmatpush.msra.mxu0 0.0
    %2645 = vmatpush.msra.mxu0 0.0
    %2646 = vmatpush.msra.mxu0 0.0
    %2647 = vmatpush.msra.mxu0 0.0
    %2648 = vmatpush.msra.mxu0 0.0
    %2649 = vmatpush.msra.mxu0 0.0
    %2650 = vmatpush.msra.mxu0 0.0
    %2651 = vmatpush.msra.mxu0 %v2162
    %2652 = vmatmul.f32.gmra.mxu0 %v2631
    %v2653 = vpop.f32.mrf.mxu0
    %v2654 = vadd.f32 0.0, %v2653
    %2655 = vmatmul.f32.gmra.mxu0 %v2634
    %v2656 = vpop.f32.mrf.mxu0
    %v2657 = vadd.f32 0.0, %v2656
    %2658 = vdwg.mxu0
    %v2659 = vadd.f32 %v2416, %v2654
    %v2660 = vadd.f32 %v2417, %v2657
    %s2661 = scalar_lea.vmem %s1, 1200
    %v2662 = vld [vmem:[%s2661] sm:$0xff]
    %v2663 = vld [vmem:[%s2661 + $0x8] sm:$0xff]
    %v2664 = vld [vmem:[%s2661 + $0x10] sm:$0xff]
    %v2665 = vld [vmem:[%s2661 + $0x18] sm:$0xff]
    %v2666 = vld [vmem:[%s2661 + $0x20] sm:$0x1]
    %s2667 = scalar_lea.vmem %s1, 1240
    %v2668 = vld [vmem:[%s2667] sm:$0xff]
    %v2669 = vld [vmem:[%s2667 + $0x8] sm:$0xff]
    %v2670 = vld [vmem:[%s2667 + $0x10] sm:$0xff]
    %v2671 = vld [vmem:[%s2667 + $0x18] sm:$0xff]
    %v2672 = vld [vmem:[%s2667 + $0x20] sm:$0x1]
    %s2673 = scalar_lea.vmem %s1, 1280
    %v2674 = vld [vmem:[%s2673] sm:$0xff]
    %v2675 = vld [vmem:[%s2673 + $0x8] sm:$0xff]
    %v2676 = vld [vmem:[%s2673 + $0x10] sm:$0xff]
    %v2677 = vld [vmem:[%s2673 + $0x18] sm:$0xff]
    %v2678 = vld [vmem:[%s2673 + $0x20] sm:$0x1]
    %v2679 = vperm.slane %v2666, 0
    %2680 = vmatpush.msra.mxu0 0.0
    %2681 = vmatpush.msra.mxu0 0.0
    %2682 = vmatpush.msra.mxu0 0.0
    %2683 = vmatpush.msra.mxu0 0.0
    %2684 = vmatpush.msra.mxu0 0.0
    %2685 = vmatpush.msra.mxu0 0.0
    %2686 = vmatpush.msra.mxu0 0.0
    %2687 = vmatpush.msra.mxu0 0.0
    %2688 = vmatpush.msra.mxu0 0.0
    %2689 = vmatpush.msra.mxu0 0.0
    %2690 = vmatpush.msra.mxu0 0.0
    %2691 = vmatpush.msra.mxu0 0.0
    %2692 = vmatpush.msra.mxu0 %v2665
    %2693 = vmatpush.msra.mxu0 %v2664
    %2694 = vmatpush.msra.mxu0 %v2663
    %2695 = vmatpush.msra.mxu0 %v2662
    %2696 = vmatmul.f32.gmra.mxu0 %v2188
    %v2697 = vpop.f32.mrf.mxu0
    %v2698 = vadd.f32 %v2679, %v2697
    %2699 = vmatmul.f32.gmra.mxu0 %v2191
    %v2700 = vpop.f32.mrf.mxu0
    %v2701 = vadd.f32 %v2679, %v2700
    %2702 = vdwg.mxu0
    %v2703 = vperm.slane %v2672, 0
    %2704 = vmatpush.msra.mxu0 0.0
    %2705 = vmatpush.msra.mxu0 0.0
    %2706 = vmatpush.msra.mxu0 0.0
    %2707 = vmatpush.msra.mxu0 0.0
    %2708 = vmatpush.msra.mxu0 0.0
    %2709 = vmatpush.msra.mxu0 0.0
    %2710 = vmatpush.msra.mxu0 0.0
    %2711 = vmatpush.msra.mxu0 0.0
    %2712 = vmatpush.msra.mxu0 0.0
    %2713 = vmatpush.msra.mxu0 0.0
    %2714 = vmatpush.msra.mxu0 0.0
    %2715 = vmatpush.msra.mxu0 0.0
    %2716 = vmatpush.msra.mxu0 %v2671
    %2717 = vmatpush.msra.mxu0 %v2670
    %2718 = vmatpush.msra.mxu0 %v2669
    %2719 = vmatpush.msra.mxu0 %v2668
    %2720 = vmatmul.f32.gmra.mxu0 %v2188
    %v2721 = vpop.f32.mrf.mxu0
    %v2722 = vadd.f32 %v2703, %v2721
    %2723 = vmatmul.f32.gmra.mxu0 %v2191
    %v2724 = vpop.f32.mrf.mxu0
    %v2725 = vadd.f32 %v2703, %v2724
    %2726 = vdwg.mxu0
    %v2727 = vperm.slane %v2678, 0
    %2728 = vmatpush.msra.mxu0 0.0
    %2729 = vmatpush.msra.mxu0 0.0
    %2730 = vmatpush.msra.mxu0 0.0
    %2731 = vmatpush.msra.mxu0 0.0
    %2732 = vmatpush.msra.mxu0 0.0
    %2733 = vmatpush.msra.mxu0 0.0
    %2734 = vmatpush.msra.mxu0 0.0
    %2735 = vmatpush.msra.mxu0 0.0
    %2736 = vmatpush.msra.mxu0 0.0
    %2737 = vmatpush.msra.mxu0 0.0
    %2738 = vmatpush.msra.mxu0 0.0
    %2739 = vmatpush.msra.mxu0 0.0
    %2740 = vmatpush.msra.mxu0 %v2677
    %2741 = vmatpush.msra.mxu0 %v2676
    %2742 = vmatpush.msra.mxu0 %v2675
    %2743 = vmatpush.msra.mxu0 %v2674
    %2744 = vmatmul.f32.gmra.mxu0 %v2188
    %v2745 = vpop.f32.mrf.mxu0
    %v2746 = vadd.f32 %v2727, %v2745
    %2747 = vmatmul.f32.gmra.mxu0 %v2191
    %v2748 = vpop.f32.mrf.mxu0
    %v2749 = vadd.f32 %v2727, %v2748
    %2750 = vdwg.mxu0
    %v2752 = vsel %vm176, %v2698, 0
    %v2755 = vsel %vm176, %v2722, 0
    %2757 = vmatpush.xpose.msra.mxu0 0.0
    %2758 = vmatpush.xpose.msra.mxu0 0.0
    %2759 = vmatpush.xpose.msra.mxu0 0.0
    %2760 = vmatpush.xpose.msra.mxu0 0.0
    %2761 = vmatpush.xpose.msra.mxu0 0.0
    %2762 = vmatpush.xpose.msra.mxu0 0.0
    %2763 = vmatpush.xpose.msra.mxu0 0.0
    %2764 = vmatpush.xpose.msra.mxu0 0.0
    %2765 = vmatpush.xpose.msra.mxu0 0.0
    %2766 = vmatpush.xpose.msra.mxu0 0.0
    %2767 = vmatpush.xpose.msra.mxu0 0.0
    %2768 = vmatpush.xpose.msra.mxu0 0.0
    %2769 = vmatpush.xpose.msra.mxu0 0.0
    %2770 = vmatpush.xpose.msra.mxu0 0.0
    %2771 = vmatpush.xpose.msra.mxu0 0.0
    %2772 = vmatpush.xpose.msra.mxu0 %v2755
    %2773 = vmatmul.f32.gmra.mxu0 %v2752
    %v2774 = vpop.f32.mrf.mxu0
    %v2775 = vadd.f32 0.0, %v2774
    %2776 = vdwg.mxu0
    %v2778 = vsel %vm176, %v2701, 0
    %v2781 = vsel %vm176, %v2725, 0
    %2783 = vmatpush.xpose.msra.mxu0 0.0
    %2784 = vmatpush.xpose.msra.mxu0 0.0
    %2785 = vmatpush.xpose.msra.mxu0 0.0
    %2786 = vmatpush.xpose.msra.mxu0 0.0
    %2787 = vmatpush.xpose.msra.mxu0 0.0
    %2788 = vmatpush.xpose.msra.mxu0 0.0
    %2789 = vmatpush.xpose.msra.mxu0 0.0
    %2790 = vmatpush.xpose.msra.mxu0 0.0
    %2791 = vmatpush.xpose.msra.mxu0 0.0
    %2792 = vmatpush.xpose.msra.mxu0 0.0
    %2793 = vmatpush.xpose.msra.mxu0 0.0
    %2794 = vmatpush.xpose.msra.mxu0 0.0
    %2795 = vmatpush.xpose.msra.mxu0 0.0
    %2796 = vmatpush.xpose.msra.mxu0 0.0
    %2797 = vmatpush.xpose.msra.mxu0 0.0
    %2798 = vmatpush.xpose.msra.mxu0 %v2781
    %2799 = vmatmul.f32.gmra.mxu0 %v2778
    %v2800 = vpop.f32.mrf.mxu0
    %v2801 = vadd.f32 0.0, %v2800
    %2802 = vdwg.mxu0
    %v2803 = vsel %vm176, %v2775, -inf
    %2804 = vmax.xlane.f32.xlu0 %v2803
    %v2805 = vpop.xlane.xlu0 %2804
    %v2806 = vsel %vm176, %v2801, -inf
    %2807 = vmax.xlane.f32.xlu0 %v2806
    %v2808 = vpop.xlane.xlu0 %2807
    %v2809 = vsub.f32 %v2775, %v2805
    %v2810 = vsub.f32 %v2801, %v2808
    %v2811 = vmul.f32 %v2809, 1.442695
    %v2812 = vpow.pop %v2811
    %v2813 = vmul.f32 %v2810, 1.442695
    %v2814 = vpow.pop %v2813
    %v2815 = vsel %vm176, %v2812, 0.0
    %2816 = vadd.xlane.f32.xlu0 %v2815
    %v2817 = vpop.xlane.xlu0 %2816
    %v2818 = vsel %vm176, %v2814, 0.0
    %2819 = vadd.xlane.f32.xlu0 %v2818
    %v2820 = vpop.xlane.xlu0 %2819
    %v2821 = vrcp.pop %v2817
    %v2822 = vrcp.pop %v2820
    %v2823 = vmul.f32 %v2812, %v2821
    %v2824 = vmul.f32 %v2814, %v2822
    %v2825 = vadd.f32 %v2582, %v2823
    %v2826 = vadd.f32 %v2583, %v2824
    %v2828 = vsel %vm176, %v2823, 0
    %2830 = vmatpush.msra.mxu0 0.0
    %2831 = vmatpush.msra.mxu0 0.0
    %2832 = vmatpush.msra.mxu0 0.0
    %2833 = vmatpush.msra.mxu0 0.0
    %2834 = vmatpush.msra.mxu0 0.0
    %2835 = vmatpush.msra.mxu0 0.0
    %2836 = vmatpush.msra.mxu0 0.0
    %2837 = vmatpush.msra.mxu0 0.0
    %2838 = vmatpush.msra.mxu0 0.0
    %2839 = vmatpush.msra.mxu0 0.0
    %2840 = vmatpush.msra.mxu0 0.0
    %2841 = vmatpush.msra.mxu0 0.0
    %2842 = vmatpush.msra.mxu0 0.0
    %2843 = vmatpush.msra.mxu0 0.0
    %2844 = vmatpush.msra.mxu0 0.0
    %2845 = vmatpush.msra.mxu0 %v2746
    %2846 = vmatmul.f32.gmra.mxu0 %v2828
    %v2847 = vpop.f32.mrf.mxu0
    %v2848 = vadd.f32 0.0, %v2847
    %2849 = vdwg.mxu0
    %v2851 = vsel %vm176, %v2824, 0
    %2853 = vmatpush.msra.mxu0 0.0
    %2854 = vmatpush.msra.mxu0 0.0
    %2855 = vmatpush.msra.mxu0 0.0
    %2856 = vmatpush.msra.mxu0 0.0
    %2857 = vmatpush.msra.mxu0 0.0
    %2858 = vmatpush.msra.mxu0 0.0
    %2859 = vmatpush.msra.mxu0 0.0
    %2860 = vmatpush.msra.mxu0 0.0
    %2861 = vmatpush.msra.mxu0 0.0
    %2862 = vmatpush.msra.mxu0 0.0
    %2863 = vmatpush.msra.mxu0 0.0
    %2864 = vmatpush.msra.mxu0 0.0
    %2865 = vmatpush.msra.mxu0 0.0
    %2866 = vmatpush.msra.mxu0 0.0
    %2867 = vmatpush.msra.mxu0 0.0
    %2868 = vmatpush.msra.mxu0 %v2749
    %2869 = vmatmul.f32.gmra.mxu0 %v2851
    %v2870 = vpop.f32.mrf.mxu0
    %v2871 = vadd.f32 0.0, %v2870
    %2872 = vdwg.mxu0
    %v2874 = vsel %vm176, %v2848, 0
    %v2877 = vsel %vm176, %v2871, 0
    %2879 = vmatpush.msra.mxu0 0.0
    %2880 = vmatpush.msra.mxu0 0.0
    %2881 = vmatpush.msra.mxu0 0.0
    %2882 = vmatpush.msra.mxu0 0.0
    %2883 = vmatpush.msra.mxu0 0.0
    %2884 = vmatpush.msra.mxu0 0.0
    %2885 = vmatpush.msra.mxu0 0.0
    %2886 = vmatpush.msra.mxu0 0.0
    %2887 = vmatpush.msra.mxu0 0.0
    %2888 = vmatpush.msra.mxu0 0.0
    %2889 = vmatpush.msra.mxu0 0.0
    %2890 = vmatpush.msra.mxu0 0.0
    %2891 = vmatpush.msra.mxu0 0.0
    %2892 = vmatpush.msra.mxu0 0.0
    %2893 = vmatpush.msra.mxu0 0.0
    %2894 = vmatpush.msra.mxu0 %v2163
    %2895 = vmatmul.f32.gmra.mxu0 %v2874
    %v2896 = vpop.f32.mrf.mxu0
    %v2897 = vadd.f32 0.0, %v2896
    %2898 = vmatmul.f32.gmra.mxu0 %v2877
    %v2899 = vpop.f32.mrf.mxu0
    %v2900 = vadd.f32 0.0, %v2899
    %2901 = vdwg.mxu0
    %v2902 = vadd.f32 %v2659, %v2897
    %v2903 = vadd.f32 %v2660, %v2900
    %s2904 = scalar_lea.vmem %s1, 1320
    %v2905 = vld [vmem:[%s2904] sm:$0xff]
    %v2906 = vld [vmem:[%s2904 + $0x8] sm:$0xff]
    %v2907 = vld [vmem:[%s2904 + $0x10] sm:$0xff]
    %v2908 = vld [vmem:[%s2904 + $0x18] sm:$0xff]
    %v2909 = vld [vmem:[%s2904 + $0x20] sm:$0x1]
    %s2910 = scalar_lea.vmem %s1, 1360
    %v2911 = vld [vmem:[%s2910] sm:$0xff]
    %v2912 = vld [vmem:[%s2910 + $0x8] sm:$0xff]
    %v2913 = vld [vmem:[%s2910 + $0x10] sm:$0xff]
    %v2914 = vld [vmem:[%s2910 + $0x18] sm:$0xff]
    %v2915 = vld [vmem:[%s2910 + $0x20] sm:$0x1]
    %s2916 = scalar_lea.vmem %s1, 1400
    %v2917 = vld [vmem:[%s2916] sm:$0xff]
    %v2918 = vld [vmem:[%s2916 + $0x8] sm:$0xff]
    %v2919 = vld [vmem:[%s2916 + $0x10] sm:$0xff]
    %v2920 = vld [vmem:[%s2916 + $0x18] sm:$0xff]
    %v2921 = vld [vmem:[%s2916 + $0x20] sm:$0x1]
    %v2922 = vperm.slane %v2909, 0
    %2923 = vmatpush.msra.mxu0 0.0
    %2924 = vmatpush.msra.mxu0 0.0
    %2925 = vmatpush.msra.mxu0 0.0
    %2926 = vmatpush.msra.mxu0 0.0
    %2927 = vmatpush.msra.mxu0 0.0
    %2928 = vmatpush.msra.mxu0 0.0
    %2929 = vmatpush.msra.mxu0 0.0
    %2930 = vmatpush.msra.mxu0 0.0
    %2931 = vmatpush.msra.mxu0 0.0
    %2932 = vmatpush.msra.mxu0 0.0
    %2933 = vmatpush.msra.mxu0 0.0
    %2934 = vmatpush.msra.mxu0 0.0
    %2935 = vmatpush.msra.mxu0 %v2908
    %2936 = vmatpush.msra.mxu0 %v2907
    %2937 = vmatpush.msra.mxu0 %v2906
    %2938 = vmatpush.msra.mxu0 %v2905
    %2939 = vmatmul.f32.gmra.mxu0 %v2188
    %v2940 = vpop.f32.mrf.mxu0
    %v2941 = vadd.f32 %v2922, %v2940
    %2942 = vmatmul.f32.gmra.mxu0 %v2191
    %v2943 = vpop.f32.mrf.mxu0
    %v2944 = vadd.f32 %v2922, %v2943
    %2945 = vdwg.mxu0
    %v2946 = vperm.slane %v2915, 0
    %2947 = vmatpush.msra.mxu0 0.0
    %2948 = vmatpush.msra.mxu0 0.0
    %2949 = vmatpush.msra.mxu0 0.0
    %2950 = vmatpush.msra.mxu0 0.0
    %2951 = vmatpush.msra.mxu0 0.0
    %2952 = vmatpush.msra.mxu0 0.0
    %2953 = vmatpush.msra.mxu0 0.0
    %2954 = vmatpush.msra.mxu0 0.0
    %2955 = vmatpush.msra.mxu0 0.0
    %2956 = vmatpush.msra.mxu0 0.0
    %2957 = vmatpush.msra.mxu0 0.0
    %2958 = vmatpush.msra.mxu0 0.0
    %2959 = vmatpush.msra.mxu0 %v2914
    %2960 = vmatpush.msra.mxu0 %v2913
    %2961 = vmatpush.msra.mxu0 %v2912
    %2962 = vmatpush.msra.mxu0 %v2911
    %2963 = vmatmul.f32.gmra.mxu0 %v2188
    %v2964 = vpop.f32.mrf.mxu0
    %v2965 = vadd.f32 %v2946, %v2964
    %2966 = vmatmul.f32.gmra.mxu0 %v2191
    %v2967 = vpop.f32.mrf.mxu0
    %v2968 = vadd.f32 %v2946, %v2967
    %2969 = vdwg.mxu0
    %v2970 = vperm.slane %v2921, 0
    %2971 = vmatpush.msra.mxu0 0.0
    %2972 = vmatpush.msra.mxu0 0.0
    %2973 = vmatpush.msra.mxu0 0.0
    %2974 = vmatpush.msra.mxu0 0.0
    %2975 = vmatpush.msra.mxu0 0.0
    %2976 = vmatpush.msra.mxu0 0.0
    %2977 = vmatpush.msra.mxu0 0.0
    %2978 = vmatpush.msra.mxu0 0.0
    %2979 = vmatpush.msra.mxu0 0.0
    %2980 = vmatpush.msra.mxu0 0.0
    %2981 = vmatpush.msra.mxu0 0.0
    %2982 = vmatpush.msra.mxu0 0.0
    %2983 = vmatpush.msra.mxu0 %v2920
    %2984 = vmatpush.msra.mxu0 %v2919
    %2985 = vmatpush.msra.mxu0 %v2918
    %2986 = vmatpush.msra.mxu0 %v2917
    %2987 = vmatmul.f32.gmra.mxu0 %v2188
    %v2988 = vpop.f32.mrf.mxu0
    %v2989 = vadd.f32 %v2970, %v2988
    %2990 = vmatmul.f32.gmra.mxu0 %v2191
    %v2991 = vpop.f32.mrf.mxu0
    %v2992 = vadd.f32 %v2970, %v2991
    %2993 = vdwg.mxu0
    %v2995 = vsel %vm176, %v2941, 0
    %v2998 = vsel %vm176, %v2965, 0
    %3000 = vmatpush.xpose.msra.mxu0 0.0
    %3001 = vmatpush.xpose.msra.mxu0 0.0
    %3002 = vmatpush.xpose.msra.mxu0 0.0
    %3003 = vmatpush.xpose.msra.mxu0 0.0
    %3004 = vmatpush.xpose.msra.mxu0 0.0
    %3005 = vmatpush.xpose.msra.mxu0 0.0
    %3006 = vmatpush.xpose.msra.mxu0 0.0
    %3007 = vmatpush.xpose.msra.mxu0 0.0
    %3008 = vmatpush.xpose.msra.mxu0 0.0
    %3009 = vmatpush.xpose.msra.mxu0 0.0
    %3010 = vmatpush.xpose.msra.mxu0 0.0
    %3011 = vmatpush.xpose.msra.mxu0 0.0
    %3012 = vmatpush.xpose.msra.mxu0 0.0
    %3013 = vmatpush.xpose.msra.mxu0 0.0
    %3014 = vmatpush.xpose.msra.mxu0 0.0
    %3015 = vmatpush.xpose.msra.mxu0 %v2998
    %3016 = vmatmul.f32.gmra.mxu0 %v2995
    %v3017 = vpop.f32.mrf.mxu0
    %v3018 = vadd.f32 0.0, %v3017
    %3019 = vdwg.mxu0
    %v3021 = vsel %vm176, %v2944, 0
    %v3024 = vsel %vm176, %v2968, 0
    %3026 = vmatpush.xpose.msra.mxu0 0.0
    %3027 = vmatpush.xpose.msra.mxu0 0.0
    %3028 = vmatpush.xpose.msra.mxu0 0.0
    %3029 = vmatpush.xpose.msra.mxu0 0.0
    %3030 = vmatpush.xpose.msra.mxu0 0.0
    %3031 = vmatpush.xpose.msra.mxu0 0.0
    %3032 = vmatpush.xpose.msra.mxu0 0.0
    %3033 = vmatpush.xpose.msra.mxu0 0.0
    %3034 = vmatpush.xpose.msra.mxu0 0.0
    %3035 = vmatpush.xpose.msra.mxu0 0.0
    %3036 = vmatpush.xpose.msra.mxu0 0.0
    %3037 = vmatpush.xpose.msra.mxu0 0.0
    %3038 = vmatpush.xpose.msra.mxu0 0.0
    %3039 = vmatpush.xpose.msra.mxu0 0.0
    %3040 = vmatpush.xpose.msra.mxu0 0.0
    %3041 = vmatpush.xpose.msra.mxu0 %v3024
    %3042 = vmatmul.f32.gmra.mxu0 %v3021
    %v3043 = vpop.f32.mrf.mxu0
    %v3044 = vadd.f32 0.0, %v3043
    %3045 = vdwg.mxu0
    %v3046 = vsel %vm176, %v3018, -inf
    %3047 = vmax.xlane.f32.xlu0 %v3046
    %v3048 = vpop.xlane.xlu0 %3047
    %v3049 = vsel %vm176, %v3044, -inf
    %3050 = vmax.xlane.f32.xlu0 %v3049
    %v3051 = vpop.xlane.xlu0 %3050
    %v3052 = vsub.f32 %v3018, %v3048
    %v3053 = vsub.f32 %v3044, %v3051
    %v3054 = vmul.f32 %v3052, 1.442695
    %v3055 = vpow.pop %v3054
    %v3056 = vmul.f32 %v3053, 1.442695
    %v3057 = vpow.pop %v3056
    %v3058 = vsel %vm176, %v3055, 0.0
    %3059 = vadd.xlane.f32.xlu0 %v3058
    %v3060 = vpop.xlane.xlu0 %3059
    %v3061 = vsel %vm176, %v3057, 0.0
    %3062 = vadd.xlane.f32.xlu0 %v3061
    %v3063 = vpop.xlane.xlu0 %3062
    %v3064 = vrcp.pop %v3060
    %v3065 = vrcp.pop %v3063
    %v3066 = vmul.f32 %v3055, %v3064
    %v3067 = vmul.f32 %v3057, %v3065
    %v3068 = vadd.f32 %v2825, %v3066
    %v3069 = vadd.f32 %v2826, %v3067
    %v3071 = vsel %vm176, %v3066, 0
    %3073 = vmatpush.msra.mxu0 0.0
    %3074 = vmatpush.msra.mxu0 0.0
    %3075 = vmatpush.msra.mxu0 0.0
    %3076 = vmatpush.msra.mxu0 0.0
    %3077 = vmatpush.msra.mxu0 0.0
    %3078 = vmatpush.msra.mxu0 0.0
    %3079 = vmatpush.msra.mxu0 0.0
    %3080 = vmatpush.msra.mxu0 0.0
    %3081 = vmatpush.msra.mxu0 0.0
    %3082 = vmatpush.msra.mxu0 0.0
    %3083 = vmatpush.msra.mxu0 0.0
    %3084 = vmatpush.msra.mxu0 0.0
    %3085 = vmatpush.msra.mxu0 0.0
    %3086 = vmatpush.msra.mxu0 0.0
    %3087 = vmatpush.msra.mxu0 0.0
    %3088 = vmatpush.msra.mxu0 %v2989
    %3089 = vmatmul.f32.gmra.mxu0 %v3071
    %v3090 = vpop.f32.mrf.mxu0
    %v3091 = vadd.f32 0.0, %v3090
    %3092 = vdwg.mxu0
    %v3094 = vsel %vm176, %v3067, 0
    %3096 = vmatpush.msra.mxu0 0.0
    %3097 = vmatpush.msra.mxu0 0.0
    %3098 = vmatpush.msra.mxu0 0.0
    %3099 = vmatpush.msra.mxu0 0.0
    %3100 = vmatpush.msra.mxu0 0.0
    %3101 = vmatpush.msra.mxu0 0.0
    %3102 = vmatpush.msra.mxu0 0.0
    %3103 = vmatpush.msra.mxu0 0.0
    %3104 = vmatpush.msra.mxu0 0.0
    %3105 = vmatpush.msra.mxu0 0.0
    %3106 = vmatpush.msra.mxu0 0.0
    %3107 = vmatpush.msra.mxu0 0.0
    %3108 = vmatpush.msra.mxu0 0.0
    %3109 = vmatpush.msra.mxu0 0.0
    %3110 = vmatpush.msra.mxu0 0.0
    %3111 = vmatpush.msra.mxu0 %v2992
    %3112 = vmatmul.f32.gmra.mxu0 %v3094
    %v3113 = vpop.f32.mrf.mxu0
    %v3114 = vadd.f32 0.0, %v3113
    %3115 = vdwg.mxu0
    %v3117 = vsel %vm176, %v3091, 0
    %v3120 = vsel %vm176, %v3114, 0
    %3122 = vmatpush.msra.mxu0 0.0
    %3123 = vmatpush.msra.mxu0 0.0
    %3124 = vmatpush.msra.mxu0 0.0
    %3125 = vmatpush.msra.mxu0 0.0
    %3126 = vmatpush.msra.mxu0 0.0
    %3127 = vmatpush.msra.mxu0 0.0
    %3128 = vmatpush.msra.mxu0 0.0
    %3129 = vmatpush.msra.mxu0 0.0
    %3130 = vmatpush.msra.mxu0 0.0
    %3131 = vmatpush.msra.mxu0 0.0
    %3132 = vmatpush.msra.mxu0 0.0
    %3133 = vmatpush.msra.mxu0 0.0
    %3134 = vmatpush.msra.mxu0 0.0
    %3135 = vmatpush.msra.mxu0 0.0
    %3136 = vmatpush.msra.mxu0 0.0
    %3137 = vmatpush.msra.mxu0 %v2164
    %3138 = vmatmul.f32.gmra.mxu0 %v3117
    %v3139 = vpop.f32.mrf.mxu0
    %v3140 = vadd.f32 0.0, %v3139
    %3141 = vmatmul.f32.gmra.mxu0 %v3120
    %v3142 = vpop.f32.mrf.mxu0
    %v3143 = vadd.f32 0.0, %v3142
    %3144 = vdwg.mxu0
    %v3145 = vadd.f32 %v2902, %v3140
    %v3146 = vadd.f32 %v2903, %v3143
    %v3147 = vmul.f32 %v3068, 0.25
    %v3148 = vmul.f32 %v3069, 0.25
    %v3149 = vadd.f32 %v2159, %v3145
    %v3150 = vadd.f32 %v2160, %v3146
    %v3151 = vsel %vm98, %v3149, 0.0
    %3152 = vadd.xlane.f32.xlu0 %v3151
    %v3153 = vpop.xlane.xlu0 %3152
    %v3154 = vsel %vm98, %v3150, 0.0
    %3155 = vadd.xlane.f32.xlu0 %v3154
    %v3156 = vpop.xlane.xlu0 %3155
    %v3157 = vmul.f32 %v3153, %v1076
    %v3158 = vmul.f32 %v3156, %v1076
    %v3159 = vsub.f32 %v3149, %v3157
    %v3160 = vsub.f32 %v3150, %v3158
    %v3161 = vmul.f32 %v3159, %v3159
    %v3162 = vmul.f32 %v3160, %v3160
    %v3163 = vsel %vm98, %v3161, 0.0
    %3164 = vadd.xlane.f32.xlu0 %v3163
    %v3165 = vpop.xlane.xlu0 %3164
    %v3166 = vsel %vm98, %v3162, 0.0
    %3167 = vadd.xlane.f32.xlu0 %v3166
    %v3168 = vpop.xlane.xlu0 %3167
    %v3169 = vmul.f32 %v3165, %v1076
    %v3170 = vmul.f32 %v3168, %v1076
    %v3171 = vadd.f32 %v3169, 1e-05
    %v3172 = vadd.f32 %v3170, 1e-05
    %v3173 = vrsqrt.pop %v3171
    %v3174 = vmul.f32 %v3173, %v3171
    %v3175 = vmul.f32 %v3174, %v3173
    %v3176 = vmul.f32 0.5, %v3175
    %v3177 = vsub.f32 1.5, %v3176
    %v3178 = vmul.f32 %v3173, %v3177
    %vm3179 = vweird.f32 %v3171
    %vm3180 = vweird.f32 %v3173
    %vm3181 = vmor %vm3179, %vm3180
    %v3182 = vsel %vm3181, %v3173, %v3178
    %v3183 = vrsqrt.pop %v3172
    %v3184 = vmul.f32 %v3183, %v3172
    %v3185 = vmul.f32 %v3184, %v3183
    %v3186 = vmul.f32 0.5, %v3185
    %v3187 = vsub.f32 1.5, %v3186
    %v3188 = vmul.f32 %v3183, %v3187
    %vm3189 = vweird.f32 %v3172
    %vm3190 = vweird.f32 %v3183
    %vm3191 = vmor %vm3189, %vm3190
    %v3192 = vsel %vm3191, %v3183, %v3188
    %v3193 = vmul.f32 %v3159, %v3182
    %v3194 = vmul.f32 %v3160, %v3192
    %v3195 = vperm.slane %v2166, 0
    %v3196 = vmul.f32 %v3193, %v3195
    %v3197 = vmul.f32 %v3194, %v3195
    %v3198 = vperm.slane %v2167, 0
    %v3199 = vadd.f32 %v3196, %v3198
    %v3200 = vadd.f32 %v3197, %v3198
    %v3201 = vld [vmem:[%s2 + $0x1a0] sm:$0x1]
    %v3202 = vld [vmem:[%s2 + $0xa0] sm:$0xff]
    %v3203 = vld [vmem:[%s2 + $0xa8] sm:$0xff]
    %v3204 = vld [vmem:[%s2 + $0xb0] sm:$0xff]
    %v3205 = vld [vmem:[%s2 + $0xb8] sm:$0xff]
    %v3208 = vrot.slane %v3200, 7
    %vm3209 = vcmask 1041409
    %v3210 = vsel %vm3209, %v3208, %v3199
    %v3211 = vsel %vm98, %v3210, 0
    %3213 = vmatpush.msra.mxu0 0.0
    %3214 = vmatpush.msra.mxu0 0.0
    %3215 = vmatpush.msra.mxu0 0.0
    %3216 = vmatpush.msra.mxu0 0.0
    %3217 = vmatpush.msra.mxu0 0.0
    %3218 = vmatpush.msra.mxu0 0.0
    %3219 = vmatpush.msra.mxu0 0.0
    %3220 = vmatpush.msra.mxu0 0.0
    %3221 = vmatpush.msra.mxu0 0.0
    %3222 = vmatpush.msra.mxu0 0.0
    %3223 = vmatpush.msra.mxu0 0.0
    %3224 = vmatpush.msra.mxu0 0.0
    %3225 = vmatpush.msra.mxu0 %v3205
    %3226 = vmatpush.msra.mxu0 %v3204
    %3227 = vmatpush.msra.mxu0 %v3203
    %3228 = vmatpush.msra.mxu0 %v3202
    %3229 = vmatmul.f32.gmra.mxu0 %v3211
    %v3230 = vpop.f32.mrf.mxu0
    %v3231 = vadd.f32 0.0, %v3230
    %3232 = vdwg.mxu0
    %v3233 = vperm.slane %v3201, 0
    %v3234 = vadd.f32 %v3233, %v3231
    %v3235 = vld [vmem:[%s2 + $0xc0] sm:$0xff]
    %v3236 = vld [vmem:[%s2 + $0xc8] sm:$0xff]
    %v3237 = vld [vmem:[%s2 + $0xd0] sm:$0xff]
    %v3238 = vld [vmem:[%s2 + $0xd8] sm:$0xff]
    %v3239 = vrot.slane %v3199, 1
    %v3240 = vsel %vm3209, %v3200, %v3239
    %v3241 = vsel %vm98, %v3240, 0
    %3243 = vmatpush.msra.mxu0 0.0
    %3244 = vmatpush.msra.mxu0 0.0
    %3245 = vmatpush.msra.mxu0 0.0
    %3246 = vmatpush.msra.mxu0 0.0
    %3247 = vmatpush.msra.mxu0 0.0
    %3248 = vmatpush.msra.mxu0 0.0
    %3249 = vmatpush.msra.mxu0 0.0
    %3250 = vmatpush.msra.mxu0 0.0
    %3251 = vmatpush.msra.mxu0 0.0
    %3252 = vmatpush.msra.mxu0 0.0
    %3253 = vmatpush.msra.mxu0 0.0
    %3254 = vmatpush.msra.mxu0 0.0
    %3255 = vmatpush.msra.mxu0 %v3238
    %3256 = vmatpush.msra.mxu0 %v3237
    %3257 = vmatpush.msra.mxu0 %v3236
    %3258 = vmatpush.msra.mxu0 %v3235
    %3259 = vmatmul.f32.gmra.mxu0 %v3241
    %v3260 = vpop.f32.mrf.mxu0
    %v3261 = vadd.f32 0.0, %v3260
    %3262 = vdwg.mxu0
    %v3263 = vadd.f32 %v3234, %v3261
    %v3264 = vld [vmem:[%s2 + $0xe0] sm:$0xff]
    %v3265 = vld [vmem:[%s2 + $0xe8] sm:$0xff]
    %v3266 = vld [vmem:[%s2 + $0xf0] sm:$0xff]
    %v3267 = vld [vmem:[%s2 + $0xf8] sm:$0xff]
    %v3268 = vrot.slane %v3199, 2
    %v3269 = vrot.slane %v3200, 1
    %v3270 = vsel %vm3209, %v3269, %v3268
    %v3271 = vsel %vm98, %v3270, 0
    %3273 = vmatpush.msra.mxu0 0.0
    %3274 = vmatpush.msra.mxu0 0.0
    %3275 = vmatpush.msra.mxu0 0.0
    %3276 = vmatpush.msra.mxu0 0.0
    %3277 = vmatpush.msra.mxu0 0.0
    %3278 = vmatpush.msra.mxu0 0.0
    %3279 = vmatpush.msra.mxu0 0.0
    %3280 = vmatpush.msra.mxu0 0.0
    %3281 = vmatpush.msra.mxu0 0.0
    %3282 = vmatpush.msra.mxu0 0.0
    %3283 = vmatpush.msra.mxu0 0.0
    %3284 = vmatpush.msra.mxu0 0.0
    %3285 = vmatpush.msra.mxu0 %v3267
    %3286 = vmatpush.msra.mxu0 %v3266
    %3287 = vmatpush.msra.mxu0 %v3265
    %3288 = vmatpush.msra.mxu0 %v3264
    %3289 = vmatmul.f32.gmra.mxu0 %v3271
    %v3290 = vpop.f32.mrf.mxu0
    %v3291 = vadd.f32 0.0, %v3290
    %3292 = vdwg.mxu0
    %v3293 = vadd.f32 %v3263, %v3291
    %v3294 = vld [vmem:[%s2 + $0x100] sm:$0xff]
    %v3295 = vld [vmem:[%s2 + $0x108] sm:$0xff]
    %v3296 = vld [vmem:[%s2 + $0x110] sm:$0xff]
    %v3297 = vld [vmem:[%s2 + $0x118] sm:$0xff]
    %v3298 = vrot.slane %v3199, 3
    %v3299 = vrot.slane %v3200, 2
    %v3300 = vsel %vm3209, %v3299, %v3298
    %v3301 = vsel %vm98, %v3300, 0
    %3303 = vmatpush.msra.mxu0 0.0
    %3304 = vmatpush.msra.mxu0 0.0
    %3305 = vmatpush.msra.mxu0 0.0
    %3306 = vmatpush.msra.mxu0 0.0
    %3307 = vmatpush.msra.mxu0 0.0
    %3308 = vmatpush.msra.mxu0 0.0
    %3309 = vmatpush.msra.mxu0 0.0
    %3310 = vmatpush.msra.mxu0 0.0
    %3311 = vmatpush.msra.mxu0 0.0
    %3312 = vmatpush.msra.mxu0 0.0
    %3313 = vmatpush.msra.mxu0 0.0
    %3314 = vmatpush.msra.mxu0 0.0
    %3315 = vmatpush.msra.mxu0 %v3297
    %3316 = vmatpush.msra.mxu0 %v3296
    %3317 = vmatpush.msra.mxu0 %v3295
    %3318 = vmatpush.msra.mxu0 %v3294
    %3319 = vmatmul.f32.gmra.mxu0 %v3301
    %v3320 = vpop.f32.mrf.mxu0
    %v3321 = vadd.f32 0.0, %v3320
    %3322 = vdwg.mxu0
    %v3323 = vadd.f32 %v3293, %v3321
    %v3324 = vld [vmem:[%s2 + $0x120] sm:$0xff]
    %v3325 = vld [vmem:[%s2 + $0x128] sm:$0xff]
    %v3326 = vld [vmem:[%s2 + $0x130] sm:$0xff]
    %v3327 = vld [vmem:[%s2 + $0x138] sm:$0xff]
    %v3328 = vrot.slane %v3199, 4
    %v3329 = vrot.slane %v3200, 3
    %v3330 = vsel %vm3209, %v3329, %v3328
    %v3331 = vsel %vm98, %v3330, 0
    %3333 = vmatpush.msra.mxu0 0.0
    %3334 = vmatpush.msra.mxu0 0.0
    %3335 = vmatpush.msra.mxu0 0.0
    %3336 = vmatpush.msra.mxu0 0.0
    %3337 = vmatpush.msra.mxu0 0.0
    %3338 = vmatpush.msra.mxu0 0.0
    %3339 = vmatpush.msra.mxu0 0.0
    %3340 = vmatpush.msra.mxu0 0.0
    %3341 = vmatpush.msra.mxu0 0.0
    %3342 = vmatpush.msra.mxu0 0.0
    %3343 = vmatpush.msra.mxu0 0.0
    %3344 = vmatpush.msra.mxu0 0.0
    %3345 = vmatpush.msra.mxu0 %v3327
    %3346 = vmatpush.msra.mxu0 %v3326
    %3347 = vmatpush.msra.mxu0 %v3325
    %3348 = vmatpush.msra.mxu0 %v3324
    %3349 = vmatmul.f32.gmra.mxu0 %v3331
    %v3350 = vpop.f32.mrf.mxu0
    %v3351 = vadd.f32 0.0, %v3350
    %3352 = vdwg.mxu0
    %v3353 = vadd.f32 %v3323, %v3351
    %v3354 = vld [vmem:[%s2 + $0x140] sm:$0xff]
    %v3355 = vld [vmem:[%s2 + $0x148] sm:$0xff]
    %v3356 = vld [vmem:[%s2 + $0x150] sm:$0xff]
    %v3357 = vld [vmem:[%s2 + $0x158] sm:$0xff]
    %v3358 = vrot.slane %v3199, 5
    %v3359 = vrot.slane %v3200, 4
    %v3360 = vsel %vm3209, %v3359, %v3358
    %v3361 = vsel %vm98, %v3360, 0
    %3363 = vmatpush.msra.mxu0 0.0
    %3364 = vmatpush.msra.mxu0 0.0
    %3365 = vmatpush.msra.mxu0 0.0
    %3366 = vmatpush.msra.mxu0 0.0
    %3367 = vmatpush.msra.mxu0 0.0
    %3368 = vmatpush.msra.mxu0 0.0
    %3369 = vmatpush.msra.mxu0 0.0
    %3370 = vmatpush.msra.mxu0 0.0
    %3371 = vmatpush.msra.mxu0 0.0
    %3372 = vmatpush.msra.mxu0 0.0
    %3373 = vmatpush.msra.mxu0 0.0
    %3374 = vmatpush.msra.mxu0 0.0
    %3375 = vmatpush.msra.mxu0 %v3357
    %3376 = vmatpush.msra.mxu0 %v3356
    %3377 = vmatpush.msra.mxu0 %v3355
    %3378 = vmatpush.msra.mxu0 %v3354
    %3379 = vmatmul.f32.gmra.mxu0 %v3361
    %v3380 = vpop.f32.mrf.mxu0
    %v3381 = vadd.f32 0.0, %v3380
    %3382 = vdwg.mxu0
    %v3383 = vadd.f32 %v3353, %v3381
    %v3384 = vld [vmem:[%s2 + $0x160] sm:$0xff]
    %v3385 = vld [vmem:[%s2 + $0x168] sm:$0xff]
    %v3386 = vld [vmem:[%s2 + $0x170] sm:$0xff]
    %v3387 = vld [vmem:[%s2 + $0x178] sm:$0xff]
    %v3388 = vrot.slane %v3199, 6
    %v3389 = vrot.slane %v3200, 5
    %v3390 = vsel %vm3209, %v3389, %v3388
    %v3391 = vsel %vm98, %v3390, 0
    %3393 = vmatpush.msra.mxu0 0.0
    %3394 = vmatpush.msra.mxu0 0.0
    %3395 = vmatpush.msra.mxu0 0.0
    %3396 = vmatpush.msra.mxu0 0.0
    %3397 = vmatpush.msra.mxu0 0.0
    %3398 = vmatpush.msra.mxu0 0.0
    %3399 = vmatpush.msra.mxu0 0.0
    %3400 = vmatpush.msra.mxu0 0.0
    %3401 = vmatpush.msra.mxu0 0.0
    %3402 = vmatpush.msra.mxu0 0.0
    %3403 = vmatpush.msra.mxu0 0.0
    %3404 = vmatpush.msra.mxu0 0.0
    %3405 = vmatpush.msra.mxu0 %v3387
    %3406 = vmatpush.msra.mxu0 %v3386
    %3407 = vmatpush.msra.mxu0 %v3385
    %3408 = vmatpush.msra.mxu0 %v3384
    %3409 = vmatmul.f32.gmra.mxu0 %v3391
    %v3410 = vpop.f32.mrf.mxu0
    %v3411 = vadd.f32 0.0, %v3410
    %3412 = vdwg.mxu0
    %v3413 = vadd.f32 %v3383, %v3411
    %v3414 = vld [vmem:[%s2 + $0x180] sm:$0xff]
    %v3415 = vld [vmem:[%s2 + $0x188] sm:$0xff]
    %v3416 = vld [vmem:[%s2 + $0x190] sm:$0xff]
    %v3417 = vld [vmem:[%s2 + $0x198] sm:$0xff]
    %v3418 = vrot.slane %v3199, 7
    %v3419 = vrot.slane %v3200, 6
    %v3420 = vsel %vm3209, %v3419, %v3418
    %v3421 = vsel %vm98, %v3420, 0
    %3423 = vmatpush.msra.mxu0 0.0
    %3424 = vmatpush.msra.mxu0 0.0
    %3425 = vmatpush.msra.mxu0 0.0
    %3426 = vmatpush.msra.mxu0 0.0
    %3427 = vmatpush.msra.mxu0 0.0
    %3428 = vmatpush.msra.mxu0 0.0
    %3429 = vmatpush.msra.mxu0 0.0
    %3430 = vmatpush.msra.mxu0 0.0
    %3431 = vmatpush.msra.mxu0 0.0
    %3432 = vmatpush.msra.mxu0 0.0
    %3433 = vmatpush.msra.mxu0 0.0
    %3434 = vmatpush.msra.mxu0 0.0
    %3435 = vmatpush.msra.mxu0 %v3417
    %3436 = vmatpush.msra.mxu0 %v3416
    %3437 = vmatpush.msra.mxu0 %v3415
    %3438 = vmatpush.msra.mxu0 %v3414
    %3439 = vmatmul.f32.gmra.mxu0 %v3421
    %v3440 = vpop.f32.mrf.mxu0
    %v3441 = vadd.f32 0.0, %v3440
    %3442 = vdwg.mxu0
    %v3443 = vadd.f32 %v3413, %v3441
    %v3444 = vmax.f32 %v3443, 0.0
    %v3445 = vld [vmem:[%s2 + $0x1a8] sm:$0xff]
    %v3446 = vld [vmem:[%s2 + $0x1b0] sm:$0xff]
    %v3447 = vld [vmem:[%s2 + $0x1b8] sm:$0xff]
    %v3448 = vld [vmem:[%s2 + $0x1c0] sm:$0xff]
    %v3449 = vld [vmem:[%s2 + $0x1c8] sm:$0xff]
    %v3450 = vld [vmem:[%s2 + $0x1d0] sm:$0xff]
    %v3451 = vld [vmem:[%s2 + $0x1d8] sm:$0xff]
    %v3452 = vld [vmem:[%s2 + $0x1e0] sm:$0xff]
    %v3453 = vld [vmem:[%s2 + $0x1e8] sm:$0x1]
    %v3454 = vperm.slane %v3453, 0
    %vm3455 = vcmask 523264
    %v3457 = vsel %vm3455, %v3444, 0
    %3459 = vmatpush.msra.mxu0 0.0
    %3460 = vmatpush.msra.mxu0 0.0
    %3461 = vmatpush.msra.mxu0 0.0
    %3462 = vmatpush.msra.mxu0 0.0
    %3463 = vmatpush.msra.mxu0 0.0
    %3464 = vmatpush.msra.mxu0 0.0
    %3465 = vmatpush.msra.mxu0 0.0
    %3466 = vmatpush.msra.mxu0 0.0
    %3467 = vmatpush.msra.mxu0 %v3452
    %3468 = vmatpush.msra.mxu0 %v3451
    %3469 = vmatpush.msra.mxu0 %v3450
    %3470 = vmatpush.msra.mxu0 %v3449
    %3471 = vmatpush.msra.mxu0 %v3448
    %3472 = vmatpush.msra.mxu0 %v3447
    %3473 = vmatpush.msra.mxu0 %v3446
    %3474 = vmatpush.msra.mxu0 %v3445
    %3475 = vmatmul.f32.gmra.mxu0 %v3457
    %v3476 = vpop.f32.mrf.mxu0
    %v3477 = vadd.f32 %v3454, %v3476
    %3478 = vdwg.mxu0
    %v3479 = vmax.f32 %v3477, 0.0
    %v3480 = vld [vmem:[%s2 + $0x1f0] sm:$0xff]
    %v3481 = vld [vmem:[%s2 + $0x1f8] sm:$0xff]
    %v3482 = vld [vmem:[%s2 + $0x200] sm:$0xff]
    %v3483 = vld [vmem:[%s2 + $0x208] sm:$0xff]
    %v3484 = vld [vmem:[%s2 + $0x210] sm:$0x1]
    %v3485 = vperm.slane %v3484, 0
    %v3487 = vsel %vm98, %v3479, 0
    %3489 = vmatpush.msra.mxu0 0.0
    %3490 = vmatpush.msra.mxu0 0.0
    %3491 = vmatpush.msra.mxu0 0.0
    %3492 = vmatpush.msra.mxu0 0.0
    %3493 = vmatpush.msra.mxu0 0.0
    %3494 = vmatpush.msra.mxu0 0.0
    %3495 = vmatpush.msra.mxu0 0.0
    %3496 = vmatpush.msra.mxu0 0.0
    %3497 = vmatpush.msra.mxu0 0.0
    %3498 = vmatpush.msra.mxu0 0.0
    %3499 = vmatpush.msra.mxu0 0.0
    %3500 = vmatpush.msra.mxu0 0.0
    %3501 = vmatpush.msra.mxu0 %v3483
    %3502 = vmatpush.msra.mxu0 %v3482
    %3503 = vmatpush.msra.mxu0 %v3481
    %3504 = vmatpush.msra.mxu0 %v3480
    %3505 = vmatmul.f32.gmra.mxu0 %v3487
    %v3506 = vpop.f32.mrf.mxu0
    %v3507 = vadd.f32 %v3485, %v3506
    %3508 = vdwg.mxu0
    %v3509 = vmax.f32 %v3507, 0.0
    %v3510 = vand.u32 2147483647, %v3507
    %v3511 = vsub.f32 0.0, %v3510
    %v3512 = vmul.f32 %v3511, 1.442695
    %v3513 = vpow.pop %v3512
    %v3514 = vadd.f32 %v3513, 1.0
    %v3515 = vlog2.pop %v3514
    %v3516 = vmul.f32 %v3515, 0.6931472
    %v3517 = vadd.f32 %v3509, %v3516
    %vm3518 = vcmask 1024
    %3519 = vst.msk [vmem:[%s3] sm:$0x3] %vm3518, %v3517
    %3520 = vst.msk [vmem:[#allocation2] sm:$0xff] %vm176, %v1060
    %3521 = vst.msk [vmem:[#allocation2 + $0x8] sm:$0xff] %vm176, %v1061
    %3522 = vst.msk [vmem:[#allocation2 + $0x10] sm:$0xff] %vm176, %v2107
    %3523 = vst.msk [vmem:[#allocation2 + $0x18] sm:$0xff] %vm176, %v2108
    %3524 = vst.msk [vmem:[#allocation2 + $0x20] sm:$0xff] %vm176, %v3147
    %3525 = vst.msk [vmem:[#allocation2 + $0x28] sm:$0xff] %vm176, %v3148
    // Predicated region
    $region14: #{tpu_custom_call.1} parent=1 // pred_check
      _
    $region15: #{tpu_custom_call.1} parent=1 // pred_check_branch
      %3527 = sbr.rel (0) target = $region17
    $region16: #{tpu_custom_call.1} parent=1 // pred_region
      _
    $region17: #{tpu_custom_call.1} parent=1 // pred_fallthru
      _
    // Predicated region
    $region18: #{tpu_custom_call.1} parent=1 // pred_check
      _
    $region19: #{tpu_custom_call.1} parent=1 // pred_check_branch
      %3529 = sbr.rel (0) target = $region21
    $region20: #{tpu_custom_call.1} parent=1 // pred_region
      %3531 = vsyncadd [#allocation3], 0
      %s3532 = sshll.u32 [#allocation2], 4
      %s3533 = int_to_ptr.vmem [resolvable:$true] %s3532
      %s3534 = sshll.u32 %s4, 4
      %s3535 = int_to_ptr.hbm [resolvable:$true] %s3534
      %3540 = dma.vmem_to_hbm [thread:$0]  %s3533, 768, %s3535, [#allocation3], 128, 128, 8
    $region21: #{tpu_custom_call.1} parent=1 // pred_fallthru
      _
    // Predicated region
    $region22: #{tpu_custom_call.1} parent=1 // pred_check
      _
    $region23: #{tpu_custom_call.1} parent=1 // pred_check_branch
      %3542 = sbr.rel (0) target = $region25
    $region24: #{tpu_custom_call.1} parent=1 // pred_region
      _
    $region25: #{tpu_custom_call.1} parent=1 // pred_fallthru
      _
    // Predicated region
    $region26: #{tpu_custom_call.1} parent=1 // pred_check
      _
    $region27: #{tpu_custom_call.1} parent=1 // pred_check_branch
      %3544 = sbr.rel (0) target = $region29
    $region28: #{tpu_custom_call.1} parent=1 // pred_region
      %3546 = dma.done [#allocation3], 768
    $region29: #{tpu_custom_call.1} parent=1 // pred_fallthru
      _
    %3547 = vsyncpa [#allocation3], 1

</llo_original>
